<compile_context>
chip_gen: v7x
topology: tpu7x:2x2x1
jax: 0.10.0
libtpu: 0.0.40
codegen_flags: <defaults>
</compile_context>

<pallas_src>
import jax
import jax.numpy as jnp
from jax.experimental import pallas as pl
from jax.experimental.pallas import tpu as pltpu


# ----------------------------------------------------------------------------
# Static architecture plan (channels) and packed-parameter layouts
# ----------------------------------------------------------------------------
DW_C = (16, 32, 64, 64, 64, 64)                               # depthwise channels
PW_IO = ((16, 32), (32, 64), (64, 64), (64, 64), (64, 64), (64, 64))
LANES = 128


def _round8(n):
    return -(-n // 8) * 8


def _build_w_layout():
    """Row layout of the single bf16 weight blob (all MXU weights)."""
    layout, off = {}, 0

    def add(name, rows, cols):
        nonlocal off
        layout[name] = (off, rows, cols)
        off += _round8(rows)

    add("conv1", 64, 16)                       # (K=64, Cout=16), BN1 folded
    for i, (ci, co) in enumerate(PW_IO, 1):
        add(f"pconv{i}", ci, co)               # (Cin, Cout), BN folded
    add("conv2", 192, 64)                      # k-major rows: (3*Cin, Cout), BN2 folded
    add("lin1", 64, 100)                       # BN3 folded
    add("lin2", 100, LANES)                    # out cols zero-padded to 128 lanes
    return layout, _round8(off)


W_LAYOUT, W_ROWS = _build_w_layout()

# Row layout of the f32 shift blob (conv-bias + BN folded; one row per layer).
S_ROW = {"conv1": 0,
         **{f"dconv{i}": i for i in range(1, 7)},
         **{f"pconv{i}": 6 + i for i in range(1, 7)},
         "conv2": 13, "lin1": 14, "lin2": 15}
S_ROWS = 16

# Depthwise-tap blob: dconv_i occupies rows [8*(i-1), 8*(i-1)+7), cols [0, C_i).
D_ROWS = 8 * 6


# ----------------------------------------------------------------------------
# Fused whole-network kernel (BT samples stacked on the sublane axis per step)
# ----------------------------------------------------------------------------
def _make_kernel(bt, tc):
    t1, t2, t3 = tc // 2, tc // 4, tc // 8
    n3 = bt * t3
    to = t3 - 2                               # conv2 valid length per sample
    MARGIN = 8                                # scratch row offset for shifted loads

    def kernel(x_ref, phase_ref, msel_ref, w_ref, d_ref, s_ref, out_ref, scr):
        def wslice(name):
            off, rows, cols = W_LAYOUT[name]
            return w_ref[off:off + rows, 0:cols]

        def shift(name, cols):
            r = S_ROW[name]
            return s_ref[r:r + 1, 0:cols]

        def mm(a, w):
            return jnp.dot(a.astype(jnp.bfloat16), w.astype(jnp.bfloat16),
                           preferred_element_type=jnp.float32)

        def maxpool2(a):
            # MaxPool1d(2,2): per-sample T is even, so global even/odd == local.
            n, c = a.shape
            scr[0:n, 0:c] = a
            ev = scr[pl.ds(0, n // 2, stride=2), 0:c]
            od = scr[pl.ds(1, n // 2, stride=2), 0:c]
            return jnp.maximum(ev, od)

        def dwconv_bn_relu(a, li, t_len, stage):
            # Depthwise k=7 'same' conv + folded BN + ReLU via shifted scratch loads.
            n, c = a.shape
            scr[MARGIN:MARGIN + n, 0:c] = a
            ph = phase_ref[0:n, stage:stage + 1]            # (n,1) int32 = t mod t_len
            dr = 8 * (li - 1)
            acc = a * d_ref[dr + 3:dr + 4, 0:c]             # center tap (offset 0)
            for k in range(7):
                d = k - 3
                if d == 0:
                    continue
                sh = scr[MARGIN + d:MARGIN + d + n, 0:c]    # a[t+d]; junk off-sample
                ok = (ph + d >= 0) & (ph + d < t_len)       # stay inside own sample
                acc = acc + jnp.where(ok, sh, 0.0) * d_ref[dr + k:dr + k + 1, 0:c]
            return jnp.maximum(acc + shift(f"dconv{li}", c), 0.0)

        def pwconv_bn_relu(a, li):
            w = wslice(f"pconv{li}")
            return jnp.maximum(mm(a, w) + shift(f"pconv{li}", w.shape[1]), 0.0)

        # ---- conv1 + bn1 + relu1: one lane-dense matmul on im2col windows
        x = x_ref[0]                                        # (bt*tc, 64) f32
        y = jnp.maximum(mm(x, wslice("conv1")) + shift("conv1", 16), 0.0)

        y = maxpool2(y)                                     # pool1 -> (bt*t1, 16)
        for i in (1, 2):
            y = dwconv_bn_relu(y, i, t1, 0)
            y = pwconv_bn_relu(y, i)
        y = maxpool2(y)                                     # pool2 -> (bt*t2, 64)
        for i in (3, 4, 5, 6):
            y = dwconv_bn_relu(y, i, t2, 1)
            y = pwconv_bn_relu(y, i)
        y = maxpool2(y)                                     # pool3 -> (bt*t3, 64)

        # ---- conv2 (k=3, valid) + bn2 + relu2 via shifted scratch loads.
        # Rows with t >= to read across sample boundaries (finite junk); they are
        # discarded by the 0/1 mean selector below.
        scr[MARGIN:MARGIN + n3, 0:64] = y
        w2 = wslice("conv2")
        acc = mm(y, w2[0:64, :])
        acc = acc + mm(scr[MARGIN + 1:MARGIN + 1 + n3, 0:64], w2[64:128, :])
        acc = acc + mm(scr[MARGIN + 2:MARGIN + 2 + n3, 0:64], w2[128:192, :])
        z = jnp.maximum(acc + shift("conv2", 64), 0.0)      # (bt*t3, 64)

        # ---- temporal mean per sample (0/1 selector matmul), then the MLP head
        mean = mm(msel_ref[...], z) * (1.0 / to)            # (bt, 64)
        h = jnp.maximum(mm(mean, wslice("lin1")) + shift("lin1", 100), 0.0)
        out_ref[0] = mm(h, wslice("lin2")) + shift("lin2", LANES)   # lane-dense (bt,128)

    return kernel


# ----------------------------------------------------------------------------
# Wrapper
# ----------------------------------------------------------------------------
def _pick_bt(batch, target=8):
    """Largest divisor of batch <= target, keeping >=2 grid steps when B>=2 (v7x)."""
    cap = max(1, min(target, batch // 2 if batch >= 2 else 1))
    bt = 1
    for d in range(1, cap + 1):
        if batch % d == 0:
            bt = d
    return bt


def qlnrnet_forward(x, packed, *, batch_tile=8):
    """x: (B, 1, L) float32 (PyTorch NCL). Returns (B, n_classes) float32."""
    wblob, dblob, sblob = packed["w"], packed["d"], packed["s"]
    n_classes = packed["n_classes"]
    B, cin, L = x.shape
    assert cin == 1
    assert L % 64 == 0 and L >= 192, "L must be a multiple of 64 and >= 192"
    tc = L // 8

    bt = _pick_bt(B, batch_tile)
    g = B // bt
    t1, t2, t3 = tc // 2, tc // 4, tc // 8
    n0, n1, n2, n3 = bt * tc, bt * t1, bt * t2, bt * t3
    to = t3 - 2

    # TODO(synk): QuantStub/DeQuantStub and Dropout(0.5) are eval-mode identities.

    # im2col for conv1 (kernel 64, stride 8, pad 28): windows[b, t, :] = xpad[b, 8t:8t+64]
    xpad = jnp.pad(x[:, 0, :], ((0, 0), (28, 28)))
    frames = xpad.reshape(B, (L + 56) // 8, 8)
    windows = jnp.concatenate([frames[:, j:j + tc, :] for j in range(8)], axis=2)
    xin = windows.reshape(g, n0, 64).astype(jnp.float32)

    # Per-row time phase (t mod T) for the two depthwise stages (built on host).
    ph1 = jnp.tile(jnp.arange(t1, dtype=jnp.int32), bt)
    ph2 = jnp.tile(jnp.arange(t2, dtype=jnp.int32), bt)
    ph2 = jnp.concatenate([ph2, jnp.zeros((n1 - n2,), jnp.int32)])
    phase = jnp.stack([ph1, ph2], axis=1)                           # (n1, 2)

    # 0/1 selector averaging the `to` valid conv2 rows of each stacked sample.
    rr = jnp.arange(n3)[None, :]
    ss = jnp.arange(bt)[:, None]
    msel = ((rr >= ss * t3) & (rr < ss * t3 + to)).astype(jnp.float32)   # (bt, n3)

    kernel = _make_kernel(bt, tc)

    out = pl.pallas_call(
        kernel,
        out_shape=jax.ShapeDtypeStruct((g, bt, LANES), jnp.float32),
        grid=(g,),
        in_specs=[
            pl.BlockSpec((1, n0, 64), lambda i: (i, 0, 0)),      # conv1 windows
            pl.BlockSpec(phase.shape, lambda i: (0, 0)),         # phase table
            pl.BlockSpec(msel.shape, lambda i: (0, 0)),          # mean selector
            pl.BlockSpec(wblob.shape, lambda i: (0, 0)),         # packed bf16 weights
            pl.BlockSpec(dblob.shape, lambda i: (0, 0)),         # packed dw taps
            pl.BlockSpec(sblob.shape, lambda i: (0, 0)),         # packed shifts
        ],
        out_specs=pl.BlockSpec((1, bt, LANES), lambda i: (i, 0, 0)),
        scratch_shapes=[pltpu.VMEM((n0 + 16, 64), jnp.float32)],
        compiler_params=pltpu.CompilerParams(
            dimension_semantics=("parallel",)),
    )(xin, phase, msel, wblob, dblob, sblob)

    return out.reshape(B, LANES)[:, :n_classes]


# ----------------------------------------------------------------------------
# Deterministic synthetic parameters (eval-mode BN folded) packed into 3 blobs
# ----------------------------------------------------------------------------
def fold_bn(conv_bias, gamma, beta, mean, var, eps=1e-5):
    scale = gamma / jnp.sqrt(var + eps)
    shf = (conv_bias - mean) * scale + beta
    return scale, shf


def make_packed_params(key, n_classes=10):
    keys = iter(jax.random.split(key, 128))
    nk = lambda: next(keys)

    def w_init(shape, fan_in):
        return jax.random.normal(nk(), shape, jnp.float32) / jnp.sqrt(float(fan_in))

    def b_init(c):
        return 0.05 * jax.random.normal(nk(), (c,), jnp.float32)

    def bn_init(c):
        gamma = 1.0 + 0.05 * jax.random.normal(nk(), (c,), jnp.float32)
        beta = 0.05 * jax.random.normal(nk(), (c,), jnp.float32)
        mean = 0.05 * jax.random.normal(nk(), (c,), jnp.float32)
        var = 1.0 + 0.05 * jnp.abs(jax.random.normal(nk(), (c,), jnp.float32))
        return gamma, beta, mean, var

    def folded(w, c_out):
        scale, shf = fold_bn(b_init(c_out), *bn_init(c_out))
        return w * scale[None, :], shf

    wblob = jnp.zeros((W_ROWS, LANES), jnp.float32)
    sblob = jnp.zeros((S_ROWS, LANES), jnp.float32)
    dblob = jnp.zeros((D_ROWS, LANES), jnp.float32)

    def put_w(name, w):
        nonlocal wblob
        off, _, _ = W_LAYOUT[name]
        wblob = wblob.at[off:off + w.shape[0], 0:w.shape[1]].set(w)

    def put_s(name, s):
        nonlocal sblob
        sblob = sblob.at[S_ROW[name], 0:s.shape[0]].set(s)

    # conv1: torch (16,1,64) stored as (K=64, Cout=16), BN1 folded.
    w, s = folded(w_init((64, 16), 64), 16); put_w("conv1", w); put_s("conv1", s)

    # depthwise taps (7, C), BN folded (stay f32 — VPU path).
    for i, c in enumerate(DW_C, 1):
        w, s = folded(w_init((7, c), 7), c)
        dblob = dblob.at[8 * (i - 1):8 * (i - 1) + 7, 0:c].set(w)
        put_s(f"dconv{i}", s)

    # pointwise (Cin, Cout), BN folded.
    for i, (ci, co) in enumerate(PW_IO, 1):
        w, s = folded(w_init((ci, co), ci), co); put_w(f"pconv{i}", w); put_s(f"pconv{i}", s)

    # conv2: torch (64,64,3) stored k-major as (3*Cin, Cout), BN2 folded.
    w, s = folded(w_init((192, 64), 192), 64); put_w("conv2", w); put_s("conv2", s)

    # lin1 + bn3 folded; lin2 plain bias (output lanes zero-padded to 128).
    w, s = folded(w_init((64, 100), 64), 100); put_w("lin1", w); put_s("lin1", s)
    put_w("lin2", w_init((100, n_classes), 100)); put_s("lin2", b_init(n_classes))

    return {"w": wblob.astype(jnp.bfloat16), "d": dblob, "s": sblob,
            "n_classes": n_classes}


# ----------------------------------------------------------------------------
if __name__ == "__main__":
    key = jax.random.PRNGKey(0)
    pkey, xkey = jax.random.split(key)
    packed = make_packed_params(pkey, n_classes=10)

    # (B=2, C=1, L=256): conv1 -> 32, pool1 -> 16, pool2 -> 8, pool3 -> 4, conv2 -> 2, mean.
    x = jax.random.normal(xkey, (2, 1, 256), jnp.float32)

    fwd = jax.jit(lambda xx: qlnrnet_forward(xx, packed))
    out = jax.block_until_ready(fwd(x))

    assert out.shape == (2, 10), out.shape
    assert bool(jnp.all(jnp.isfinite(out)))
    print("KERNEL_OK")
</pallas_src>

<mosaic_0001>
module attributes {stable_mosaic.version = 11 : i64} {
  func.func @kernel(%arg0: i32, %arg1: memref<1x32x64xf32, #tpu.memory_space<vmem>>, %arg2: memref<16x2xi32, #tpu.memory_space<vmem>>, %arg3: memref<1x4xf32, #tpu.memory_space<vmem>>, %arg4: memref<728x128xbf16, #tpu.memory_space<vmem>>, %arg5: memref<48x128xf32, #tpu.memory_space<vmem>>, %arg6: memref<16x128xf32, #tpu.memory_space<vmem>>, %arg7: memref<1x1x128xf32, #tpu.memory_space<vmem>>, %arg8: memref<48x64xf32, #tpu.memory_space<vmem>>) attributes {dimension_semantics = [#tpu.dimension_semantics<parallel>], iteration_bounds = array<i64: 2>, scalar_prefetch = 0 : i64, scratch_operands = 1 : i64, tpu.core_type = #tpu.core_type<tc>, window_params = [{transform_indices = @transform_0, window_bounds = array<i64: 1, 32, 64>}, {pipeline_mode = #tpu.pipeline_mode<synchronous>, transform_indices = @transform_1, window_bounds = array<i64: 16, 2>}, {pipeline_mode = #tpu.pipeline_mode<synchronous>, transform_indices = @transform_2, window_bounds = array<i64: 1, 4>}, {pipeline_mode = #tpu.pipeline_mode<synchronous>, transform_indices = @transform_3, window_bounds = array<i64: 728, 128>}, {pipeline_mode = #tpu.pipeline_mode<synchronous>, transform_indices = @transform_4, window_bounds = array<i64: 48, 128>}, {pipeline_mode = #tpu.pipeline_mode<synchronous>, transform_indices = @transform_5, window_bounds = array<i64: 16, 128>}, {transform_indices = @transform_6, window_bounds = array<i64: 1, 1, 128>}]} {
    %c0 = arith.constant 0 : index
    %c0_0 = arith.constant 0 : index
    %c0_1 = arith.constant 0 : index
    %0 = vector.load %arg1[%c0, %c0_0, %c0_1] : memref<1x32x64xf32, #tpu.memory_space<vmem>>, vector<1x32x64xf32>
    %1 = vector.shape_cast %0 : vector<1x32x64xf32> to vector<32x64xf32>
    %c0_2 = arith.constant 0 : index
    %c0_3 = arith.constant 0 : index
    %2 = vector.load %arg4[%c0_2, %c0_3] : memref<728x128xbf16, #tpu.memory_space<vmem>>, vector<64x16xbf16>
    %3 = arith.truncf %1 : vector<32x64xf32> to vector<32x64xbf16>
    %cst = arith.constant dense<0.000000e+00> : vector<32x16xf32>
    %4 = tpu.matmul %3, %2, %cst {dimension_numbers = #tpu.dot_dimension_numbers<[1], [0], [0], [1], [0, 0, 1, 1], [], []>} : vector<32x64xbf16>, vector<64x16xbf16>, vector<32x16xf32> -> vector<32x16xf32>
    %c0_4 = arith.constant 0 : index
    %c0_5 = arith.constant 0 : index
    %5 = vector.load %arg6[%c0_4, %c0_5] : memref<16x128xf32, #tpu.memory_space<vmem>>, vector<1x16xf32>
    %6 = vector.broadcast %5 : vector<1x16xf32> to vector<32x16xf32>
    %7 = arith.addf %4, %6 : vector<32x16xf32>
    %cst_6 = arith.constant 0.000000e+00 : f32
    %8 = vector.broadcast %cst_6 : f32 to vector<32x16xf32>
    %9 = arith.maximumf %7, %8 : vector<32x16xf32>
    %c0_7 = arith.constant 0 : index
    %c0_8 = arith.constant 0 : index
    %10 = vector.load %arg8[%c0_7, %c0_8] : memref<48x64xf32, #tpu.memory_space<vmem>>, vector<32x16xf32>
    tpu.vector_store %arg8[%c0_7, %c0_8], %9 {strides = array<i32>} : memref<48x64xf32, #tpu.memory_space<vmem>>, vector<32x16xf32>,
    %c0_9 = arith.constant 0 : index
    %c0_10 = arith.constant 0 : index
    %11 = tpu.strided_load %arg8[%c0_9, %c0_10] {strides = array<i32: 2, 1>} : memref<48x64xf32, #tpu.memory_space<vmem>>, vector<16x16xf32>
    %c1 = arith.constant 1 : index
    %c0_11 = arith.constant 0 : index
    %12 = tpu.strided_load %arg8[%c1, %c0_11] {strides = array<i32: 2, 1>} : memref<48x64xf32, #tpu.memory_space<vmem>>, vector<16x16xf32>
    %13 = arith.maximumf %11, %12 : vector<16x16xf32>
    %c8 = arith.constant 8 : index
    %c0_12 = arith.constant 0 : index
    %14 = vector.load %arg8[%c8, %c0_12] : memref<48x64xf32, #tpu.memory_space<vmem>>, vector<16x16xf32>
    tpu.vector_store %arg8[%c8, %c0_12], %13 {strides = array<i32>} : memref<48x64xf32, #tpu.memory_space<vmem>>, vector<16x16xf32>,
    %c0_13 = arith.constant 0 : index
    %c0_14 = arith.constant 0 : index
    %15 = vector.load %arg2[%c0_13, %c0_14] : memref<16x2xi32, #tpu.memory_space<vmem>>, vector<16x1xi32>
    %c3 = arith.constant 3 : index
    %c0_15 = arith.constant 0 : index
    %16 = vector.load %arg5[%c3, %c0_15] : memref<48x128xf32, #tpu.memory_space<vmem>>, vector<1x16xf32>
    %17 = vector.broadcast %16 : vector<1x16xf32> to vector<16x16xf32>
    %18 = arith.mulf %13, %17 : vector<16x16xf32>
    %c5 = arith.constant 5 : index
    %c0_16 = arith.constant 0 : index
    %19 = vector.load %arg8[%c5, %c0_16] : memref<48x64xf32, #tpu.memory_space<vmem>>, vector<16x16xf32>
    %c-3_i32 = arith.constant -3 : i32
    %20 = vector.broadcast %c-3_i32 : i32 to vector<16x1xi32>
    %21 = arith.addi %15, %20 : vector<16x1xi32>
    %c0_i32 = arith.constant 0 : i32
    %22 = vector.broadcast %c0_i32 : i32 to vector<16x1xi32>
    %23 = arith.cmpi sge, %21, %22 : vector<16x1xi32>
    %c-3_i32_17 = arith.constant -3 : i32
    %24 = vector.broadcast %c-3_i32_17 : i32 to vector<16x1xi32>
    %25 = arith.addi %15, %24 : vector<16x1xi32>
    %c16_i32 = arith.constant 16 : i32
    %26 = vector.broadcast %c16_i32 : i32 to vector<16x1xi32>
    %27 = arith.cmpi slt, %25, %26 : vector<16x1xi32>
    %28 = arith.andi %23, %27 : vector<16x1xi1>
    %cst_18 = arith.constant 0.000000e+00 : f32
    %29 = vector.shape_cast %28 : vector<16x1xi1> to vector<16x1xi1>
    %30 = vector.broadcast %29 : vector<16x1xi1> to vector<16x16xi1>
    %31 = vector.broadcast %cst_18 : f32 to vector<16x16xf32>
    %32 = arith.select %30, %19, %31 : vector<16x16xi1>, vector<16x16xf32>
    %c0_19 = arith.constant 0 : index
    %c0_20 = arith.constant 0 : index
    %33 = vector.load %arg5[%c0_19, %c0_20] : memref<48x128xf32, #tpu.memory_space<vmem>>, vector<1x16xf32>
    %34 = vector.broadcast %33 : vector<1x16xf32> to vector<16x16xf32>
    %35 = arith.mulf %32, %34 : vector<16x16xf32>
    %36 = arith.addf %18, %35 : vector<16x16xf32>
    %c6 = arith.constant 6 : index
    %c0_21 = arith.constant 0 : index
    %37 = vector.load %arg8[%c6, %c0_21] : memref<48x64xf32, #tpu.memory_space<vmem>>, vector<16x16xf32>
    %c-2_i32 = arith.constant -2 : i32
    %38 = vector.broadcast %c-2_i32 : i32 to vector<16x1xi32>
    %39 = arith.addi %15, %38 : vector<16x1xi32>
    %c0_i32_22 = arith.constant 0 : i32
    %40 = vector.broadcast %c0_i32_22 : i32 to vector<16x1xi32>
    %41 = arith.cmpi sge, %39, %40 : vector<16x1xi32>
    %c-2_i32_23 = arith.constant -2 : i32
    %42 = vector.broadcast %c-2_i32_23 : i32 to vector<16x1xi32>
    %43 = arith.addi %15, %42 : vector<16x1xi32>
    %c16_i32_24 = arith.constant 16 : i32
    %44 = vector.broadcast %c16_i32_24 : i32 to vector<16x1xi32>
    %45 = arith.cmpi slt, %43, %44 : vector<16x1xi32>
    %46 = arith.andi %41, %45 : vector<16x1xi1>
    %cst_25 = arith.constant 0.000000e+00 : f32
    %47 = vector.shape_cast %46 : vector<16x1xi1> to vector<16x1xi1>
    %48 = vector.broadcast %47 : vector<16x1xi1> to vector<16x16xi1>
    %49 = vector.broadcast %cst_25 : f32 to vector<16x16xf32>
    %50 = arith.select %48, %37, %49 : vector<16x16xi1>, vector<16x16xf32>
    %c1_26 = arith.constant 1 : index
    %c0_27 = arith.constant 0 : index
    %51 = vector.load %arg5[%c1_26, %c0_27] : memref<48x128xf32, #tpu.memory_space<vmem>>, vector<1x16xf32>
    %52 = vector.broadcast %51 : vector<1x16xf32> to vector<16x16xf32>
    %53 = arith.mulf %50, %52 : vector<16x16xf32>
    %54 = arith.addf %36, %53 : vector<16x16xf32>
    %c7 = arith.constant 7 : index
    %c0_28 = arith.constant 0 : index
    %55 = vector.load %arg8[%c7, %c0_28] : memref<48x64xf32, #tpu.memory_space<vmem>>, vector<16x16xf32>
    %c-1_i32 = arith.constant -1 : i32
    %56 = vector.broadcast %c-1_i32 : i32 to vector<16x1xi32>
    %57 = arith.addi %15, %56 : vector<16x1xi32>
    %c0_i32_29 = arith.constant 0 : i32
    %58 = vector.broadcast %c0_i32_29 : i32 to vector<16x1xi32>
    %59 = arith.cmpi sge, %57, %58 : vector<16x1xi32>
    %c-1_i32_30 = arith.constant -1 : i32
    %60 = vector.broadcast %c-1_i32_30 : i32 to vector<16x1xi32>
    %61 = arith.addi %15, %60 : vector<16x1xi32>
    %c16_i32_31 = arith.constant 16 : i32
    %62 = vector.broadcast %c16_i32_31 : i32 to vector<16x1xi32>
    %63 = arith.cmpi slt, %61, %62 : vector<16x1xi32>
    %64 = arith.andi %59, %63 : vector<16x1xi1>
    %cst_32 = arith.constant 0.000000e+00 : f32
    %65 = vector.shape_cast %64 : vector<16x1xi1> to vector<16x1xi1>
    %66 = vector.broadcast %65 : vector<16x1xi1> to vector<16x16xi1>
    %67 = vector.broadcast %cst_32 : f32 to vector<16x16xf32>
    %68 = arith.select %66, %55, %67 : vector<16x16xi1>, vector<16x16xf32>
    %c2 = arith.constant 2 : index
    %c0_33 = arith.constant 0 : index
    %69 = vector.load %arg5[%c2, %c0_33] : memref<48x128xf32, #tpu.memory_space<vmem>>, vector<1x16xf32>
    %70 = vector.broadcast %69 : vector<1x16xf32> to vector<16x16xf32>
    %71 = arith.mulf %68, %70 : vector<16x16xf32>
    %72 = arith.addf %54, %71 : vector<16x16xf32>
    %c9 = arith.constant 9 : index
    %c0_34 = arith.constant 0 : index
    %73 = vector.load %arg8[%c9, %c0_34] : memref<48x64xf32, #tpu.memory_space<vmem>>, vector<16x16xf32>
    %c1_i32 = arith.constant 1 : i32
    %74 = vector.broadcast %c1_i32 : i32 to vector<16x1xi32>
    %75 = arith.addi %15, %74 : vector<16x1xi32>
    %c0_i32_35 = arith.constant 0 : i32
    %76 = vector.broadcast %c0_i32_35 : i32 to vector<16x1xi32>
    %77 = arith.cmpi sge, %75, %76 : vector<16x1xi32>
    %c1_i32_36 = arith.constant 1 : i32
    %78 = vector.broadcast %c1_i32_36 : i32 to vector<16x1xi32>
    %79 = arith.addi %15, %78 : vector<16x1xi32>
    %c16_i32_37 = arith.constant 16 : i32
    %80 = vector.broadcast %c16_i32_37 : i32 to vector<16x1xi32>
    %81 = arith.cmpi slt, %79, %80 : vector<16x1xi32>
    %82 = arith.andi %77, %81 : vector<16x1xi1>
    %cst_38 = arith.constant 0.000000e+00 : f32
    %83 = vector.shape_cast %82 : vector<16x1xi1> to vector<16x1xi1>
    %84 = vector.broadcast %83 : vector<16x1xi1> to vector<16x16xi1>
    %85 = vector.broadcast %cst_38 : f32 to vector<16x16xf32>
    %86 = arith.select %84, %73, %85 : vector<16x16xi1>, vector<16x16xf32>
    %c4 = arith.constant 4 : index
    %c0_39 = arith.constant 0 : index
    %87 = vector.load %arg5[%c4, %c0_39] : memref<48x128xf32, #tpu.memory_space<vmem>>, vector<1x16xf32>
    %88 = vector.broadcast %87 : vector<1x16xf32> to vector<16x16xf32>
    %89 = arith.mulf %86, %88 : vector<16x16xf32>
    %90 = arith.addf %72, %89 : vector<16x16xf32>
    %c10 = arith.constant 10 : index
    %c0_40 = arith.constant 0 : index
    %91 = vector.load %arg8[%c10, %c0_40] : memref<48x64xf32, #tpu.memory_space<vmem>>, vector<16x16xf32>
    %c2_i32 = arith.constant 2 : i32
    %92 = vector.broadcast %c2_i32 : i32 to vector<16x1xi32>
    %93 = arith.addi %15, %92 : vector<16x1xi32>
    %c0_i32_41 = arith.constant 0 : i32
    %94 = vector.broadcast %c0_i32_41 : i32 to vector<16x1xi32>
    %95 = arith.cmpi sge, %93, %94 : vector<16x1xi32>
    %c2_i32_42 = arith.constant 2 : i32
    %96 = vector.broadcast %c2_i32_42 : i32 to vector<16x1xi32>
    %97 = arith.addi %15, %96 : vector<16x1xi32>
    %c16_i32_43 = arith.constant 16 : i32
    %98 = vector.broadcast %c16_i32_43 : i32 to vector<16x1xi32>
    %99 = arith.cmpi slt, %97, %98 : vector<16x1xi32>
    %100 = arith.andi %95, %99 : vector<16x1xi1>
    %cst_44 = arith.constant 0.000000e+00 : f32
    %101 = vector.shape_cast %100 : vector<16x1xi1> to vector<16x1xi1>
    %102 = vector.broadcast %101 : vector<16x1xi1> to vector<16x16xi1>
    %103 = vector.broadcast %cst_44 : f32 to vector<16x16xf32>
    %104 = arith.select %102, %91, %103 : vector<16x16xi1>, vector<16x16xf32>
    %c5_45 = arith.constant 5 : index
    %c0_46 = arith.constant 0 : index
    %105 = vector.load %arg5[%c5_45, %c0_46] : memref<48x128xf32, #tpu.memory_space<vmem>>, vector<1x16xf32>
    %106 = vector.broadcast %105 : vector<1x16xf32> to vector<16x16xf32>
    %107 = arith.mulf %104, %106 : vector<16x16xf32>
    %108 = arith.addf %90, %107 : vector<16x16xf32>
    %c11 = arith.constant 11 : index
    %c0_47 = arith.constant 0 : index
    %109 = vector.load %arg8[%c11, %c0_47] : memref<48x64xf32, #tpu.memory_space<vmem>>, vector<16x16xf32>
    %c3_i32 = arith.constant 3 : i32
    %110 = vector.broadcast %c3_i32 : i32 to vector<16x1xi32>
    %111 = arith.addi %15, %110 : vector<16x1xi32>
    %c0_i32_48 = arith.constant 0 : i32
    %112 = vector.broadcast %c0_i32_48 : i32 to vector<16x1xi32>
    %113 = arith.cmpi sge, %111, %112 : vector<16x1xi32>
    %c3_i32_49 = arith.constant 3 : i32
    %114 = vector.broadcast %c3_i32_49 : i32 to vector<16x1xi32>
    %115 = arith.addi %15, %114 : vector<16x1xi32>
    %c16_i32_50 = arith.constant 16 : i32
    %116 = vector.broadcast %c16_i32_50 : i32 to vector<16x1xi32>
    %117 = arith.cmpi slt, %115, %116 : vector<16x1xi32>
    %118 = arith.andi %113, %117 : vector<16x1xi1>
    %cst_51 = arith.constant 0.000000e+00 : f32
    %119 = vector.shape_cast %118 : vector<16x1xi1> to vector<16x1xi1>
    %120 = vector.broadcast %119 : vector<16x1xi1> to vector<16x16xi1>
    %121 = vector.broadcast %cst_51 : f32 to vector<16x16xf32>
    %122 = arith.select %120, %109, %121 : vector<16x16xi1>, vector<16x16xf32>
    %c6_52 = arith.constant 6 : index
    %c0_53 = arith.constant 0 : index
    %123 = vector.load %arg5[%c6_52, %c0_53] : memref<48x128xf32, #tpu.memory_space<vmem>>, vector<1x16xf32>
    %124 = vector.broadcast %123 : vector<1x16xf32> to vector<16x16xf32>
    %125 = arith.mulf %122, %124 : vector<16x16xf32>
    %126 = arith.addf %108, %125 : vector<16x16xf32>
    %c1_54 = arith.constant 1 : index
    %c0_55 = arith.constant 0 : index
    %127 = vector.load %arg6[%c1_54, %c0_55] : memref<16x128xf32, #tpu.memory_space<vmem>>, vector<1x16xf32>
    %128 = vector.broadcast %127 : vector<1x16xf32> to vector<16x16xf32>
    %129 = arith.addf %126, %128 : vector<16x16xf32>
    %cst_56 = arith.constant 0.000000e+00 : f32
    %130 = vector.broadcast %cst_56 : f32 to vector<16x16xf32>
    %131 = arith.maximumf %129, %130 : vector<16x16xf32>
    %c64 = arith.constant 64 : index
    %c0_57 = arith.constant 0 : index
    %132 = vector.load %arg4[%c64, %c0_57] : memref<728x128xbf16, #tpu.memory_space<vmem>>, vector<16x32xbf16>
    %133 = arith.truncf %131 : vector<16x16xf32> to vector<16x16xbf16>
    %cst_58 = arith.constant dense<0.000000e+00> : vector<16x32xf32>
    %134 = tpu.matmul %133, %132, %cst_58 {dimension_numbers = #tpu.dot_dimension_numbers<[1], [0], [0], [1], [0, 0, 1, 1], [], []>} : vector<16x16xbf16>, vector<16x32xbf16>, vector<16x32xf32> -> vector<16x32xf32>
    %c7_59 = arith.constant 7 : index
    %c0_60 = arith.constant 0 : index
    %135 = vector.load %arg6[%c7_59, %c0_60] : memref<16x128xf32, #tpu.memory_space<vmem>>, vector<1x32xf32>
    %136 = vector.broadcast %135 : vector<1x32xf32> to vector<16x32xf32>
    %137 = arith.addf %134, %136 : vector<16x32xf32>
    %cst_61 = arith.constant 0.000000e+00 : f32
    %138 = vector.broadcast %cst_61 : f32 to vector<16x32xf32>
    %139 = arith.maximumf %137, %138 : vector<16x32xf32>
    %c8_62 = arith.constant 8 : index
    %c0_63 = arith.constant 0 : index
    %140 = vector.load %arg8[%c8_62, %c0_63] : memref<48x64xf32, #tpu.memory_space<vmem>>, vector<16x32xf32>
    tpu.vector_store %arg8[%c8_62, %c0_63], %139 {strides = array<i32>} : memref<48x64xf32, #tpu.memory_space<vmem>>, vector<16x32xf32>,
    %c0_64 = arith.constant 0 : index
    %c0_65 = arith.constant 0 : index
    %141 = vector.load %arg2[%c0_64, %c0_65] : memref<16x2xi32, #tpu.memory_space<vmem>>, vector<16x1xi32>
    %c11_66 = arith.constant 11 : index
    %c0_67 = arith.constant 0 : index
    %142 = vector.load %arg5[%c11_66, %c0_67] : memref<48x128xf32, #tpu.memory_space<vmem>>, vector<1x32xf32>
    %143 = vector.broadcast %142 : vector<1x32xf32> to vector<16x32xf32>
    %144 = arith.mulf %139, %143 : vector<16x32xf32>
    %c5_68 = arith.constant 5 : index
    %c0_69 = arith.constant 0 : index
    %145 = vector.load %arg8[%c5_68, %c0_69] : memref<48x64xf32, #tpu.memory_space<vmem>>, vector<16x32xf32>
    %c-3_i32_70 = arith.constant -3 : i32
    %146 = vector.broadcast %c-3_i32_70 : i32 to vector<16x1xi32>
    %147 = arith.addi %141, %146 : vector<16x1xi32>
    %c0_i32_71 = arith.constant 0 : i32
    %148 = vector.broadcast %c0_i32_71 : i32 to vector<16x1xi32>
    %149 = arith.cmpi sge, %147, %148 : vector<16x1xi32>
    %c-3_i32_72 = arith.constant -3 : i32
    %150 = vector.broadcast %c-3_i32_72 : i32 to vector<16x1xi32>
    %151 = arith.addi %141, %150 : vector<16x1xi32>
    %c16_i32_73 = arith.constant 16 : i32
    %152 = vector.broadcast %c16_i32_73 : i32 to vector<16x1xi32>
    %153 = arith.cmpi slt, %151, %152 : vector<16x1xi32>
    %154 = arith.andi %149, %153 : vector<16x1xi1>
    %cst_74 = arith.constant 0.000000e+00 : f32
    %155 = vector.shape_cast %154 : vector<16x1xi1> to vector<16x1xi1>
    %156 = vector.broadcast %155 : vector<16x1xi1> to vector<16x32xi1>
    %157 = vector.broadcast %cst_74 : f32 to vector<16x32xf32>
    %158 = arith.select %156, %145, %157 : vector<16x32xi1>, vector<16x32xf32>
    %c8_75 = arith.constant 8 : index
    %c0_76 = arith.constant 0 : index
    %159 = vector.load %arg5[%c8_75, %c0_76] : memref<48x128xf32, #tpu.memory_space<vmem>>, vector<1x32xf32>
    %160 = vector.broadcast %159 : vector<1x32xf32> to vector<16x32xf32>
    %161 = arith.mulf %158, %160 : vector<16x32xf32>
    %162 = arith.addf %144, %161 : vector<16x32xf32>
    %c6_77 = arith.constant 6 : index
    %c0_78 = arith.constant 0 : index
    %163 = vector.load %arg8[%c6_77, %c0_78] : memref<48x64xf32, #tpu.memory_space<vmem>>, vector<16x32xf32>
    %c-2_i32_79 = arith.constant -2 : i32
    %164 = vector.broadcast %c-2_i32_79 : i32 to vector<16x1xi32>
    %165 = arith.addi %141, %164 : vector<16x1xi32>
    %c0_i32_80 = arith.constant 0 : i32
    %166 = vector.broadcast %c0_i32_80 : i32 to vector<16x1xi32>
    %167 = arith.cmpi sge, %165, %166 : vector<16x1xi32>
    %c-2_i32_81 = arith.constant -2 : i32
    %168 = vector.broadcast %c-2_i32_81 : i32 to vector<16x1xi32>
    %169 = arith.addi %141, %168 : vector<16x1xi32>
    %c16_i32_82 = arith.constant 16 : i32
    %170 = vector.broadcast %c16_i32_82 : i32 to vector<16x1xi32>
    %171 = arith.cmpi slt, %169, %170 : vector<16x1xi32>
    %172 = arith.andi %167, %171 : vector<16x1xi1>
    %cst_83 = arith.constant 0.000000e+00 : f32
    %173 = vector.shape_cast %172 : vector<16x1xi1> to vector<16x1xi1>
    %174 = vector.broadcast %173 : vector<16x1xi1> to vector<16x32xi1>
    %175 = vector.broadcast %cst_83 : f32 to vector<16x32xf32>
    %176 = arith.select %174, %163, %175 : vector<16x32xi1>, vector<16x32xf32>
    %c9_84 = arith.constant 9 : index
    %c0_85 = arith.constant 0 : index
    %177 = vector.load %arg5[%c9_84, %c0_85] : memref<48x128xf32, #tpu.memory_space<vmem>>, vector<1x32xf32>
    %178 = vector.broadcast %177 : vector<1x32xf32> to vector<16x32xf32>
    %179 = arith.mulf %176, %178 : vector<16x32xf32>
    %180 = arith.addf %162, %179 : vector<16x32xf32>
    %c7_86 = arith.constant 7 : index
    %c0_87 = arith.constant 0 : index
    %181 = vector.load %arg8[%c7_86, %c0_87] : memref<48x64xf32, #tpu.memory_space<vmem>>, vector<16x32xf32>
    %c-1_i32_88 = arith.constant -1 : i32
    %182 = vector.broadcast %c-1_i32_88 : i32 to vector<16x1xi32>
    %183 = arith.addi %141, %182 : vector<16x1xi32>
    %c0_i32_89 = arith.constant 0 : i32
    %184 = vector.broadcast %c0_i32_89 : i32 to vector<16x1xi32>
    %185 = arith.cmpi sge, %183, %184 : vector<16x1xi32>
    %c-1_i32_90 = arith.constant -1 : i32
    %186 = vector.broadcast %c-1_i32_90 : i32 to vector<16x1xi32>
    %187 = arith.addi %141, %186 : vector<16x1xi32>
    %c16_i32_91 = arith.constant 16 : i32
    %188 = vector.broadcast %c16_i32_91 : i32 to vector<16x1xi32>
    %189 = arith.cmpi slt, %187, %188 : vector<16x1xi32>
    %190 = arith.andi %185, %189 : vector<16x1xi1>
    %cst_92 = arith.constant 0.000000e+00 : f32
    %191 = vector.shape_cast %190 : vector<16x1xi1> to vector<16x1xi1>
    %192 = vector.broadcast %191 : vector<16x1xi1> to vector<16x32xi1>
    %193 = vector.broadcast %cst_92 : f32 to vector<16x32xf32>
    %194 = arith.select %192, %181, %193 : vector<16x32xi1>, vector<16x32xf32>
    %c10_93 = arith.constant 10 : index
    %c0_94 = arith.constant 0 : index
    %195 = vector.load %arg5[%c10_93, %c0_94] : memref<48x128xf32, #tpu.memory_space<vmem>>, vector<1x32xf32>
    %196 = vector.broadcast %195 : vector<1x32xf32> to vector<16x32xf32>
    %197 = arith.mulf %194, %196 : vector<16x32xf32>
    %198 = arith.addf %180, %197 : vector<16x32xf32>
    %c9_95 = arith.constant 9 : index
    %c0_96 = arith.constant 0 : index
    %199 = vector.load %arg8[%c9_95, %c0_96] : memref<48x64xf32, #tpu.memory_space<vmem>>, vector<16x32xf32>
    %c1_i32_97 = arith.constant 1 : i32
    %200 = vector.broadcast %c1_i32_97 : i32 to vector<16x1xi32>
    %201 = arith.addi %141, %200 : vector<16x1xi32>
    %c0_i32_98 = arith.constant 0 : i32
    %202 = vector.broadcast %c0_i32_98 : i32 to vector<16x1xi32>
    %203 = arith.cmpi sge, %201, %202 : vector<16x1xi32>
    %c1_i32_99 = arith.constant 1 : i32
    %204 = vector.broadcast %c1_i32_99 : i32 to vector<16x1xi32>
    %205 = arith.addi %141, %204 : vector<16x1xi32>
    %c16_i32_100 = arith.constant 16 : i32
    %206 = vector.broadcast %c16_i32_100 : i32 to vector<16x1xi32>
    %207 = arith.cmpi slt, %205, %206 : vector<16x1xi32>
    %208 = arith.andi %203, %207 : vector<16x1xi1>
    %cst_101 = arith.constant 0.000000e+00 : f32
    %209 = vector.shape_cast %208 : vector<16x1xi1> to vector<16x1xi1>
    %210 = vector.broadcast %209 : vector<16x1xi1> to vector<16x32xi1>
    %211 = vector.broadcast %cst_101 : f32 to vector<16x32xf32>
    %212 = arith.select %210, %199, %211 : vector<16x32xi1>, vector<16x32xf32>
    %c12 = arith.constant 12 : index
    %c0_102 = arith.constant 0 : index
    %213 = vector.load %arg5[%c12, %c0_102] : memref<48x128xf32, #tpu.memory_space<vmem>>, vector<1x32xf32>
    %214 = vector.broadcast %213 : vector<1x32xf32> to vector<16x32xf32>
    %215 = arith.mulf %212, %214 : vector<16x32xf32>
    %216 = arith.addf %198, %215 : vector<16x32xf32>
    %c10_103 = arith.constant 10 : index
    %c0_104 = arith.constant 0 : index
    %217 = vector.load %arg8[%c10_103, %c0_104] : memref<48x64xf32, #tpu.memory_space<vmem>>, vector<16x32xf32>
    %c2_i32_105 = arith.constant 2 : i32
    %218 = vector.broadcast %c2_i32_105 : i32 to vector<16x1xi32>
    %219 = arith.addi %141, %218 : vector<16x1xi32>
    %c0_i32_106 = arith.constant 0 : i32
    %220 = vector.broadcast %c0_i32_106 : i32 to vector<16x1xi32>
    %221 = arith.cmpi sge, %219, %220 : vector<16x1xi32>
    %c2_i32_107 = arith.constant 2 : i32
    %222 = vector.broadcast %c2_i32_107 : i32 to vector<16x1xi32>
    %223 = arith.addi %141, %222 : vector<16x1xi32>
    %c16_i32_108 = arith.constant 16 : i32
    %224 = vector.broadcast %c16_i32_108 : i32 to vector<16x1xi32>
    %225 = arith.cmpi slt, %223, %224 : vector<16x1xi32>
    %226 = arith.andi %221, %225 : vector<16x1xi1>
    %cst_109 = arith.constant 0.000000e+00 : f32
    %227 = vector.shape_cast %226 : vector<16x1xi1> to vector<16x1xi1>
    %228 = vector.broadcast %227 : vector<16x1xi1> to vector<16x32xi1>
    %229 = vector.broadcast %cst_109 : f32 to vector<16x32xf32>
    %230 = arith.select %228, %217, %229 : vector<16x32xi1>, vector<16x32xf32>
    %c13 = arith.constant 13 : index
    %c0_110 = arith.constant 0 : index
    %231 = vector.load %arg5[%c13, %c0_110] : memref<48x128xf32, #tpu.memory_space<vmem>>, vector<1x32xf32>
    %232 = vector.broadcast %231 : vector<1x32xf32> to vector<16x32xf32>
    %233 = arith.mulf %230, %232 : vector<16x32xf32>
    %234 = arith.addf %216, %233 : vector<16x32xf32>
    %c11_111 = arith.constant 11 : index
    %c0_112 = arith.constant 0 : index
    %235 = vector.load %arg8[%c11_111, %c0_112] : memref<48x64xf32, #tpu.memory_space<vmem>>, vector<16x32xf32>
    %c3_i32_113 = arith.constant 3 : i32
    %236 = vector.broadcast %c3_i32_113 : i32 to vector<16x1xi32>
    %237 = arith.addi %141, %236 : vector<16x1xi32>
    %c0_i32_114 = arith.constant 0 : i32
    %238 = vector.broadcast %c0_i32_114 : i32 to vector<16x1xi32>
    %239 = arith.cmpi sge, %237, %238 : vector<16x1xi32>
    %c3_i32_115 = arith.constant 3 : i32
    %240 = vector.broadcast %c3_i32_115 : i32 to vector<16x1xi32>
    %241 = arith.addi %141, %240 : vector<16x1xi32>
    %c16_i32_116 = arith.constant 16 : i32
    %242 = vector.broadcast %c16_i32_116 : i32 to vector<16x1xi32>
    %243 = arith.cmpi slt, %241, %242 : vector<16x1xi32>
    %244 = arith.andi %239, %243 : vector<16x1xi1>
    %cst_117 = arith.constant 0.000000e+00 : f32
    %245 = vector.shape_cast %244 : vector<16x1xi1> to vector<16x1xi1>
    %246 = vector.broadcast %245 : vector<16x1xi1> to vector<16x32xi1>
    %247 = vector.broadcast %cst_117 : f32 to vector<16x32xf32>
    %248 = arith.select %246, %235, %247 : vector<16x32xi1>, vector<16x32xf32>
    %c14 = arith.constant 14 : index
    %c0_118 = arith.constant 0 : index
    %249 = vector.load %arg5[%c14, %c0_118] : memref<48x128xf32, #tpu.memory_space<vmem>>, vector<1x32xf32>
    %250 = vector.broadcast %249 : vector<1x32xf32> to vector<16x32xf32>
    %251 = arith.mulf %248, %250 : vector<16x32xf32>
    %252 = arith.addf %234, %251 : vector<16x32xf32>
    %c2_119 = arith.constant 2 : index
    %c0_120 = arith.constant 0 : index
    %253 = vector.load %arg6[%c2_119, %c0_120] : memref<16x128xf32, #tpu.memory_space<vmem>>, vector<1x32xf32>
    %254 = vector.broadcast %253 : vector<1x32xf32> to vector<16x32xf32>
    %255 = arith.addf %252, %254 : vector<16x32xf32>
    %cst_121 = arith.constant 0.000000e+00 : f32
    %256 = vector.broadcast %cst_121 : f32 to vector<16x32xf32>
    %257 = arith.maximumf %255, %256 : vector<16x32xf32>
    %c80 = arith.constant 80 : index
    %c0_122 = arith.constant 0 : index
    %258 = vector.load %arg4[%c80, %c0_122] : memref<728x128xbf16, #tpu.memory_space<vmem>>, vector<32x64xbf16>
    %259 = arith.truncf %257 : vector<16x32xf32> to vector<16x32xbf16>
    %cst_123 = arith.constant dense<0.000000e+00> : vector<16x64xf32>
    %260 = tpu.matmul %259, %258, %cst_123 {dimension_numbers = #tpu.dot_dimension_numbers<[1], [0], [0], [1], [0, 0, 1, 1], [], []>} : vector<16x32xbf16>, vector<32x64xbf16>, vector<16x64xf32> -> vector<16x64xf32>
    %c8_124 = arith.constant 8 : index
    %c0_125 = arith.constant 0 : index
    %261 = vector.load %arg6[%c8_124, %c0_125] : memref<16x128xf32, #tpu.memory_space<vmem>>, vector<1x64xf32>
    %262 = vector.broadcast %261 : vector<1x64xf32> to vector<16x64xf32>
    %263 = arith.addf %260, %262 : vector<16x64xf32>
    %cst_126 = arith.constant 0.000000e+00 : f32
    %264 = vector.broadcast %cst_126 : f32 to vector<16x64xf32>
    %265 = arith.maximumf %263, %264 : vector<16x64xf32>
    %c0_127 = arith.constant 0 : index
    %c0_128 = arith.constant 0 : index
    %266 = vector.load %arg8[%c0_127, %c0_128] : memref<48x64xf32, #tpu.memory_space<vmem>>, vector<16x64xf32>
    tpu.vector_store %arg8[%c0_127, %c0_128], %265 {strides = array<i32>} : memref<48x64xf32, #tpu.memory_space<vmem>>, vector<16x64xf32>,
    %c0_129 = arith.constant 0 : index
    %c0_130 = arith.constant 0 : index
    %267 = tpu.strided_load %arg8[%c0_129, %c0_130] {strides = array<i32: 2, 1>} : memref<48x64xf32, #tpu.memory_space<vmem>>, vector<8x64xf32>
    %c1_131 = arith.constant 1 : index
    %c0_132 = arith.constant 0 : index
    %268 = tpu.strided_load %arg8[%c1_131, %c0_132] {strides = array<i32: 2, 1>} : memref<48x64xf32, #tpu.memory_space<vmem>>, vector<8x64xf32>
    %269 = arith.maximumf %267, %268 : vector<8x64xf32>
    %c8_133 = arith.constant 8 : index
    %c0_134 = arith.constant 0 : index
    %270 = vector.load %arg8[%c8_133, %c0_134] : memref<48x64xf32, #tpu.memory_space<vmem>>, vector<8x64xf32>
    tpu.vector_store %arg8[%c8_133, %c0_134], %269 {strides = array<i32>} : memref<48x64xf32, #tpu.memory_space<vmem>>, vector<8x64xf32>,
    %c0_135 = arith.constant 0 : index
    %c1_136 = arith.constant 1 : index
    %271 = vector.load %arg2[%c0_135, %c1_136] : memref<16x2xi32, #tpu.memory_space<vmem>>, vector<8x1xi32>
    %c19 = arith.constant 19 : index
    %c0_137 = arith.constant 0 : index
    %272 = vector.load %arg5[%c19, %c0_137] : memref<48x128xf32, #tpu.memory_space<vmem>>, vector<1x64xf32>
    %273 = vector.broadcast %272 : vector<1x64xf32> to vector<8x64xf32>
    %274 = arith.mulf %269, %273 : vector<8x64xf32>
    %c5_138 = arith.constant 5 : index
    %c0_139 = arith.constant 0 : index
    %275 = vector.load %arg8[%c5_138, %c0_139] : memref<48x64xf32, #tpu.memory_space<vmem>>, vector<8x64xf32>
    %c-3_i32_140 = arith.constant -3 : i32
    %276 = vector.broadcast %c-3_i32_140 : i32 to vector<8x1xi32>
    %277 = arith.addi %271, %276 : vector<8x1xi32>
    %c0_i32_141 = arith.constant 0 : i32
    %278 = vector.broadcast %c0_i32_141 : i32 to vector<8x1xi32>
    %279 = arith.cmpi sge, %277, %278 : vector<8x1xi32>
    %c-3_i32_142 = arith.constant -3 : i32
    %280 = vector.broadcast %c-3_i32_142 : i32 to vector<8x1xi32>
    %281 = arith.addi %271, %280 : vector<8x1xi32>
    %c8_i32 = arith.constant 8 : i32
    %282 = vector.broadcast %c8_i32 : i32 to vector<8x1xi32>
    %283 = arith.cmpi slt, %281, %282 : vector<8x1xi32>
    %284 = arith.andi %279, %283 : vector<8x1xi1>
    %cst_143 = arith.constant 0.000000e+00 : f32
    %285 = vector.shape_cast %284 : vector<8x1xi1> to vector<8x1xi1>
    %286 = vector.broadcast %285 : vector<8x1xi1> to vector<8x64xi1>
    %287 = vector.broadcast %cst_143 : f32 to vector<8x64xf32>
    %288 = arith.select %286, %275, %287 : vector<8x64xi1>, vector<8x64xf32>
    %c16 = arith.constant 16 : index
    %c0_144 = arith.constant 0 : index
    %289 = vector.load %arg5[%c16, %c0_144] : memref<48x128xf32, #tpu.memory_space<vmem>>, vector<1x64xf32>
    %290 = vector.broadcast %289 : vector<1x64xf32> to vector<8x64xf32>
    %291 = arith.mulf %288, %290 : vector<8x64xf32>
    %292 = arith.addf %274, %291 : vector<8x64xf32>
    %c6_145 = arith.constant 6 : index
    %c0_146 = arith.constant 0 : index
    %293 = vector.load %arg8[%c6_145, %c0_146] : memref<48x64xf32, #tpu.memory_space<vmem>>, vector<8x64xf32>
    %c-2_i32_147 = arith.constant -2 : i32
    %294 = vector.broadcast %c-2_i32_147 : i32 to vector<8x1xi32>
    %295 = arith.addi %271, %294 : vector<8x1xi32>
    %c0_i32_148 = arith.constant 0 : i32
    %296 = vector.broadcast %c0_i32_148 : i32 to vector<8x1xi32>
    %297 = arith.cmpi sge, %295, %296 : vector<8x1xi32>
    %c-2_i32_149 = arith.constant -2 : i32
    %298 = vector.broadcast %c-2_i32_149 : i32 to vector<8x1xi32>
    %299 = arith.addi %271, %298 : vector<8x1xi32>
    %c8_i32_150 = arith.constant 8 : i32
    %300 = vector.broadcast %c8_i32_150 : i32 to vector<8x1xi32>
    %301 = arith.cmpi slt, %299, %300 : vector<8x1xi32>
    %302 = arith.andi %297, %301 : vector<8x1xi1>
    %cst_151 = arith.constant 0.000000e+00 : f32
    %303 = vector.shape_cast %302 : vector<8x1xi1> to vector<8x1xi1>
    %304 = vector.broadcast %303 : vector<8x1xi1> to vector<8x64xi1>
    %305 = vector.broadcast %cst_151 : f32 to vector<8x64xf32>
    %306 = arith.select %304, %293, %305 : vector<8x64xi1>, vector<8x64xf32>
    %c17 = arith.constant 17 : index
    %c0_152 = arith.constant 0 : index
    %307 = vector.load %arg5[%c17, %c0_152] : memref<48x128xf32, #tpu.memory_space<vmem>>, vector<1x64xf32>
    %308 = vector.broadcast %307 : vector<1x64xf32> to vector<8x64xf32>
    %309 = arith.mulf %306, %308 : vector<8x64xf32>
    %310 = arith.addf %292, %309 : vector<8x64xf32>
    %c7_153 = arith.constant 7 : index
    %c0_154 = arith.constant 0 : index
    %311 = vector.load %arg8[%c7_153, %c0_154] : memref<48x64xf32, #tpu.memory_space<vmem>>, vector<8x64xf32>
    %c-1_i32_155 = arith.constant -1 : i32
    %312 = vector.broadcast %c-1_i32_155 : i32 to vector<8x1xi32>
    %313 = arith.addi %271, %312 : vector<8x1xi32>
    %c0_i32_156 = arith.constant 0 : i32
    %314 = vector.broadcast %c0_i32_156 : i32 to vector<8x1xi32>
    %315 = arith.cmpi sge, %313, %314 : vector<8x1xi32>
    %c-1_i32_157 = arith.constant -1 : i32
    %316 = vector.broadcast %c-1_i32_157 : i32 to vector<8x1xi32>
    %317 = arith.addi %271, %316 : vector<8x1xi32>
    %c8_i32_158 = arith.constant 8 : i32
    %318 = vector.broadcast %c8_i32_158 : i32 to vector<8x1xi32>
    %319 = arith.cmpi slt, %317, %318 : vector<8x1xi32>
    %320 = arith.andi %315, %319 : vector<8x1xi1>
    %cst_159 = arith.constant 0.000000e+00 : f32
    %321 = vector.shape_cast %320 : vector<8x1xi1> to vector<8x1xi1>
    %322 = vector.broadcast %321 : vector<8x1xi1> to vector<8x64xi1>
    %323 = vector.broadcast %cst_159 : f32 to vector<8x64xf32>
    %324 = arith.select %322, %311, %323 : vector<8x64xi1>, vector<8x64xf32>
    %c18 = arith.constant 18 : index
    %c0_160 = arith.constant 0 : index
    %325 = vector.load %arg5[%c18, %c0_160] : memref<48x128xf32, #tpu.memory_space<vmem>>, vector<1x64xf32>
    %326 = vector.broadcast %325 : vector<1x64xf32> to vector<8x64xf32>
    %327 = arith.mulf %324, %326 : vector<8x64xf32>
    %328 = arith.addf %310, %327 : vector<8x64xf32>
    %c9_161 = arith.constant 9 : index
    %c0_162 = arith.constant 0 : index
    %329 = vector.load %arg8[%c9_161, %c0_162] : memref<48x64xf32, #tpu.memory_space<vmem>>, vector<8x64xf32>
    %c1_i32_163 = arith.constant 1 : i32
    %330 = vector.broadcast %c1_i32_163 : i32 to vector<8x1xi32>
    %331 = arith.addi %271, %330 : vector<8x1xi32>
    %c0_i32_164 = arith.constant 0 : i32
    %332 = vector.broadcast %c0_i32_164 : i32 to vector<8x1xi32>
    %333 = arith.cmpi sge, %331, %332 : vector<8x1xi32>
    %c1_i32_165 = arith.constant 1 : i32
    %334 = vector.broadcast %c1_i32_165 : i32 to vector<8x1xi32>
    %335 = arith.addi %271, %334 : vector<8x1xi32>
    %c8_i32_166 = arith.constant 8 : i32
    %336 = vector.broadcast %c8_i32_166 : i32 to vector<8x1xi32>
    %337 = arith.cmpi slt, %335, %336 : vector<8x1xi32>
    %338 = arith.andi %333, %337 : vector<8x1xi1>
    %cst_167 = arith.constant 0.000000e+00 : f32
    %339 = vector.shape_cast %338 : vector<8x1xi1> to vector<8x1xi1>
    %340 = vector.broadcast %339 : vector<8x1xi1> to vector<8x64xi1>
    %341 = vector.broadcast %cst_167 : f32 to vector<8x64xf32>
    %342 = arith.select %340, %329, %341 : vector<8x64xi1>, vector<8x64xf32>
    %c20 = arith.constant 20 : index
    %c0_168 = arith.constant 0 : index
    %343 = vector.load %arg5[%c20, %c0_168] : memref<48x128xf32, #tpu.memory_space<vmem>>, vector<1x64xf32>
    %344 = vector.broadcast %343 : vector<1x64xf32> to vector<8x64xf32>
    %345 = arith.mulf %342, %344 : vector<8x64xf32>
    %346 = arith.addf %328, %345 : vector<8x64xf32>
    %c10_169 = arith.constant 10 : index
    %c0_170 = arith.constant 0 : index
    %347 = vector.load %arg8[%c10_169, %c0_170] : memref<48x64xf32, #tpu.memory_space<vmem>>, vector<8x64xf32>
    %c2_i32_171 = arith.constant 2 : i32
    %348 = vector.broadcast %c2_i32_171 : i32 to vector<8x1xi32>
    %349 = arith.addi %271, %348 : vector<8x1xi32>
    %c0_i32_172 = arith.constant 0 : i32
    %350 = vector.broadcast %c0_i32_172 : i32 to vector<8x1xi32>
    %351 = arith.cmpi sge, %349, %350 : vector<8x1xi32>
    %c2_i32_173 = arith.constant 2 : i32
    %352 = vector.broadcast %c2_i32_173 : i32 to vector<8x1xi32>
    %353 = arith.addi %271, %352 : vector<8x1xi32>
    %c8_i32_174 = arith.constant 8 : i32
    %354 = vector.broadcast %c8_i32_174 : i32 to vector<8x1xi32>
    %355 = arith.cmpi slt, %353, %354 : vector<8x1xi32>
    %356 = arith.andi %351, %355 : vector<8x1xi1>
    %cst_175 = arith.constant 0.000000e+00 : f32
    %357 = vector.shape_cast %356 : vector<8x1xi1> to vector<8x1xi1>
    %358 = vector.broadcast %357 : vector<8x1xi1> to vector<8x64xi1>
    %359 = vector.broadcast %cst_175 : f32 to vector<8x64xf32>
    %360 = arith.select %358, %347, %359 : vector<8x64xi1>, vector<8x64xf32>
    %c21 = arith.constant 21 : index
    %c0_176 = arith.constant 0 : index
    %361 = vector.load %arg5[%c21, %c0_176] : memref<48x128xf32, #tpu.memory_space<vmem>>, vector<1x64xf32>
    %362 = vector.broadcast %361 : vector<1x64xf32> to vector<8x64xf32>
    %363 = arith.mulf %360, %362 : vector<8x64xf32>
    %364 = arith.addf %346, %363 : vector<8x64xf32>
    %c11_177 = arith.constant 11 : index
    %c0_178 = arith.constant 0 : index
    %365 = vector.load %arg8[%c11_177, %c0_178] : memref<48x64xf32, #tpu.memory_space<vmem>>, vector<8x64xf32>
    %c3_i32_179 = arith.constant 3 : i32
    %366 = vector.broadcast %c3_i32_179 : i32 to vector<8x1xi32>
    %367 = arith.addi %271, %366 : vector<8x1xi32>
    %c0_i32_180 = arith.constant 0 : i32
    %368 = vector.broadcast %c0_i32_180 : i32 to vector<8x1xi32>
    %369 = arith.cmpi sge, %367, %368 : vector<8x1xi32>
    %c3_i32_181 = arith.constant 3 : i32
    %370 = vector.broadcast %c3_i32_181 : i32 to vector<8x1xi32>
    %371 = arith.addi %271, %370 : vector<8x1xi32>
    %c8_i32_182 = arith.constant 8 : i32
    %372 = vector.broadcast %c8_i32_182 : i32 to vector<8x1xi32>
    %373 = arith.cmpi slt, %371, %372 : vector<8x1xi32>
    %374 = arith.andi %369, %373 : vector<8x1xi1>
    %cst_183 = arith.constant 0.000000e+00 : f32
    %375 = vector.shape_cast %374 : vector<8x1xi1> to vector<8x1xi1>
    %376 = vector.broadcast %375 : vector<8x1xi1> to vector<8x64xi1>
    %377 = vector.broadcast %cst_183 : f32 to vector<8x64xf32>
    %378 = arith.select %376, %365, %377 : vector<8x64xi1>, vector<8x64xf32>
    %c22 = arith.constant 22 : index
    %c0_184 = arith.constant 0 : index
    %379 = vector.load %arg5[%c22, %c0_184] : memref<48x128xf32, #tpu.memory_space<vmem>>, vector<1x64xf32>
    %380 = vector.broadcast %379 : vector<1x64xf32> to vector<8x64xf32>
    %381 = arith.mulf %378, %380 : vector<8x64xf32>
    %382 = arith.addf %364, %381 : vector<8x64xf32>
    %c3_185 = arith.constant 3 : index
    %c0_186 = arith.constant 0 : index
    %383 = vector.load %arg6[%c3_185, %c0_186] : memref<16x128xf32, #tpu.memory_space<vmem>>, vector<1x64xf32>
    %384 = vector.broadcast %383 : vector<1x64xf32> to vector<8x64xf32>
    %385 = arith.addf %382, %384 : vector<8x64xf32>
    %cst_187 = arith.constant 0.000000e+00 : f32
    %386 = vector.broadcast %cst_187 : f32 to vector<8x64xf32>
    %387 = arith.maximumf %385, %386 : vector<8x64xf32>
    %c112 = arith.constant 112 : index
    %c0_188 = arith.constant 0 : index
    %388 = vector.load %arg4[%c112, %c0_188] : memref<728x128xbf16, #tpu.memory_space<vmem>>, vector<64x64xbf16>
    %389 = arith.truncf %387 : vector<8x64xf32> to vector<8x64xbf16>
    %cst_189 = arith.constant dense<0.000000e+00> : vector<8x64xf32>
    %390 = tpu.matmul %389, %388, %cst_189 {dimension_numbers = #tpu.dot_dimension_numbers<[1], [0], [0], [1], [0, 0, 1, 1], [], []>} : vector<8x64xbf16>, vector<64x64xbf16>, vector<8x64xf32> -> vector<8x64xf32>
    %c9_190 = arith.constant 9 : index
    %c0_191 = arith.constant 0 : index
    %391 = vector.load %arg6[%c9_190, %c0_191] : memref<16x128xf32, #tpu.memory_space<vmem>>, vector<1x64xf32>
    %392 = vector.broadcast %391 : vector<1x64xf32> to vector<8x64xf32>
    %393 = arith.addf %390, %392 : vector<8x64xf32>
    %cst_192 = arith.constant 0.000000e+00 : f32
    %394 = vector.broadcast %cst_192 : f32 to vector<8x64xf32>
    %395 = arith.maximumf %393, %394 : vector<8x64xf32>
    %c8_193 = arith.constant 8 : index
    %c0_194 = arith.constant 0 : index
    %396 = vector.load %arg8[%c8_193, %c0_194] : memref<48x64xf32, #tpu.memory_space<vmem>>, vector<8x64xf32>
    tpu.vector_store %arg8[%c8_193, %c0_194], %395 {strides = array<i32>} : memref<48x64xf32, #tpu.memory_space<vmem>>, vector<8x64xf32>,
    %c0_195 = arith.constant 0 : index
    %c1_196 = arith.constant 1 : index
    %397 = vector.load %arg2[%c0_195, %c1_196] : memref<16x2xi32, #tpu.memory_space<vmem>>, vector<8x1xi32>
    %c27 = arith.constant 27 : index
    %c0_197 = arith.constant 0 : index
    %398 = vector.load %arg5[%c27, %c0_197] : memref<48x128xf32, #tpu.memory_space<vmem>>, vector<1x64xf32>
    %399 = vector.broadcast %398 : vector<1x64xf32> to vector<8x64xf32>
    %400 = arith.mulf %395, %399 : vector<8x64xf32>
    %c5_198 = arith.constant 5 : index
    %c0_199 = arith.constant 0 : index
    %401 = vector.load %arg8[%c5_198, %c0_199] : memref<48x64xf32, #tpu.memory_space<vmem>>, vector<8x64xf32>
    %c-3_i32_200 = arith.constant -3 : i32
    %402 = vector.broadcast %c-3_i32_200 : i32 to vector<8x1xi32>
    %403 = arith.addi %397, %402 : vector<8x1xi32>
    %c0_i32_201 = arith.constant 0 : i32
    %404 = vector.broadcast %c0_i32_201 : i32 to vector<8x1xi32>
    %405 = arith.cmpi sge, %403, %404 : vector<8x1xi32>
    %c-3_i32_202 = arith.constant -3 : i32
    %406 = vector.broadcast %c-3_i32_202 : i32 to vector<8x1xi32>
    %407 = arith.addi %397, %406 : vector<8x1xi32>
    %c8_i32_203 = arith.constant 8 : i32
    %408 = vector.broadcast %c8_i32_203 : i32 to vector<8x1xi32>
    %409 = arith.cmpi slt, %407, %408 : vector<8x1xi32>
    %410 = arith.andi %405, %409 : vector<8x1xi1>
    %cst_204 = arith.constant 0.000000e+00 : f32
    %411 = vector.shape_cast %410 : vector<8x1xi1> to vector<8x1xi1>
    %412 = vector.broadcast %411 : vector<8x1xi1> to vector<8x64xi1>
    %413 = vector.broadcast %cst_204 : f32 to vector<8x64xf32>
    %414 = arith.select %412, %401, %413 : vector<8x64xi1>, vector<8x64xf32>
    %c24 = arith.constant 24 : index
    %c0_205 = arith.constant 0 : index
    %415 = vector.load %arg5[%c24, %c0_205] : memref<48x128xf32, #tpu.memory_space<vmem>>, vector<1x64xf32>
    %416 = vector.broadcast %415 : vector<1x64xf32> to vector<8x64xf32>
    %417 = arith.mulf %414, %416 : vector<8x64xf32>
    %418 = arith.addf %400, %417 : vector<8x64xf32>
    %c6_206 = arith.constant 6 : index
    %c0_207 = arith.constant 0 : index
    %419 = vector.load %arg8[%c6_206, %c0_207] : memref<48x64xf32, #tpu.memory_space<vmem>>, vector<8x64xf32>
    %c-2_i32_208 = arith.constant -2 : i32
    %420 = vector.broadcast %c-2_i32_208 : i32 to vector<8x1xi32>
    %421 = arith.addi %397, %420 : vector<8x1xi32>
    %c0_i32_209 = arith.constant 0 : i32
    %422 = vector.broadcast %c0_i32_209 : i32 to vector<8x1xi32>
    %423 = arith.cmpi sge, %421, %422 : vector<8x1xi32>
    %c-2_i32_210 = arith.constant -2 : i32
    %424 = vector.broadcast %c-2_i32_210 : i32 to vector<8x1xi32>
    %425 = arith.addi %397, %424 : vector<8x1xi32>
    %c8_i32_211 = arith.constant 8 : i32
    %426 = vector.broadcast %c8_i32_211 : i32 to vector<8x1xi32>
    %427 = arith.cmpi slt, %425, %426 : vector<8x1xi32>
    %428 = arith.andi %423, %427 : vector<8x1xi1>
    %cst_212 = arith.constant 0.000000e+00 : f32
    %429 = vector.shape_cast %428 : vector<8x1xi1> to vector<8x1xi1>
    %430 = vector.broadcast %429 : vector<8x1xi1> to vector<8x64xi1>
    %431 = vector.broadcast %cst_212 : f32 to vector<8x64xf32>
    %432 = arith.select %430, %419, %431 : vector<8x64xi1>, vector<8x64xf32>
    %c25 = arith.constant 25 : index
    %c0_213 = arith.constant 0 : index
    %433 = vector.load %arg5[%c25, %c0_213] : memref<48x128xf32, #tpu.memory_space<vmem>>, vector<1x64xf32>
    %434 = vector.broadcast %433 : vector<1x64xf32> to vector<8x64xf32>
    %435 = arith.mulf %432, %434 : vector<8x64xf32>
    %436 = arith.addf %418, %435 : vector<8x64xf32>
    %c7_214 = arith.constant 7 : index
    %c0_215 = arith.constant 0 : index
    %437 = vector.load %arg8[%c7_214, %c0_215] : memref<48x64xf32, #tpu.memory_space<vmem>>, vector<8x64xf32>
    %c-1_i32_216 = arith.constant -1 : i32
    %438 = vector.broadcast %c-1_i32_216 : i32 to vector<8x1xi32>
    %439 = arith.addi %397, %438 : vector<8x1xi32>
    %c0_i32_217 = arith.constant 0 : i32
    %440 = vector.broadcast %c0_i32_217 : i32 to vector<8x1xi32>
    %441 = arith.cmpi sge, %439, %440 : vector<8x1xi32>
    %c-1_i32_218 = arith.constant -1 : i32
    %442 = vector.broadcast %c-1_i32_218 : i32 to vector<8x1xi32>
    %443 = arith.addi %397, %442 : vector<8x1xi32>
    %c8_i32_219 = arith.constant 8 : i32
    %444 = vector.broadcast %c8_i32_219 : i32 to vector<8x1xi32>
    %445 = arith.cmpi slt, %443, %444 : vector<8x1xi32>
    %446 = arith.andi %441, %445 : vector<8x1xi1>
    %cst_220 = arith.constant 0.000000e+00 : f32
    %447 = vector.shape_cast %446 : vector<8x1xi1> to vector<8x1xi1>
    %448 = vector.broadcast %447 : vector<8x1xi1> to vector<8x64xi1>
    %449 = vector.broadcast %cst_220 : f32 to vector<8x64xf32>
    %450 = arith.select %448, %437, %449 : vector<8x64xi1>, vector<8x64xf32>
    %c26 = arith.constant 26 : index
    %c0_221 = arith.constant 0 : index
    %451 = vector.load %arg5[%c26, %c0_221] : memref<48x128xf32, #tpu.memory_space<vmem>>, vector<1x64xf32>
    %452 = vector.broadcast %451 : vector<1x64xf32> to vector<8x64xf32>
    %453 = arith.mulf %450, %452 : vector<8x64xf32>
    %454 = arith.addf %436, %453 : vector<8x64xf32>
    %c9_222 = arith.constant 9 : index
    %c0_223 = arith.constant 0 : index
    %455 = vector.load %arg8[%c9_222, %c0_223] : memref<48x64xf32, #tpu.memory_space<vmem>>, vector<8x64xf32>
    %c1_i32_224 = arith.constant 1 : i32
    %456 = vector.broadcast %c1_i32_224 : i32 to vector<8x1xi32>
    %457 = arith.addi %397, %456 : vector<8x1xi32>
    %c0_i32_225 = arith.constant 0 : i32
    %458 = vector.broadcast %c0_i32_225 : i32 to vector<8x1xi32>
    %459 = arith.cmpi sge, %457, %458 : vector<8x1xi32>
    %c1_i32_226 = arith.constant 1 : i32
    %460 = vector.broadcast %c1_i32_226 : i32 to vector<8x1xi32>
    %461 = arith.addi %397, %460 : vector<8x1xi32>
    %c8_i32_227 = arith.constant 8 : i32
    %462 = vector.broadcast %c8_i32_227 : i32 to vector<8x1xi32>
    %463 = arith.cmpi slt, %461, %462 : vector<8x1xi32>
    %464 = arith.andi %459, %463 : vector<8x1xi1>
    %cst_228 = arith.constant 0.000000e+00 : f32
    %465 = vector.shape_cast %464 : vector<8x1xi1> to vector<8x1xi1>
    %466 = vector.broadcast %465 : vector<8x1xi1> to vector<8x64xi1>
    %467 = vector.broadcast %cst_228 : f32 to vector<8x64xf32>
    %468 = arith.select %466, %455, %467 : vector<8x64xi1>, vector<8x64xf32>
    %c28 = arith.constant 28 : index
    %c0_229 = arith.constant 0 : index
    %469 = vector.load %arg5[%c28, %c0_229] : memref<48x128xf32, #tpu.memory_space<vmem>>, vector<1x64xf32>
    %470 = vector.broadcast %469 : vector<1x64xf32> to vector<8x64xf32>
    %471 = arith.mulf %468, %470 : vector<8x64xf32>
    %472 = arith.addf %454, %471 : vector<8x64xf32>
    %c10_230 = arith.constant 10 : index
    %c0_231 = arith.constant 0 : index
    %473 = vector.load %arg8[%c10_230, %c0_231] : memref<48x64xf32, #tpu.memory_space<vmem>>, vector<8x64xf32>
    %c2_i32_232 = arith.constant 2 : i32
    %474 = vector.broadcast %c2_i32_232 : i32 to vector<8x1xi32>
    %475 = arith.addi %397, %474 : vector<8x1xi32>
    %c0_i32_233 = arith.constant 0 : i32
    %476 = vector.broadcast %c0_i32_233 : i32 to vector<8x1xi32>
    %477 = arith.cmpi sge, %475, %476 : vector<8x1xi32>
    %c2_i32_234 = arith.constant 2 : i32
    %478 = vector.broadcast %c2_i32_234 : i32 to vector<8x1xi32>
    %479 = arith.addi %397, %478 : vector<8x1xi32>
    %c8_i32_235 = arith.constant 8 : i32
    %480 = vector.broadcast %c8_i32_235 : i32 to vector<8x1xi32>
    %481 = arith.cmpi slt, %479, %480 : vector<8x1xi32>
    %482 = arith.andi %477, %481 : vector<8x1xi1>
    %cst_236 = arith.constant 0.000000e+00 : f32
    %483 = vector.shape_cast %482 : vector<8x1xi1> to vector<8x1xi1>
    %484 = vector.broadcast %483 : vector<8x1xi1> to vector<8x64xi1>
    %485 = vector.broadcast %cst_236 : f32 to vector<8x64xf32>
    %486 = arith.select %484, %473, %485 : vector<8x64xi1>, vector<8x64xf32>
    %c29 = arith.constant 29 : index
    %c0_237 = arith.constant 0 : index
    %487 = vector.load %arg5[%c29, %c0_237] : memref<48x128xf32, #tpu.memory_space<vmem>>, vector<1x64xf32>
    %488 = vector.broadcast %487 : vector<1x64xf32> to vector<8x64xf32>
    %489 = arith.mulf %486, %488 : vector<8x64xf32>
    %490 = arith.addf %472, %489 : vector<8x64xf32>
    %c11_238 = arith.constant 11 : index
    %c0_239 = arith.constant 0 : index
    %491 = vector.load %arg8[%c11_238, %c0_239] : memref<48x64xf32, #tpu.memory_space<vmem>>, vector<8x64xf32>
    %c3_i32_240 = arith.constant 3 : i32
    %492 = vector.broadcast %c3_i32_240 : i32 to vector<8x1xi32>
    %493 = arith.addi %397, %492 : vector<8x1xi32>
    %c0_i32_241 = arith.constant 0 : i32
    %494 = vector.broadcast %c0_i32_241 : i32 to vector<8x1xi32>
    %495 = arith.cmpi sge, %493, %494 : vector<8x1xi32>
    %c3_i32_242 = arith.constant 3 : i32
    %496 = vector.broadcast %c3_i32_242 : i32 to vector<8x1xi32>
    %497 = arith.addi %397, %496 : vector<8x1xi32>
    %c8_i32_243 = arith.constant 8 : i32
    %498 = vector.broadcast %c8_i32_243 : i32 to vector<8x1xi32>
    %499 = arith.cmpi slt, %497, %498 : vector<8x1xi32>
    %500 = arith.andi %495, %499 : vector<8x1xi1>
    %cst_244 = arith.constant 0.000000e+00 : f32
    %501 = vector.shape_cast %500 : vector<8x1xi1> to vector<8x1xi1>
    %502 = vector.broadcast %501 : vector<8x1xi1> to vector<8x64xi1>
    %503 = vector.broadcast %cst_244 : f32 to vector<8x64xf32>
    %504 = arith.select %502, %491, %503 : vector<8x64xi1>, vector<8x64xf32>
    %c30 = arith.constant 30 : index
    %c0_245 = arith.constant 0 : index
    %505 = vector.load %arg5[%c30, %c0_245] : memref<48x128xf32, #tpu.memory_space<vmem>>, vector<1x64xf32>
    %506 = vector.broadcast %505 : vector<1x64xf32> to vector<8x64xf32>
    %507 = arith.mulf %504, %506 : vector<8x64xf32>
    %508 = arith.addf %490, %507 : vector<8x64xf32>
    %c4_246 = arith.constant 4 : index
    %c0_247 = arith.constant 0 : index
    %509 = vector.load %arg6[%c4_246, %c0_247] : memref<16x128xf32, #tpu.memory_space<vmem>>, vector<1x64xf32>
    %510 = vector.broadcast %509 : vector<1x64xf32> to vector<8x64xf32>
    %511 = arith.addf %508, %510 : vector<8x64xf32>
    %cst_248 = arith.constant 0.000000e+00 : f32
    %512 = vector.broadcast %cst_248 : f32 to vector<8x64xf32>
    %513 = arith.maximumf %511, %512 : vector<8x64xf32>
    %c176 = arith.constant 176 : index
    %c0_249 = arith.constant 0 : index
    %514 = vector.load %arg4[%c176, %c0_249] : memref<728x128xbf16, #tpu.memory_space<vmem>>, vector<64x64xbf16>
    %515 = arith.truncf %513 : vector<8x64xf32> to vector<8x64xbf16>
    %cst_250 = arith.constant dense<0.000000e+00> : vector<8x64xf32>
    %516 = tpu.matmul %515, %514, %cst_250 {dimension_numbers = #tpu.dot_dimension_numbers<[1], [0], [0], [1], [0, 0, 1, 1], [], []>} : vector<8x64xbf16>, vector<64x64xbf16>, vector<8x64xf32> -> vector<8x64xf32>
    %c10_251 = arith.constant 10 : index
    %c0_252 = arith.constant 0 : index
    %517 = vector.load %arg6[%c10_251, %c0_252] : memref<16x128xf32, #tpu.memory_space<vmem>>, vector<1x64xf32>
    %518 = vector.broadcast %517 : vector<1x64xf32> to vector<8x64xf32>
    %519 = arith.addf %516, %518 : vector<8x64xf32>
    %cst_253 = arith.constant 0.000000e+00 : f32
    %520 = vector.broadcast %cst_253 : f32 to vector<8x64xf32>
    %521 = arith.maximumf %519, %520 : vector<8x64xf32>
    %c8_254 = arith.constant 8 : index
    %c0_255 = arith.constant 0 : index
    %522 = vector.load %arg8[%c8_254, %c0_255] : memref<48x64xf32, #tpu.memory_space<vmem>>, vector<8x64xf32>
    tpu.vector_store %arg8[%c8_254, %c0_255], %521 {strides = array<i32>} : memref<48x64xf32, #tpu.memory_space<vmem>>, vector<8x64xf32>,
    %c0_256 = arith.constant 0 : index
    %c1_257 = arith.constant 1 : index
    %523 = vector.load %arg2[%c0_256, %c1_257] : memref<16x2xi32, #tpu.memory_space<vmem>>, vector<8x1xi32>
    %c35 = arith.constant 35 : index
    %c0_258 = arith.constant 0 : index
    %524 = vector.load %arg5[%c35, %c0_258] : memref<48x128xf32, #tpu.memory_space<vmem>>, vector<1x64xf32>
    %525 = vector.broadcast %524 : vector<1x64xf32> to vector<8x64xf32>
    %526 = arith.mulf %521, %525 : vector<8x64xf32>
    %c5_259 = arith.constant 5 : index
    %c0_260 = arith.constant 0 : index
    %527 = vector.load %arg8[%c5_259, %c0_260] : memref<48x64xf32, #tpu.memory_space<vmem>>, vector<8x64xf32>
    %c-3_i32_261 = arith.constant -3 : i32
    %528 = vector.broadcast %c-3_i32_261 : i32 to vector<8x1xi32>
    %529 = arith.addi %523, %528 : vector<8x1xi32>
    %c0_i32_262 = arith.constant 0 : i32
    %530 = vector.broadcast %c0_i32_262 : i32 to vector<8x1xi32>
    %531 = arith.cmpi sge, %529, %530 : vector<8x1xi32>
    %c-3_i32_263 = arith.constant -3 : i32
    %532 = vector.broadcast %c-3_i32_263 : i32 to vector<8x1xi32>
    %533 = arith.addi %523, %532 : vector<8x1xi32>
    %c8_i32_264 = arith.constant 8 : i32
    %534 = vector.broadcast %c8_i32_264 : i32 to vector<8x1xi32>
    %535 = arith.cmpi slt, %533, %534 : vector<8x1xi32>
    %536 = arith.andi %531, %535 : vector<8x1xi1>
    %cst_265 = arith.constant 0.000000e+00 : f32
    %537 = vector.shape_cast %536 : vector<8x1xi1> to vector<8x1xi1>
    %538 = vector.broadcast %537 : vector<8x1xi1> to vector<8x64xi1>
    %539 = vector.broadcast %cst_265 : f32 to vector<8x64xf32>
    %540 = arith.select %538, %527, %539 : vector<8x64xi1>, vector<8x64xf32>
    %c32 = arith.constant 32 : index
    %c0_266 = arith.constant 0 : index
    %541 = vector.load %arg5[%c32, %c0_266] : memref<48x128xf32, #tpu.memory_space<vmem>>, vector<1x64xf32>
    %542 = vector.broadcast %541 : vector<1x64xf32> to vector<8x64xf32>
    %543 = arith.mulf %540, %542 : vector<8x64xf32>
    %544 = arith.addf %526, %543 : vector<8x64xf32>
    %c6_267 = arith.constant 6 : index
    %c0_268 = arith.constant 0 : index
    %545 = vector.load %arg8[%c6_267, %c0_268] : memref<48x64xf32, #tpu.memory_space<vmem>>, vector<8x64xf32>
    %c-2_i32_269 = arith.constant -2 : i32
    %546 = vector.broadcast %c-2_i32_269 : i32 to vector<8x1xi32>
    %547 = arith.addi %523, %546 : vector<8x1xi32>
    %c0_i32_270 = arith.constant 0 : i32
    %548 = vector.broadcast %c0_i32_270 : i32 to vector<8x1xi32>
    %549 = arith.cmpi sge, %547, %548 : vector<8x1xi32>
    %c-2_i32_271 = arith.constant -2 : i32
    %550 = vector.broadcast %c-2_i32_271 : i32 to vector<8x1xi32>
    %551 = arith.addi %523, %550 : vector<8x1xi32>
    %c8_i32_272 = arith.constant 8 : i32
    %552 = vector.broadcast %c8_i32_272 : i32 to vector<8x1xi32>
    %553 = arith.cmpi slt, %551, %552 : vector<8x1xi32>
    %554 = arith.andi %549, %553 : vector<8x1xi1>
    %cst_273 = arith.constant 0.000000e+00 : f32
    %555 = vector.shape_cast %554 : vector<8x1xi1> to vector<8x1xi1>
    %556 = vector.broadcast %555 : vector<8x1xi1> to vector<8x64xi1>
    %557 = vector.broadcast %cst_273 : f32 to vector<8x64xf32>
    %558 = arith.select %556, %545, %557 : vector<8x64xi1>, vector<8x64xf32>
    %c33 = arith.constant 33 : index
    %c0_274 = arith.constant 0 : index
    %559 = vector.load %arg5[%c33, %c0_274] : memref<48x128xf32, #tpu.memory_space<vmem>>, vector<1x64xf32>
    %560 = vector.broadcast %559 : vector<1x64xf32> to vector<8x64xf32>
    %561 = arith.mulf %558, %560 : vector<8x64xf32>
    %562 = arith.addf %544, %561 : vector<8x64xf32>
    %c7_275 = arith.constant 7 : index
    %c0_276 = arith.constant 0 : index
    %563 = vector.load %arg8[%c7_275, %c0_276] : memref<48x64xf32, #tpu.memory_space<vmem>>, vector<8x64xf32>
    %c-1_i32_277 = arith.constant -1 : i32
    %564 = vector.broadcast %c-1_i32_277 : i32 to vector<8x1xi32>
    %565 = arith.addi %523, %564 : vector<8x1xi32>
    %c0_i32_278 = arith.constant 0 : i32
    %566 = vector.broadcast %c0_i32_278 : i32 to vector<8x1xi32>
    %567 = arith.cmpi sge, %565, %566 : vector<8x1xi32>
    %c-1_i32_279 = arith.constant -1 : i32
    %568 = vector.broadcast %c-1_i32_279 : i32 to vector<8x1xi32>
    %569 = arith.addi %523, %568 : vector<8x1xi32>
    %c8_i32_280 = arith.constant 8 : i32
    %570 = vector.broadcast %c8_i32_280 : i32 to vector<8x1xi32>
    %571 = arith.cmpi slt, %569, %570 : vector<8x1xi32>
    %572 = arith.andi %567, %571 : vector<8x1xi1>
    %cst_281 = arith.constant 0.000000e+00 : f32
    %573 = vector.shape_cast %572 : vector<8x1xi1> to vector<8x1xi1>
    %574 = vector.broadcast %573 : vector<8x1xi1> to vector<8x64xi1>
    %575 = vector.broadcast %cst_281 : f32 to vector<8x64xf32>
    %576 = arith.select %574, %563, %575 : vector<8x64xi1>, vector<8x64xf32>
    %c34 = arith.constant 34 : index
    %c0_282 = arith.constant 0 : index
    %577 = vector.load %arg5[%c34, %c0_282] : memref<48x128xf32, #tpu.memory_space<vmem>>, vector<1x64xf32>
    %578 = vector.broadcast %577 : vector<1x64xf32> to vector<8x64xf32>
    %579 = arith.mulf %576, %578 : vector<8x64xf32>
    %580 = arith.addf %562, %579 : vector<8x64xf32>
    %c9_283 = arith.constant 9 : index
    %c0_284 = arith.constant 0 : index
    %581 = vector.load %arg8[%c9_283, %c0_284] : memref<48x64xf32, #tpu.memory_space<vmem>>, vector<8x64xf32>
    %c1_i32_285 = arith.constant 1 : i32
    %582 = vector.broadcast %c1_i32_285 : i32 to vector<8x1xi32>
    %583 = arith.addi %523, %582 : vector<8x1xi32>
    %c0_i32_286 = arith.constant 0 : i32
    %584 = vector.broadcast %c0_i32_286 : i32 to vector<8x1xi32>
    %585 = arith.cmpi sge, %583, %584 : vector<8x1xi32>
    %c1_i32_287 = arith.constant 1 : i32
    %586 = vector.broadcast %c1_i32_287 : i32 to vector<8x1xi32>
    %587 = arith.addi %523, %586 : vector<8x1xi32>
    %c8_i32_288 = arith.constant 8 : i32
    %588 = vector.broadcast %c8_i32_288 : i32 to vector<8x1xi32>
    %589 = arith.cmpi slt, %587, %588 : vector<8x1xi32>
    %590 = arith.andi %585, %589 : vector<8x1xi1>
    %cst_289 = arith.constant 0.000000e+00 : f32
    %591 = vector.shape_cast %590 : vector<8x1xi1> to vector<8x1xi1>
    %592 = vector.broadcast %591 : vector<8x1xi1> to vector<8x64xi1>
    %593 = vector.broadcast %cst_289 : f32 to vector<8x64xf32>
    %594 = arith.select %592, %581, %593 : vector<8x64xi1>, vector<8x64xf32>
    %c36 = arith.constant 36 : index
    %c0_290 = arith.constant 0 : index
    %595 = vector.load %arg5[%c36, %c0_290] : memref<48x128xf32, #tpu.memory_space<vmem>>, vector<1x64xf32>
    %596 = vector.broadcast %595 : vector<1x64xf32> to vector<8x64xf32>
    %597 = arith.mulf %594, %596 : vector<8x64xf32>
    %598 = arith.addf %580, %597 : vector<8x64xf32>
    %c10_291 = arith.constant 10 : index
    %c0_292 = arith.constant 0 : index
    %599 = vector.load %arg8[%c10_291, %c0_292] : memref<48x64xf32, #tpu.memory_space<vmem>>, vector<8x64xf32>
    %c2_i32_293 = arith.constant 2 : i32
    %600 = vector.broadcast %c2_i32_293 : i32 to vector<8x1xi32>
    %601 = arith.addi %523, %600 : vector<8x1xi32>
    %c0_i32_294 = arith.constant 0 : i32
    %602 = vector.broadcast %c0_i32_294 : i32 to vector<8x1xi32>
    %603 = arith.cmpi sge, %601, %602 : vector<8x1xi32>
    %c2_i32_295 = arith.constant 2 : i32
    %604 = vector.broadcast %c2_i32_295 : i32 to vector<8x1xi32>
    %605 = arith.addi %523, %604 : vector<8x1xi32>
    %c8_i32_296 = arith.constant 8 : i32
    %606 = vector.broadcast %c8_i32_296 : i32 to vector<8x1xi32>
    %607 = arith.cmpi slt, %605, %606 : vector<8x1xi32>
    %608 = arith.andi %603, %607 : vector<8x1xi1>
    %cst_297 = arith.constant 0.000000e+00 : f32
    %609 = vector.shape_cast %608 : vector<8x1xi1> to vector<8x1xi1>
    %610 = vector.broadcast %609 : vector<8x1xi1> to vector<8x64xi1>
    %611 = vector.broadcast %cst_297 : f32 to vector<8x64xf32>
    %612 = arith.select %610, %599, %611 : vector<8x64xi1>, vector<8x64xf32>
    %c37 = arith.constant 37 : index
    %c0_298 = arith.constant 0 : index
    %613 = vector.load %arg5[%c37, %c0_298] : memref<48x128xf32, #tpu.memory_space<vmem>>, vector<1x64xf32>
    %614 = vector.broadcast %613 : vector<1x64xf32> to vector<8x64xf32>
    %615 = arith.mulf %612, %614 : vector<8x64xf32>
    %616 = arith.addf %598, %615 : vector<8x64xf32>
    %c11_299 = arith.constant 11 : index
    %c0_300 = arith.constant 0 : index
    %617 = vector.load %arg8[%c11_299, %c0_300] : memref<48x64xf32, #tpu.memory_space<vmem>>, vector<8x64xf32>
    %c3_i32_301 = arith.constant 3 : i32
    %618 = vector.broadcast %c3_i32_301 : i32 to vector<8x1xi32>
    %619 = arith.addi %523, %618 : vector<8x1xi32>
    %c0_i32_302 = arith.constant 0 : i32
    %620 = vector.broadcast %c0_i32_302 : i32 to vector<8x1xi32>
    %621 = arith.cmpi sge, %619, %620 : vector<8x1xi32>
    %c3_i32_303 = arith.constant 3 : i32
    %622 = vector.broadcast %c3_i32_303 : i32 to vector<8x1xi32>
    %623 = arith.addi %523, %622 : vector<8x1xi32>
    %c8_i32_304 = arith.constant 8 : i32
    %624 = vector.broadcast %c8_i32_304 : i32 to vector<8x1xi32>
    %625 = arith.cmpi slt, %623, %624 : vector<8x1xi32>
    %626 = arith.andi %621, %625 : vector<8x1xi1>
    %cst_305 = arith.constant 0.000000e+00 : f32
    %627 = vector.shape_cast %626 : vector<8x1xi1> to vector<8x1xi1>
    %628 = vector.broadcast %627 : vector<8x1xi1> to vector<8x64xi1>
    %629 = vector.broadcast %cst_305 : f32 to vector<8x64xf32>
    %630 = arith.select %628, %617, %629 : vector<8x64xi1>, vector<8x64xf32>
    %c38 = arith.constant 38 : index
    %c0_306 = arith.constant 0 : index
    %631 = vector.load %arg5[%c38, %c0_306] : memref<48x128xf32, #tpu.memory_space<vmem>>, vector<1x64xf32>
    %632 = vector.broadcast %631 : vector<1x64xf32> to vector<8x64xf32>
    %633 = arith.mulf %630, %632 : vector<8x64xf32>
    %634 = arith.addf %616, %633 : vector<8x64xf32>
    %c5_307 = arith.constant 5 : index
    %c0_308 = arith.constant 0 : index
    %635 = vector.load %arg6[%c5_307, %c0_308] : memref<16x128xf32, #tpu.memory_space<vmem>>, vector<1x64xf32>
    %636 = vector.broadcast %635 : vector<1x64xf32> to vector<8x64xf32>
    %637 = arith.addf %634, %636 : vector<8x64xf32>
    %cst_309 = arith.constant 0.000000e+00 : f32
    %638 = vector.broadcast %cst_309 : f32 to vector<8x64xf32>
    %639 = arith.maximumf %637, %638 : vector<8x64xf32>
    %c240 = arith.constant 240 : index
    %c0_310 = arith.constant 0 : index
    %640 = vector.load %arg4[%c240, %c0_310] : memref<728x128xbf16, #tpu.memory_space<vmem>>, vector<64x64xbf16>
    %641 = arith.truncf %639 : vector<8x64xf32> to vector<8x64xbf16>
    %cst_311 = arith.constant dense<0.000000e+00> : vector<8x64xf32>
    %642 = tpu.matmul %641, %640, %cst_311 {dimension_numbers = #tpu.dot_dimension_numbers<[1], [0], [0], [1], [0, 0, 1, 1], [], []>} : vector<8x64xbf16>, vector<64x64xbf16>, vector<8x64xf32> -> vector<8x64xf32>
    %c11_312 = arith.constant 11 : index
    %c0_313 = arith.constant 0 : index
    %643 = vector.load %arg6[%c11_312, %c0_313] : memref<16x128xf32, #tpu.memory_space<vmem>>, vector<1x64xf32>
    %644 = vector.broadcast %643 : vector<1x64xf32> to vector<8x64xf32>
    %645 = arith.addf %642, %644 : vector<8x64xf32>
    %cst_314 = arith.constant 0.000000e+00 : f32
    %646 = vector.broadcast %cst_314 : f32 to vector<8x64xf32>
    %647 = arith.maximumf %645, %646 : vector<8x64xf32>
    %c8_315 = arith.constant 8 : index
    %c0_316 = arith.constant 0 : index
    %648 = vector.load %arg8[%c8_315, %c0_316] : memref<48x64xf32, #tpu.memory_space<vmem>>, vector<8x64xf32>
    tpu.vector_store %arg8[%c8_315, %c0_316], %647 {strides = array<i32>} : memref<48x64xf32, #tpu.memory_space<vmem>>, vector<8x64xf32>,
    %c0_317 = arith.constant 0 : index
    %c1_318 = arith.constant 1 : index
    %649 = vector.load %arg2[%c0_317, %c1_318] : memref<16x2xi32, #tpu.memory_space<vmem>>, vector<8x1xi32>
    %c43 = arith.constant 43 : index
    %c0_319 = arith.constant 0 : index
    %650 = vector.load %arg5[%c43, %c0_319] : memref<48x128xf32, #tpu.memory_space<vmem>>, vector<1x64xf32>
    %651 = vector.broadcast %650 : vector<1x64xf32> to vector<8x64xf32>
    %652 = arith.mulf %647, %651 : vector<8x64xf32>
    %c5_320 = arith.constant 5 : index
    %c0_321 = arith.constant 0 : index
    %653 = vector.load %arg8[%c5_320, %c0_321] : memref<48x64xf32, #tpu.memory_space<vmem>>, vector<8x64xf32>
    %c-3_i32_322 = arith.constant -3 : i32
    %654 = vector.broadcast %c-3_i32_322 : i32 to vector<8x1xi32>
    %655 = arith.addi %649, %654 : vector<8x1xi32>
    %c0_i32_323 = arith.constant 0 : i32
    %656 = vector.broadcast %c0_i32_323 : i32 to vector<8x1xi32>
    %657 = arith.cmpi sge, %655, %656 : vector<8x1xi32>
    %c-3_i32_324 = arith.constant -3 : i32
    %658 = vector.broadcast %c-3_i32_324 : i32 to vector<8x1xi32>
    %659 = arith.addi %649, %658 : vector<8x1xi32>
    %c8_i32_325 = arith.constant 8 : i32
    %660 = vector.broadcast %c8_i32_325 : i32 to vector<8x1xi32>
    %661 = arith.cmpi slt, %659, %660 : vector<8x1xi32>
    %662 = arith.andi %657, %661 : vector<8x1xi1>
    %cst_326 = arith.constant 0.000000e+00 : f32
    %663 = vector.shape_cast %662 : vector<8x1xi1> to vector<8x1xi1>
    %664 = vector.broadcast %663 : vector<8x1xi1> to vector<8x64xi1>
    %665 = vector.broadcast %cst_326 : f32 to vector<8x64xf32>
    %666 = arith.select %664, %653, %665 : vector<8x64xi1>, vector<8x64xf32>
    %c40 = arith.constant 40 : index
    %c0_327 = arith.constant 0 : index
    %667 = vector.load %arg5[%c40, %c0_327] : memref<48x128xf32, #tpu.memory_space<vmem>>, vector<1x64xf32>
    %668 = vector.broadcast %667 : vector<1x64xf32> to vector<8x64xf32>
    %669 = arith.mulf %666, %668 : vector<8x64xf32>
    %670 = arith.addf %652, %669 : vector<8x64xf32>
    %c6_328 = arith.constant 6 : index
    %c0_329 = arith.constant 0 : index
    %671 = vector.load %arg8[%c6_328, %c0_329] : memref<48x64xf32, #tpu.memory_space<vmem>>, vector<8x64xf32>
    %c-2_i32_330 = arith.constant -2 : i32
    %672 = vector.broadcast %c-2_i32_330 : i32 to vector<8x1xi32>
    %673 = arith.addi %649, %672 : vector<8x1xi32>
    %c0_i32_331 = arith.constant 0 : i32
    %674 = vector.broadcast %c0_i32_331 : i32 to vector<8x1xi32>
    %675 = arith.cmpi sge, %673, %674 : vector<8x1xi32>
    %c-2_i32_332 = arith.constant -2 : i32
    %676 = vector.broadcast %c-2_i32_332 : i32 to vector<8x1xi32>
    %677 = arith.addi %649, %676 : vector<8x1xi32>
    %c8_i32_333 = arith.constant 8 : i32
    %678 = vector.broadcast %c8_i32_333 : i32 to vector<8x1xi32>
    %679 = arith.cmpi slt, %677, %678 : vector<8x1xi32>
    %680 = arith.andi %675, %679 : vector<8x1xi1>
    %cst_334 = arith.constant 0.000000e+00 : f32
    %681 = vector.shape_cast %680 : vector<8x1xi1> to vector<8x1xi1>
    %682 = vector.broadcast %681 : vector<8x1xi1> to vector<8x64xi1>
    %683 = vector.broadcast %cst_334 : f32 to vector<8x64xf32>
    %684 = arith.select %682, %671, %683 : vector<8x64xi1>, vector<8x64xf32>
    %c41 = arith.constant 41 : index
    %c0_335 = arith.constant 0 : index
    %685 = vector.load %arg5[%c41, %c0_335] : memref<48x128xf32, #tpu.memory_space<vmem>>, vector<1x64xf32>
    %686 = vector.broadcast %685 : vector<1x64xf32> to vector<8x64xf32>
    %687 = arith.mulf %684, %686 : vector<8x64xf32>
    %688 = arith.addf %670, %687 : vector<8x64xf32>
    %c7_336 = arith.constant 7 : index
    %c0_337 = arith.constant 0 : index
    %689 = vector.load %arg8[%c7_336, %c0_337] : memref<48x64xf32, #tpu.memory_space<vmem>>, vector<8x64xf32>
    %c-1_i32_338 = arith.constant -1 : i32
    %690 = vector.broadcast %c-1_i32_338 : i32 to vector<8x1xi32>
    %691 = arith.addi %649, %690 : vector<8x1xi32>
    %c0_i32_339 = arith.constant 0 : i32
    %692 = vector.broadcast %c0_i32_339 : i32 to vector<8x1xi32>
    %693 = arith.cmpi sge, %691, %692 : vector<8x1xi32>
    %c-1_i32_340 = arith.constant -1 : i32
    %694 = vector.broadcast %c-1_i32_340 : i32 to vector<8x1xi32>
    %695 = arith.addi %649, %694 : vector<8x1xi32>
    %c8_i32_341 = arith.constant 8 : i32
    %696 = vector.broadcast %c8_i32_341 : i32 to vector<8x1xi32>
    %697 = arith.cmpi slt, %695, %696 : vector<8x1xi32>
    %698 = arith.andi %693, %697 : vector<8x1xi1>
    %cst_342 = arith.constant 0.000000e+00 : f32
    %699 = vector.shape_cast %698 : vector<8x1xi1> to vector<8x1xi1>
    %700 = vector.broadcast %699 : vector<8x1xi1> to vector<8x64xi1>
    %701 = vector.broadcast %cst_342 : f32 to vector<8x64xf32>
    %702 = arith.select %700, %689, %701 : vector<8x64xi1>, vector<8x64xf32>
    %c42 = arith.constant 42 : index
    %c0_343 = arith.constant 0 : index
    %703 = vector.load %arg5[%c42, %c0_343] : memref<48x128xf32, #tpu.memory_space<vmem>>, vector<1x64xf32>
    %704 = vector.broadcast %703 : vector<1x64xf32> to vector<8x64xf32>
    %705 = arith.mulf %702, %704 : vector<8x64xf32>
    %706 = arith.addf %688, %705 : vector<8x64xf32>
    %c9_344 = arith.constant 9 : index
    %c0_345 = arith.constant 0 : index
    %707 = vector.load %arg8[%c9_344, %c0_345] : memref<48x64xf32, #tpu.memory_space<vmem>>, vector<8x64xf32>
    %c1_i32_346 = arith.constant 1 : i32
    %708 = vector.broadcast %c1_i32_346 : i32 to vector<8x1xi32>
    %709 = arith.addi %649, %708 : vector<8x1xi32>
    %c0_i32_347 = arith.constant 0 : i32
    %710 = vector.broadcast %c0_i32_347 : i32 to vector<8x1xi32>
    %711 = arith.cmpi sge, %709, %710 : vector<8x1xi32>
    %c1_i32_348 = arith.constant 1 : i32
    %712 = vector.broadcast %c1_i32_348 : i32 to vector<8x1xi32>
    %713 = arith.addi %649, %712 : vector<8x1xi32>
    %c8_i32_349 = arith.constant 8 : i32
    %714 = vector.broadcast %c8_i32_349 : i32 to vector<8x1xi32>
    %715 = arith.cmpi slt, %713, %714 : vector<8x1xi32>
    %716 = arith.andi %711, %715 : vector<8x1xi1>
    %cst_350 = arith.constant 0.000000e+00 : f32
    %717 = vector.shape_cast %716 : vector<8x1xi1> to vector<8x1xi1>
    %718 = vector.broadcast %717 : vector<8x1xi1> to vector<8x64xi1>
    %719 = vector.broadcast %cst_350 : f32 to vector<8x64xf32>
    %720 = arith.select %718, %707, %719 : vector<8x64xi1>, vector<8x64xf32>
    %c44 = arith.constant 44 : index
    %c0_351 = arith.constant 0 : index
    %721 = vector.load %arg5[%c44, %c0_351] : memref<48x128xf32, #tpu.memory_space<vmem>>, vector<1x64xf32>
    %722 = vector.broadcast %721 : vector<1x64xf32> to vector<8x64xf32>
    %723 = arith.mulf %720, %722 : vector<8x64xf32>
    %724 = arith.addf %706, %723 : vector<8x64xf32>
    %c10_352 = arith.constant 10 : index
    %c0_353 = arith.constant 0 : index
    %725 = vector.load %arg8[%c10_352, %c0_353] : memref<48x64xf32, #tpu.memory_space<vmem>>, vector<8x64xf32>
    %c2_i32_354 = arith.constant 2 : i32
    %726 = vector.broadcast %c2_i32_354 : i32 to vector<8x1xi32>
    %727 = arith.addi %649, %726 : vector<8x1xi32>
    %c0_i32_355 = arith.constant 0 : i32
    %728 = vector.broadcast %c0_i32_355 : i32 to vector<8x1xi32>
    %729 = arith.cmpi sge, %727, %728 : vector<8x1xi32>
    %c2_i32_356 = arith.constant 2 : i32
    %730 = vector.broadcast %c2_i32_356 : i32 to vector<8x1xi32>
    %731 = arith.addi %649, %730 : vector<8x1xi32>
    %c8_i32_357 = arith.constant 8 : i32
    %732 = vector.broadcast %c8_i32_357 : i32 to vector<8x1xi32>
    %733 = arith.cmpi slt, %731, %732 : vector<8x1xi32>
    %734 = arith.andi %729, %733 : vector<8x1xi1>
    %cst_358 = arith.constant 0.000000e+00 : f32
    %735 = vector.shape_cast %734 : vector<8x1xi1> to vector<8x1xi1>
    %736 = vector.broadcast %735 : vector<8x1xi1> to vector<8x64xi1>
    %737 = vector.broadcast %cst_358 : f32 to vector<8x64xf32>
    %738 = arith.select %736, %725, %737 : vector<8x64xi1>, vector<8x64xf32>
    %c45 = arith.constant 45 : index
    %c0_359 = arith.constant 0 : index
    %739 = vector.load %arg5[%c45, %c0_359] : memref<48x128xf32, #tpu.memory_space<vmem>>, vector<1x64xf32>
    %740 = vector.broadcast %739 : vector<1x64xf32> to vector<8x64xf32>
    %741 = arith.mulf %738, %740 : vector<8x64xf32>
    %742 = arith.addf %724, %741 : vector<8x64xf32>
    %c11_360 = arith.constant 11 : index
    %c0_361 = arith.constant 0 : index
    %743 = vector.load %arg8[%c11_360, %c0_361] : memref<48x64xf32, #tpu.memory_space<vmem>>, vector<8x64xf32>
    %c3_i32_362 = arith.constant 3 : i32
    %744 = vector.broadcast %c3_i32_362 : i32 to vector<8x1xi32>
    %745 = arith.addi %649, %744 : vector<8x1xi32>
    %c0_i32_363 = arith.constant 0 : i32
    %746 = vector.broadcast %c0_i32_363 : i32 to vector<8x1xi32>
    %747 = arith.cmpi sge, %745, %746 : vector<8x1xi32>
    %c3_i32_364 = arith.constant 3 : i32
    %748 = vector.broadcast %c3_i32_364 : i32 to vector<8x1xi32>
    %749 = arith.addi %649, %748 : vector<8x1xi32>
    %c8_i32_365 = arith.constant 8 : i32
    %750 = vector.broadcast %c8_i32_365 : i32 to vector<8x1xi32>
    %751 = arith.cmpi slt, %749, %750 : vector<8x1xi32>
    %752 = arith.andi %747, %751 : vector<8x1xi1>
    %cst_366 = arith.constant 0.000000e+00 : f32
    %753 = vector.shape_cast %752 : vector<8x1xi1> to vector<8x1xi1>
    %754 = vector.broadcast %753 : vector<8x1xi1> to vector<8x64xi1>
    %755 = vector.broadcast %cst_366 : f32 to vector<8x64xf32>
    %756 = arith.select %754, %743, %755 : vector<8x64xi1>, vector<8x64xf32>
    %c46 = arith.constant 46 : index
    %c0_367 = arith.constant 0 : index
    %757 = vector.load %arg5[%c46, %c0_367] : memref<48x128xf32, #tpu.memory_space<vmem>>, vector<1x64xf32>
    %758 = vector.broadcast %757 : vector<1x64xf32> to vector<8x64xf32>
    %759 = arith.mulf %756, %758 : vector<8x64xf32>
    %760 = arith.addf %742, %759 : vector<8x64xf32>
    %c6_368 = arith.constant 6 : index
    %c0_369 = arith.constant 0 : index
    %761 = vector.load %arg6[%c6_368, %c0_369] : memref<16x128xf32, #tpu.memory_space<vmem>>, vector<1x64xf32>
    %762 = vector.broadcast %761 : vector<1x64xf32> to vector<8x64xf32>
    %763 = arith.addf %760, %762 : vector<8x64xf32>
    %cst_370 = arith.constant 0.000000e+00 : f32
    %764 = vector.broadcast %cst_370 : f32 to vector<8x64xf32>
    %765 = arith.maximumf %763, %764 : vector<8x64xf32>
    %c304 = arith.constant 304 : index
    %c0_371 = arith.constant 0 : index
    %766 = vector.load %arg4[%c304, %c0_371] : memref<728x128xbf16, #tpu.memory_space<vmem>>, vector<64x64xbf16>
    %767 = arith.truncf %765 : vector<8x64xf32> to vector<8x64xbf16>
    %cst_372 = arith.constant dense<0.000000e+00> : vector<8x64xf32>
    %768 = tpu.matmul %767, %766, %cst_372 {dimension_numbers = #tpu.dot_dimension_numbers<[1], [0], [0], [1], [0, 0, 1, 1], [], []>} : vector<8x64xbf16>, vector<64x64xbf16>, vector<8x64xf32> -> vector<8x64xf32>
    %c12_373 = arith.constant 12 : index
    %c0_374 = arith.constant 0 : index
    %769 = vector.load %arg6[%c12_373, %c0_374] : memref<16x128xf32, #tpu.memory_space<vmem>>, vector<1x64xf32>
    %770 = vector.broadcast %769 : vector<1x64xf32> to vector<8x64xf32>
    %771 = arith.addf %768, %770 : vector<8x64xf32>
    %cst_375 = arith.constant 0.000000e+00 : f32
    %772 = vector.broadcast %cst_375 : f32 to vector<8x64xf32>
    %773 = arith.maximumf %771, %772 : vector<8x64xf32>
    %c0_376 = arith.constant 0 : index
    %c0_377 = arith.constant 0 : index
    %774 = vector.load %arg8[%c0_376, %c0_377] : memref<48x64xf32, #tpu.memory_space<vmem>>, vector<8x64xf32>
    tpu.vector_store %arg8[%c0_376, %c0_377], %773 {strides = array<i32>} : memref<48x64xf32, #tpu.memory_space<vmem>>, vector<8x64xf32>,
    %c0_378 = arith.constant 0 : index
    %c0_379 = arith.constant 0 : index
    %775 = tpu.strided_load %arg8[%c0_378, %c0_379] {strides = array<i32: 2, 1>} : memref<48x64xf32, #tpu.memory_space<vmem>>, vector<4x64xf32>
    %c1_380 = arith.constant 1 : index
    %c0_381 = arith.constant 0 : index
    %776 = tpu.strided_load %arg8[%c1_380, %c0_381] {strides = array<i32: 2, 1>} : memref<48x64xf32, #tpu.memory_space<vmem>>, vector<4x64xf32>
    %777 = arith.maximumf %775, %776 : vector<4x64xf32>
    %c8_382 = arith.constant 8 : index
    %c0_383 = arith.constant 0 : index
    %778 = vector.load %arg8[%c8_382, %c0_383] : memref<48x64xf32, #tpu.memory_space<vmem>>, vector<4x64xf32>
    tpu.vector_store %arg8[%c8_382, %c0_383], %777 {strides = array<i32>} : memref<48x64xf32, #tpu.memory_space<vmem>>, vector<4x64xf32>,
    %c368 = arith.constant 368 : index
    %c0_384 = arith.constant 0 : index
    %779 = vector.load %arg4[%c368, %c0_384] : memref<728x128xbf16, #tpu.memory_space<vmem>>, vector<192x64xbf16>
    %780 = vector.extract_strided_slice %779 {offsets = [0, 0], sizes = [64, 64], strides = [1, 1]} : vector<192x64xbf16> to vector<64x64xbf16>
    %781 = arith.truncf %777 : vector<4x64xf32> to vector<4x64xbf16>
    %cst_385 = arith.constant dense<0.000000e+00> : vector<4x64xf32>
    %782 = tpu.matmul %781, %780, %cst_385 {dimension_numbers = #tpu.dot_dimension_numbers<[1], [0], [0], [1], [0, 0, 1, 1], [], []>} : vector<4x64xbf16>, vector<64x64xbf16>, vector<4x64xf32> -> vector<4x64xf32>
    %c9_386 = arith.constant 9 : index
    %c0_387 = arith.constant 0 : index
    %783 = vector.load %arg8[%c9_386, %c0_387] : memref<48x64xf32, #tpu.memory_space<vmem>>, vector<4x64xf32>
    %784 = vector.extract_strided_slice %779 {offsets = [64, 0], sizes = [64, 64], strides = [1, 1]} : vector<192x64xbf16> to vector<64x64xbf16>
    %785 = arith.truncf %783 : vector<4x64xf32> to vector<4x64xbf16>
    %cst_388 = arith.constant dense<0.000000e+00> : vector<4x64xf32>
    %786 = tpu.matmul %785, %784, %cst_388 {dimension_numbers = #tpu.dot_dimension_numbers<[1], [0], [0], [1], [0, 0, 1, 1], [], []>} : vector<4x64xbf16>, vector<64x64xbf16>, vector<4x64xf32> -> vector<4x64xf32>
    %787 = arith.addf %782, %786 : vector<4x64xf32>
    %c10_389 = arith.constant 10 : index
    %c0_390 = arith.constant 0 : index
    %788 = vector.load %arg8[%c10_389, %c0_390] : memref<48x64xf32, #tpu.memory_space<vmem>>, vector<4x64xf32>
    %789 = vector.extract_strided_slice %779 {offsets = [128, 0], sizes = [64, 64], strides = [1, 1]} : vector<192x64xbf16> to vector<64x64xbf16>
    %790 = arith.truncf %788 : vector<4x64xf32> to vector<4x64xbf16>
    %cst_391 = arith.constant dense<0.000000e+00> : vector<4x64xf32>
    %791 = tpu.matmul %790, %789, %cst_391 {dimension_numbers = #tpu.dot_dimension_numbers<[1], [0], [0], [1], [0, 0, 1, 1], [], []>} : vector<4x64xbf16>, vector<64x64xbf16>, vector<4x64xf32> -> vector<4x64xf32>
    %792 = arith.addf %787, %791 : vector<4x64xf32>
    %c13_392 = arith.constant 13 : index
    %c0_393 = arith.constant 0 : index
    %793 = vector.load %arg6[%c13_392, %c0_393] : memref<16x128xf32, #tpu.memory_space<vmem>>, vector<1x64xf32>
    %794 = vector.broadcast %793 : vector<1x64xf32> to vector<4x64xf32>
    %795 = arith.addf %792, %794 : vector<4x64xf32>
    %cst_394 = arith.constant 0.000000e+00 : f32
    %796 = vector.broadcast %cst_394 : f32 to vector<4x64xf32>
    %797 = arith.maximumf %795, %796 : vector<4x64xf32>
    %c0_395 = arith.constant 0 : index
    %c0_396 = arith.constant 0 : index
    %798 = vector.load %arg3[%c0_395, %c0_396] : memref<1x4xf32, #tpu.memory_space<vmem>>, vector<1x4xf32>
    %799 = arith.truncf %798 : vector<1x4xf32> to vector<1x4xbf16>
    %800 = arith.truncf %797 : vector<4x64xf32> to vector<4x64xbf16>
    %cst_397 = arith.constant dense<0.000000e+00> : vector<1x64xf32>
    %801 = tpu.matmul %799, %800, %cst_397 {dimension_numbers = #tpu.dot_dimension_numbers<[1], [0], [0], [1], [0, 0, 1, 1], [], []>} : vector<1x4xbf16>, vector<4x64xbf16>, vector<1x64xf32> -> vector<1x64xf32>
    %cst_398 = arith.constant 5.000000e-01 : f32
    %802 = vector.broadcast %cst_398 : f32 to vector<1x64xf32>
    %803 = arith.mulf %801, %802 : vector<1x64xf32>
    %c560 = arith.constant 560 : index
    %c0_399 = arith.constant 0 : index
    %804 = vector.load %arg4[%c560, %c0_399] : memref<728x128xbf16, #tpu.memory_space<vmem>>, vector<64x100xbf16>
    %805 = arith.truncf %803 : vector<1x64xf32> to vector<1x64xbf16>
    %cst_400 = arith.constant dense<0.000000e+00> : vector<1x100xf32>
    %806 = tpu.matmul %805, %804, %cst_400 {dimension_numbers = #tpu.dot_dimension_numbers<[1], [0], [0], [1], [0, 0, 1, 1], [], []>} : vector<1x64xbf16>, vector<64x100xbf16>, vector<1x100xf32> -> vector<1x100xf32>
    %c14_401 = arith.constant 14 : index
    %c0_402 = arith.constant 0 : index
    %807 = vector.load %arg6[%c14_401, %c0_402] : memref<16x128xf32, #tpu.memory_space<vmem>>, vector<1x100xf32>
    %808 = arith.addf %806, %807 : vector<1x100xf32>
    %cst_403 = arith.constant 0.000000e+00 : f32
    %809 = vector.broadcast %cst_403 : f32 to vector<1x100xf32>
    %810 = arith.maximumf %808, %809 : vector<1x100xf32>
    %c624 = arith.constant 624 : index
    %c0_404 = arith.constant 0 : index
    %811 = vector.load %arg4[%c624, %c0_404] : memref<728x128xbf16, #tpu.memory_space<vmem>>, vector<100x128xbf16>
    %812 = arith.truncf %810 : vector<1x100xf32> to vector<1x100xbf16>
    %cst_405 = arith.constant dense<0.000000e+00> : vector<1x128xf32>
    %813 = tpu.matmul %812, %811, %cst_405 {dimension_numbers = #tpu.dot_dimension_numbers<[1], [0], [0], [1], [0, 0, 1, 1], [], []>} : vector<1x100xbf16>, vector<100x128xbf16>, vector<1x128xf32> -> vector<1x128xf32>
    %c15 = arith.constant 15 : index
    %c0_406 = arith.constant 0 : index
    %814 = vector.load %arg6[%c15, %c0_406] : memref<16x128xf32, #tpu.memory_space<vmem>>, vector<1x128xf32>
    %815 = arith.addf %813, %814 : vector<1x128xf32>
    %c0_407 = arith.constant 0 : index
    %c0_408 = arith.constant 0 : index
    %c0_409 = arith.constant 0 : index
    %816 = vector.load %arg7[%c0_407, %c0_408, %c0_409] : memref<1x1x128xf32, #tpu.memory_space<vmem>>, vector<1x1x128xf32>
    %817 = vector.shape_cast %816 : vector<1x1x128xf32> to vector<1x128xf32>
    %818 = vector.shape_cast %815 : vector<1x128xf32> to vector<1x1x128xf32>
    tpu.vector_store %arg7[%c0_407, %c0_408, %c0_409], %818 {strides = array<i32>} : memref<1x1x128xf32, #tpu.memory_space<vmem>>, vector<1x1x128xf32>,
    return
  }
  func.func @transform_0(%arg0: i32) -> (i32, i32, i32) {
    %c0_i32 = arith.constant 0 : i32
    %c0_i32_0 = arith.constant 0 : i32
    %c0_i32_1 = arith.constant 0 : i32
    return %arg0, %c0_i32, %c0_i32_0 : i32, i32, i32
  }
  func.func @transform_1(%arg0: i32) -> (i32, i32) {
    %c0_i32 = arith.constant 0 : i32
    %c0_i32_0 = arith.constant 0 : i32
    %c0_i32_1 = arith.constant 0 : i32
    return %c0_i32, %c0_i32_0 : i32, i32
  }
  func.func @transform_2(%arg0: i32) -> (i32, i32) {
    %c0_i32 = arith.constant 0 : i32
    %c0_i32_0 = arith.constant 0 : i32
    %c0_i32_1 = arith.constant 0 : i32
    return %c0_i32, %c0_i32_0 : i32, i32
  }
  func.func @transform_3(%arg0: i32) -> (i32, i32) {
    %c0_i32 = arith.constant 0 : i32
    %c0_i32_0 = arith.constant 0 : i32
    %c0_i32_1 = arith.constant 0 : i32
    return %c0_i32, %c0_i32_0 : i32, i32
  }
  func.func @transform_4(%arg0: i32) -> (i32, i32) {
    %c0_i32 = arith.constant 0 : i32
    %c0_i32_0 = arith.constant 0 : i32
    %c0_i32_1 = arith.constant 0 : i32
    return %c0_i32, %c0_i32_0 : i32, i32
  }
  func.func @transform_5(%arg0: i32) -> (i32, i32) {
    %c0_i32 = arith.constant 0 : i32
    %c0_i32_0 = arith.constant 0 : i32
    %c0_i32_1 = arith.constant 0 : i32
    return %c0_i32, %c0_i32_0 : i32, i32
  }
  func.func @transform_6(%arg0: i32) -> (i32, i32, i32) {
    %c0_i32 = arith.constant 0 : i32
    %c0_i32_0 = arith.constant 0 : i32
    %c0_i32_1 = arith.constant 0 : i32
    return %arg0, %c0_i32, %c0_i32_0 : i32, i32, i32
  }
}

</mosaic_0001>

<llo_original>
// kernel: _lambda_.1
$region0: #{_lambda_.1}
  #allocation0 [shape = 'u32[]', space=smem, size = 0x4, offset = 0x4, fixed_abs, tag = 'smem constant byte address 0x4 - core index']
  #allocation1 [shape = 'u32[144,128]{1,0:T(1,128)}', space=vmem, size = 0x12000, scoped, tag = 'internal scratch']
  #allocation2 [shape = 'f32[48,64]{1,0:T(8,128)}', space=vmem, size = 0x6000, scoped, tag = 'scratch operand']
  %s0 = inlined_call_operand.vmem [shape: f32[2,32,64], index: 0, kind: input, shape index: {}]
  %s1 = inlined_call_operand.vmem [shape: s32[16,2], index: 1, kind: input, shape index: {}]
  %s2 = inlined_call_operand.vmem [shape: f32[1,4], index: 2, kind: input, shape index: {}]
  %s3 = inlined_call_operand.vmem [shape: bf16[728,128], index: 3, kind: input, shape index: {}]
  %s4 = inlined_call_operand.vmem [shape: f32[48,128], index: 4, kind: input, shape index: {}]
  %s5 = inlined_call_operand.vmem [shape: f32[16,128], index: 5, kind: input, shape index: {}]
  %s6 = inlined_call_operand.hbm [shape: f32[2,1,128], index: 6, kind: output, shape index: {}]
  %s7 = sld [smem:[#allocation0]]
  $region57: #{_lambda_.1} parent=0
    _
  %s9 = ssub.s32 1, %s7
  %s10 = scalar_select 0, %s9, %s7
  $region1: #{_lambda_.1} parent=0
    #allocation3 [shape = 'u8[1024]{0}', space=vmem, size = 0x400, scoped, tag = 'output window, operand 0']
    #allocation4 [shape = 's32[2]{0}', space=sflag, size = 0x8, scoped, tag = 'scoped memory for _lambda_.1']
    %11 = vsyncpa [#allocation4], 0
    %s12 = scalar_lea.sflag [#allocation4], 1
    %13 = vsyncpa %s12, 0
    loop: start=0, step=1, limit=4
    $region2: #{_lambda_.1} parent=1 // loop_pre_header
      _
    $region3: #{_lambda_.1} parent=1 // loop_header
      %s15 = sphi 0, %s19
      %p16 = scmp.ge.s32.totalorder %s15, 4
      %s25 = sphi 0, %s27
      %s28 = sphi 0, %s25
      %s29 = sphi 0, %s28
      %s45 = sphi 0, %s29
      %s49 = sphi 0, %s49
      %s51 = sphi 0, %s49
      %s52 = sphi 0, %s51
      %s66 = sphi 0, %s52
      %s70 = sphi 0, %s70
      %s72 = sphi 0, %s70
      %s73 = sphi 0, %s72
      %s87 = sphi 0, %s73
      %s91 = sphi 0, %s91
      %s93 = sphi 0, %s91
      %s94 = sphi 0, %s93
      %s108 = sphi 0, %s94
      %s112 = sphi 0, %s112
      %s114 = sphi 0, %s112
      %s115 = sphi 0, %s114
      %s129 = sphi 0, %s115
      %s133 = sphi 0, %s133
      %s135 = sphi 0, %s133
      %s136 = sphi 0, %s135
      %s150 = sphi 0, %s136
      %s156 = sphi 0, %s158
      %s159 = sphi 0, %s156
      %s160 = sphi 0, %s159
      %s176 = sphi 0, %s160
    $region4: #{_lambda_.1} parent=1 // loop_header_branch
      %18 = sbr.rel (%p16) target = $region8
    $region5: #{_lambda_.1} parent=1 // loop_body
      %s20 = ssub.s32 %s15, 1
      %s21 = ssub.s32 %s15, 2
      %s22 = sadd.s32 %s15, 1
      %s23 = ssub.s32 %s15, %s22
      %p24 = scmp.eq.s32.totalorder %s23, 0
      %s26 = sadd.s32 %s25, 1
      %s27 = scalar_select %p24, %s25, %s26
      %p30 = pneg %p24
      %p31 = scmp.eq.s32.totalorder %s15, 1
      %p32 = por %p30, %p31
      %p33 = scmp.ne.s32.totalorder %s25, %s28
      %p34 = scmp.eq.s32.totalorder %s15, 0
      %p35 = por %p33, %p34
      %p36 = scmp.ne.s32.totalorder %s25, %s28
      %p37 = scmp.eq.s32.totalorder %s20, 1
      %p38 = por %p36, %p37
      %p39 = scmp.ne.s32.totalorder %s28, %s29
      %p40 = scmp.eq.s32.totalorder %s20, 0
      %p41 = por %p39, %p40
      %p42 = scmp.ne.s32.totalorder %s28, %s29
      %p43 = scmp.eq.s32.totalorder %s21, 1
      %p44 = por %p42, %p43
      %p46 = scmp.ne.s32.totalorder %s29, %s45
      %p47 = scmp.eq.s32.totalorder %s21, 0
      %p48 = por %p46, %p47
      %s50 = sadd.s32 %s49, 1
      %p53 = scmp.eq.s32.totalorder %s15, 1
      %p54 = scmp.ne.s32.totalorder %s49, %s51
      %p55 = scmp.eq.s32.totalorder %s15, 0
      %p56 = por %p54, %p55
      %p57 = scmp.ne.s32.totalorder %s49, %s51
      %p58 = scmp.eq.s32.totalorder %s20, 1
      %p59 = por %p57, %p58
      %p60 = scmp.ne.s32.totalorder %s51, %s52
      %p61 = scmp.eq.s32.totalorder %s20, 0
      %p62 = por %p60, %p61
      %p63 = scmp.ne.s32.totalorder %s51, %s52
      %p64 = scmp.eq.s32.totalorder %s21, 1
      %p65 = por %p63, %p64
      %p67 = scmp.ne.s32.totalorder %s52, %s66
      %p68 = scmp.eq.s32.totalorder %s21, 0
      %p69 = por %p67, %p68
      %s71 = sadd.s32 %s70, 1
      %p74 = scmp.eq.s32.totalorder %s15, 1
      %p75 = scmp.ne.s32.totalorder %s70, %s72
      %p76 = scmp.eq.s32.totalorder %s15, 0
      %p77 = por %p75, %p76
      %p78 = scmp.ne.s32.totalorder %s70, %s72
      %p79 = scmp.eq.s32.totalorder %s20, 1
      %p80 = por %p78, %p79
      %p81 = scmp.ne.s32.totalorder %s72, %s73
      %p82 = scmp.eq.s32.totalorder %s20, 0
      %p83 = por %p81, %p82
      %p84 = scmp.ne.s32.totalorder %s72, %s73
      %p85 = scmp.eq.s32.totalorder %s21, 1
      %p86 = por %p84, %p85
      %p88 = scmp.ne.s32.totalorder %s73, %s87
      %p89 = scmp.eq.s32.totalorder %s21, 0
      %p90 = por %p88, %p89
      %s92 = sadd.s32 %s91, 1
      %p95 = scmp.eq.s32.totalorder %s15, 1
      %p96 = scmp.ne.s32.totalorder %s91, %s93
      %p97 = scmp.eq.s32.totalorder %s15, 0
      %p98 = por %p96, %p97
      %p99 = scmp.ne.s32.totalorder %s91, %s93
      %p100 = scmp.eq.s32.totalorder %s20, 1
      %p101 = por %p99, %p100
      %p102 = scmp.ne.s32.totalorder %s93, %s94
      %p103 = scmp.eq.s32.totalorder %s20, 0
      %p104 = por %p102, %p103
      %p105 = scmp.ne.s32.totalorder %s93, %s94
      %p106 = scmp.eq.s32.totalorder %s21, 1
      %p107 = por %p105, %p106
      %p109 = scmp.ne.s32.totalorder %s94, %s108
      %p110 = scmp.eq.s32.totalorder %s21, 0
      %p111 = por %p109, %p110
      %s113 = sadd.s32 %s112, 1
      %p116 = scmp.eq.s32.totalorder %s15, 1
      %p117 = scmp.ne.s32.totalorder %s112, %s114
      %p118 = scmp.eq.s32.totalorder %s15, 0
      %p119 = por %p117, %p118
      %p120 = scmp.ne.s32.totalorder %s112, %s114
      %p121 = scmp.eq.s32.totalorder %s20, 1
      %p122 = por %p120, %p121
      %p123 = scmp.ne.s32.totalorder %s114, %s115
      %p124 = scmp.eq.s32.totalorder %s20, 0
      %p125 = por %p123, %p124
      %p126 = scmp.ne.s32.totalorder %s114, %s115
      %p127 = scmp.eq.s32.totalorder %s21, 1
      %p128 = por %p126, %p127
      %p130 = scmp.ne.s32.totalorder %s115, %s129
      %p131 = scmp.eq.s32.totalorder %s21, 0
      %p132 = por %p130, %p131
      %s134 = sadd.s32 %s133, 1
      %p137 = scmp.eq.s32.totalorder %s15, 1
      %p138 = scmp.ne.s32.totalorder %s133, %s135
      %p139 = scmp.eq.s32.totalorder %s15, 0
      %p140 = por %p138, %p139
      %p141 = scmp.ne.s32.totalorder %s133, %s135
      %p142 = scmp.eq.s32.totalorder %s20, 1
      %p143 = por %p141, %p142
      %p144 = scmp.ne.s32.totalorder %s135, %s136
      %p145 = scmp.eq.s32.totalorder %s20, 0
      %p146 = por %p144, %p145
      %p147 = scmp.ne.s32.totalorder %s135, %s136
      %p148 = scmp.eq.s32.totalorder %s21, 1
      %p149 = por %p147, %p148
      %p151 = scmp.ne.s32.totalorder %s136, %s150
      %p152 = scmp.eq.s32.totalorder %s21, 0
      %p153 = por %p151, %p152
      %s154 = ssub.s32 %s15, %s22
      %p155 = scmp.eq.s32.totalorder %s154, 0
      %s157 = sadd.s32 %s156, 1
      %s158 = scalar_select %p155, %s156, %s157
      %p161 = pneg %p155
      %p162 = scmp.eq.s32.totalorder %s15, 1
      %p163 = por %p161, %p162
      %p164 = scmp.ne.s32.totalorder %s156, %s159
      %p165 = scmp.eq.s32.totalorder %s15, 0
      %p166 = por %p164, %p165
      %p167 = scmp.ne.s32.totalorder %s156, %s159
      %p168 = scmp.eq.s32.totalorder %s20, 1
      %p169 = por %p167, %p168
      %p170 = scmp.ne.s32.totalorder %s159, %s160
      %p171 = scmp.eq.s32.totalorder %s20, 0
      %p172 = por %p170, %p171
      %p173 = scmp.ne.s32.totalorder %s159, %s160
      %p174 = scmp.eq.s32.totalorder %s21, 1
      %p175 = por %p173, %p174
      %p177 = scmp.ne.s32.totalorder %s160, %s176
      %p178 = scmp.eq.s32.totalorder %s21, 0
      %p179 = por %p177, %p178
      %p180 = scmp.le.s32.totalorder 1, %s15
      %p181 = scmp.lt.s32.totalorder %s15, 3
      %p182 = pnand %p180, %p181
      %p183 = pneg %p182
      // Predicated region
      $region9: #{_lambda_.1} parent=5 // pred_check
        _
      $region10: #{_lambda_.1} parent=5 // pred_check_branch
        %185 = sbr.rel (%p182) target = $region12
      $region11: #{_lambda_.1} parent=5 // pred_region
        %s186 = ssub.s32 %s15, 1
        // Predicated region
        $region13: #{_lambda_.1} parent=11 // pred_check
          %p187 = pneg %p62
        $region14: #{_lambda_.1} parent=11 // pred_check_branch
          %189 = sbr.rel (%p187) target = $region16
        $region15: #{_lambda_.1} parent=11 // pred_region
          _
        $region16: #{_lambda_.1} parent=11 // pred_fallthru
          _
        // Predicated region
        $region17: #{_lambda_.1} parent=11 // pred_check
          %p190 = pneg %p83
        $region18: #{_lambda_.1} parent=11 // pred_check_branch
          %192 = sbr.rel (%p190) target = $region20
        $region19: #{_lambda_.1} parent=11 // pred_region
          _
        $region20: #{_lambda_.1} parent=11 // pred_fallthru
          _
        // Predicated region
        $region21: #{_lambda_.1} parent=11 // pred_check
          %p193 = pneg %p104
        $region22: #{_lambda_.1} parent=11 // pred_check_branch
          %195 = sbr.rel (%p193) target = $region24
        $region23: #{_lambda_.1} parent=11 // pred_region
          _
        $region24: #{_lambda_.1} parent=11 // pred_fallthru
          _
        // Predicated region
        $region25: #{_lambda_.1} parent=11 // pred_check
          %p196 = pneg %p125
        $region26: #{_lambda_.1} parent=11 // pred_check_branch
          %198 = sbr.rel (%p196) target = $region28
        $region27: #{_lambda_.1} parent=11 // pred_region
          _
        $region28: #{_lambda_.1} parent=11 // pred_fallthru
          _
        // Predicated region
        $region29: #{_lambda_.1} parent=11 // pred_check
          %p199 = pneg %p146
        $region30: #{_lambda_.1} parent=11 // pred_check_branch
          %201 = sbr.rel (%p199) target = $region32
        $region31: #{_lambda_.1} parent=11 // pred_region
          _
        $region32: #{_lambda_.1} parent=11 // pred_fallthru
          _
      $region12: #{_lambda_.1} parent=5 // pred_fallthru
        _
      %p202 = scmp.lt.s32.totalorder %s15, 2
      // Predicated region
      $region33: #{_lambda_.1} parent=5 // pred_check
        %p203 = pneg %p202
      $region34: #{_lambda_.1} parent=5 // pred_check_branch
        %205 = sbr.rel (%p203) target = $region36
      $region35: #{_lambda_.1} parent=5 // pred_region
        // Predicated region
        $region37: #{_lambda_.1} parent=35 // pred_check
          %p206 = pneg %p35
        $region38: #{_lambda_.1} parent=35 // pred_check_branch
          %208 = sbr.rel (%p206) target = $region40
        $region39: #{_lambda_.1} parent=35 // pred_region
          %p209 = scmp.lt.s32.totalorder %s15, 1
          %s210 = scalar_select %p209, %s15, 1
          %s211 = smul.addr %s210, 4
          %s212 = smul.addr %s211, 8
          %s213 = scalar_lea.vmem %s0, %s212
        $region40: #{_lambda_.1} parent=35 // pred_fallthru
          _
      $region36: #{_lambda_.1} parent=5 // pred_fallthru
        _
      %p214 = scmp.le.s32.totalorder 1, %s15
      %p215 = scmp.lt.s32.totalorder %s15, 3
      %p216 = pnand %p214, %p215
      %p217 = pneg %p216
      // Predicated region
      $region41: #{_lambda_.1} parent=5 // pred_check
        _
      $region42: #{_lambda_.1} parent=5 // pred_check_branch
        %219 = sbr.rel (%p216) target = $region44
      $region43: #{_lambda_.1} parent=5 // pred_region
        %s220 = ssub.s32 %s15, 1
        %p221 = scmp.lt.s32.totalorder %s20, 1
        %s222 = scalar_select %p221, %s20, 1
        %s223 = smul.addr %s222, 4
        %s224 = smul.addr %s223, 8
        %s225 = scalar_lea.vmem %s0, %s224
        %p226 = pneg %p41
        %p227 = pneg %p38
        %p228 = pneg %p62
        %p229 = pneg %p59
        %p230 = pneg %p83
        %p231 = pneg %p80
        %p232 = pneg %p104
        %p233 = pneg %p101
        %p234 = pneg %p125
        %p235 = pneg %p122
        %p236 = pneg %p146
        %p237 = pneg %p143
        %p238 = pneg %p172
        %p239 = pneg %p169
        %s240 = sand.u32 %s159, 1
        %s241 = scalar_lea.sflag [#allocation4], %s240
        %s242 = sand.u32 %s159, 1
        %s243 = scalar_lea.vmem [#allocation3], %s242
        %p244 = scmp.lt.s32.totalorder %s20, 1
        %s245 = scalar_select %p244, %s20, 1
        %s246 = smul.addr %s245, 4
        %s247 = smul.addr %s246, 8
        %s248 = scalar_lea.vmem %s0, %s247
        %v250 = vld [vmem:[%s248] sm:$0xff]
        %v251 = vld [vmem:[%s248 + $0x8] sm:$0xff]
        %v252 = vld [vmem:[%s248 + $0x10] sm:$0xff]
        %v253 = vld [vmem:[%s248 + $0x18] sm:$0xff]
        %v254 = vld [vmem:[%s3] sm:$0xf]
        %v255 = vld [vmem:[%s3 + $0x4] sm:$0xf]
        %v256 = vld [vmem:[%s3 + $0x8] sm:$0xf]
        %v257 = vld [vmem:[%s3 + $0xc] sm:$0xf]
        %v258 = vld [vmem:[%s3 + $0x10] sm:$0xf]
        %v259 = vld [vmem:[%s3 + $0x14] sm:$0xf]
        %v260 = vld [vmem:[%s3 + $0x18] sm:$0xf]
        %v261 = vld [vmem:[%s3 + $0x1c] sm:$0xf]
        %v262 = vpack.c.bf16 %v251, %v250
        %v263 = vpack.c.bf16 %v253, %v252
        %v264 = vld [vmem:[%s5] sm:$0x1]
        %v265 = vlaneseq
        %v266 = vshrl.u32 %v265, 7
        %v267 = vsub.s32 0, %v266
        %v268 = vrot.slane %v264, %v267
        %v277 = vunpack.c.l.b16 %v254
        %v278 = vunpack.c.l.b16 %v255
        %v279 = vunpack.c.l.b16 %v256
        %v280 = vunpack.c.l.b16 %v257
        %v281 = vunpack.c.l.b16 %v258
        %v282 = vunpack.c.l.b16 %v259
        %v283 = vunpack.c.l.b16 %v260
        %v284 = vunpack.c.l.b16 %v261
        %v285 = vpack.c.b16 %v278, %v277
        %v286 = vpack.c.b16 %v280, %v279
        %v287 = vpack.c.b16 %v282, %v281
        %v288 = vpack.c.b16 %v284, %v283
        %vm293 = vcmask 523264
        %v295 = vsel %vm293, %v262, 0
        %v298 = vsel %vm293, %v263, 0
        %300 = vmatprep.subr.bf16.mxu0 0
        %301 = vmatpush1.bf16.msra.mxu0 %v285
        %302 = vmatprep.subr.bf16.mxu0 0
        %303 = vmatpush1.bf16.msra.mxu0 %v286
        %304 = vmatprep.subr.bf16.mxu0 0
        %305 = vmatpush1.bf16.msra.mxu0 %v287
        %306 = vmatprep.subr.bf16.mxu0 0
        %307 = vmatpush1.bf16.msra.mxu0 %v288
        %308 = vmatprep.subr.bf16.mxu0 0
        %309 = vmatpush1.bf16.msra.mxu0 0
        %310 = vmatprep.subr.bf16.mxu0 0
        %311 = vmatpush1.bf16.msra.mxu0 0
        %312 = vmatprep.subr.bf16.mxu0 0
        %313 = vmatpush1.bf16.msra.mxu0 0
        %314 = vmatprep.subr.bf16.mxu0 0
        %315 = vmatpush1.bf16.msra.mxu0 0
        %316 = vmatprep.subr.bf16.mxu0 0
        %317 = vmatpush1.bf16.msra.mxu0 0
        %318 = vmatprep.subr.bf16.mxu0 0
        %319 = vmatpush1.bf16.msra.mxu0 0
        %320 = vmatprep.subr.bf16.mxu0 0
        %321 = vmatpush1.bf16.msra.mxu0 0
        %322 = vmatprep.subr.bf16.mxu0 0
        %323 = vmatpush1.bf16.msra.mxu0 0
        %324 = vmatprep.subr.bf16.mxu0 0
        %325 = vmatpush1.bf16.msra.mxu0 0
        %326 = vmatprep.subr.bf16.mxu0 0
        %327 = vmatpush1.bf16.msra.mxu0 0
        %328 = vmatprep.subr.bf16.mxu0 0
        %329 = vmatpush1.bf16.msra.mxu0 0
        %330 = vmatprep.subr.bf16.mxu0 0
        %331 = vmatpush1.bf16.msra.mxu0 0
        %332 = vmatprep.mubr.bf16.mxu0 0
        %333 = vmatmul.mubr.bf16.gmra.mrb[0].mxu0 %v295
        %v334 = vpop.f32.mrb[0].mxu0
        %v335 = vadd.f32 %v268, %v334
        %v336 = vpop.f32.mrb[0].mxu0
        %v337 = vpop.f32.mrb[0].mxu0
        %v338 = vadd.f32 %v268, %v337
        %v339 = vpop.f32.mrb[0].mxu0
        %340 = vmatprep.mubr.bf16.mxu0 0
        %341 = vmatmul.mubr.bf16.gmra.mrb[0].mxu0 %v298
        %v342 = vpop.f32.mrb[0].mxu0
        %v343 = vadd.f32 %v268, %v342
        %v344 = vpop.f32.mrb[0].mxu0
        %v345 = vpop.f32.mrb[0].mxu0
        %v346 = vadd.f32 %v268, %v345
        %v347 = vpop.f32.mrb[0].mxu0
        %348 = vdwg.mxu0
        %v349 = vmax.f32 %v335, 0.0
        %v350 = vmax.f32 %v338, 0.0
        %v351 = vmax.f32 %v343, 0.0
        %v352 = vmax.f32 %v346, 0.0
        %vm353 = vcmask 130048
        %354 = vst.msk [vmem:[#allocation2] sm:$0xff] %vm353, %v349
        %355 = vst.msk [vmem:[#allocation2 + $0x8] sm:$0xff] %vm353, %v350
        %356 = vst.msk [vmem:[#allocation2 + $0x10] sm:$0xff] %vm353, %v351
        %357 = vst.msk [vmem:[#allocation2 + $0x18] sm:$0xff] %vm353, %v352
        %v358 = vld [vmem:[#allocation2] ss:$2 sm:$0xff]
        %s359 = scalar_lea.vmem [#allocation2], 16
        %v360 = vld [vmem:[%s359] ss:$2 sm:$0xff]
        %s361 = scalar_lea.vmem [#allocation2], 1
        %v362 = vld [vmem:[%s361] ss:$2 sm:$0xff]
        %s363 = scalar_lea.vmem [#allocation2], 17
        %v364 = vld [vmem:[%s363] ss:$2 sm:$0xff]
        %v365 = vmax.f32 %v358, %v362
        %v366 = vmax.f32 %v360, %v364
        %367 = vst.msk [vmem:[#allocation2 + $0x8] sm:$0xff] %vm353, %v365
        %368 = vst.msk [vmem:[#allocation2 + $0x10] sm:$0xff] %vm353, %v366
        %v369 = vld [vmem:[%s1] sm:$0xff]
        %v370 = vld [vmem:[%s1 + $0x8] sm:$0xff]
        %v371 = vld [vmem:[%s4 + $0x3] sm:$0x1]
        %v372 = vlaneseq
        %v373 = vshrl.u32 %v372, 7
        %v374 = vsub.s32 0, %v373
        %v375 = vrot.slane %v371, %v374
        %v376 = vmul.f32 %v365, %v375
        %v377 = vmul.f32 %v366, %v375
        %v378 = vld [vmem:[#allocation2 + $0x5] sm:$0xff]
        %v379 = vld [vmem:[#allocation2 + $0xd] sm:$0xff]
        %v380 = vadd.s32 %v369, 4294967293
        %v381 = vadd.s32 %v370, 4294967293
        %vm382 = vcmp.ge.s32.totalorder %v380, 0
        %vm383 = vcmp.ge.s32.totalorder %v381, 0
        %vm384 = vcmp.lt.s32.totalorder %v380, 16
        %vm385 = vcmp.lt.s32.totalorder %v381, 16
        %vm386 = vmand %vm382, %vm384
        %vm387 = vmand %vm383, %vm385
        %v388 = vsel %vm386, 1, 0
        %v389 = vsel %vm387, 1, 0
        %390 = vset.pattern.permute.xlu0 0
        %391 = vperm.xlu0 %390, %v388
        %v392 = vpop.permute.xlu0 %391
        %393 = vset.pattern.permute.xlu0 0
        %394 = vperm.xlu0 %393, %v389
        %v395 = vpop.permute.xlu0 %394
        %vm396 = vcmp.eq.s32.totalorder %v392, 1
        %vm397 = vcmp.eq.s32.totalorder %v395, 1
        %v398 = vsel %vm396, %v378, 0.0
        %v399 = vsel %vm397, %v379, 0.0
        %v400 = vld [vmem:[%s4] sm:$0x1]
        %v401 = vlaneseq
        %v402 = vshrl.u32 %v401, 7
        %v403 = vsub.s32 0, %v402
        %v404 = vrot.slane %v400, %v403
        %v405 = vmul.f32 %v398, %v404
        %v406 = vmul.f32 %v399, %v404
        %v407 = vadd.f32 %v376, %v405
        %v408 = vadd.f32 %v377, %v406
        %v409 = vld [vmem:[#allocation2 + $0x6] sm:$0xff]
        %v410 = vld [vmem:[#allocation2 + $0xe] sm:$0xff]
        %v411 = vadd.s32 %v369, 4294967294
        %v412 = vadd.s32 %v370, 4294967294
        %vm413 = vcmp.ge.s32.totalorder %v411, 0
        %vm414 = vcmp.ge.s32.totalorder %v412, 0
        %vm415 = vcmp.lt.s32.totalorder %v411, 16
        %vm416 = vcmp.lt.s32.totalorder %v412, 16
        %vm417 = vmand %vm413, %vm415
        %vm418 = vmand %vm414, %vm416
        %v419 = vsel %vm417, 1, 0
        %v420 = vsel %vm418, 1, 0
        %421 = vset.pattern.permute.xlu0 0
        %422 = vperm.xlu0 %421, %v419
        %v423 = vpop.permute.xlu0 %422
        %424 = vset.pattern.permute.xlu0 0
        %425 = vperm.xlu0 %424, %v420
        %v426 = vpop.permute.xlu0 %425
        %vm427 = vcmp.eq.s32.totalorder %v423, 1
        %vm428 = vcmp.eq.s32.totalorder %v426, 1
        %v429 = vsel %vm427, %v409, 0.0
        %v430 = vsel %vm428, %v410, 0.0
        %v431 = vld [vmem:[%s4 + $0x1] sm:$0x1]
        %v432 = vlaneseq
        %v433 = vshrl.u32 %v432, 7
        %v434 = vsub.s32 0, %v433
        %v435 = vrot.slane %v431, %v434
        %v436 = vmul.f32 %v429, %v435
        %v437 = vmul.f32 %v430, %v435
        %v438 = vadd.f32 %v407, %v436
        %v439 = vadd.f32 %v408, %v437
        %v440 = vld [vmem:[#allocation2 + $0x7] sm:$0xff]
        %v441 = vld [vmem:[#allocation2 + $0xf] sm:$0xff]
        %v442 = vadd.s32 %v369, 4294967295
        %v443 = vadd.s32 %v370, 4294967295
        %vm444 = vcmp.ge.s32.totalorder %v442, 0
        %vm445 = vcmp.ge.s32.totalorder %v443, 0
        %vm446 = vcmp.lt.s32.totalorder %v442, 16
        %vm447 = vcmp.lt.s32.totalorder %v443, 16
        %vm448 = vmand %vm444, %vm446
        %vm449 = vmand %vm445, %vm447
        %v450 = vsel %vm448, 1, 0
        %v451 = vsel %vm449, 1, 0
        %452 = vset.pattern.permute.xlu0 0
        %453 = vperm.xlu0 %452, %v450
        %v454 = vpop.permute.xlu0 %453
        %455 = vset.pattern.permute.xlu0 0
        %456 = vperm.xlu0 %455, %v451
        %v457 = vpop.permute.xlu0 %456
        %vm458 = vcmp.eq.s32.totalorder %v454, 1
        %vm459 = vcmp.eq.s32.totalorder %v457, 1
        %v460 = vsel %vm458, %v440, 0.0
        %v461 = vsel %vm459, %v441, 0.0
        %v462 = vld [vmem:[%s4 + $0x2] sm:$0x1]
        %v463 = vlaneseq
        %v464 = vshrl.u32 %v463, 7
        %v465 = vsub.s32 0, %v464
        %v466 = vrot.slane %v462, %v465
        %v467 = vmul.f32 %v460, %v466
        %v468 = vmul.f32 %v461, %v466
        %v469 = vadd.f32 %v438, %v467
        %v470 = vadd.f32 %v439, %v468
        %v471 = vld [vmem:[#allocation2 + $0x9] sm:$0xff]
        %v472 = vld [vmem:[#allocation2 + $0x11] sm:$0xff]
        %v473 = vadd.s32 %v369, 1
        %v474 = vadd.s32 %v370, 1
        %vm475 = vcmp.ge.s32.totalorder %v473, 0
        %vm476 = vcmp.ge.s32.totalorder %v474, 0
        %vm477 = vcmp.lt.s32.totalorder %v473, 16
        %vm478 = vcmp.lt.s32.totalorder %v474, 16
        %vm479 = vmand %vm475, %vm477
        %vm480 = vmand %vm476, %vm478
        %v481 = vsel %vm479, 1, 0
        %v482 = vsel %vm480, 1, 0
        %483 = vset.pattern.permute.xlu0 0
        %484 = vperm.xlu0 %483, %v481
        %v485 = vpop.permute.xlu0 %484
        %486 = vset.pattern.permute.xlu0 0
        %487 = vperm.xlu0 %486, %v482
        %v488 = vpop.permute.xlu0 %487
        %vm489 = vcmp.eq.s32.totalorder %v485, 1
        %vm490 = vcmp.eq.s32.totalorder %v488, 1
        %v491 = vsel %vm489, %v471, 0.0
        %v492 = vsel %vm490, %v472, 0.0
        %v493 = vld [vmem:[%s4 + $0x4] sm:$0x1]
        %v494 = vlaneseq
        %v495 = vshrl.u32 %v494, 7
        %v496 = vsub.s32 0, %v495
        %v497 = vrot.slane %v493, %v496
        %v498 = vmul.f32 %v491, %v497
        %v499 = vmul.f32 %v492, %v497
        %v500 = vadd.f32 %v469, %v498
        %v501 = vadd.f32 %v470, %v499
        %v502 = vld [vmem:[#allocation2 + $0xa] sm:$0xff]
        %v503 = vld [vmem:[#allocation2 + $0x12] sm:$0xff]
        %v504 = vadd.s32 %v369, 2
        %v505 = vadd.s32 %v370, 2
        %vm506 = vcmp.ge.s32.totalorder %v504, 0
        %vm507 = vcmp.ge.s32.totalorder %v505, 0
        %vm508 = vcmp.lt.s32.totalorder %v504, 16
        %vm509 = vcmp.lt.s32.totalorder %v505, 16
        %vm510 = vmand %vm506, %vm508
        %vm511 = vmand %vm507, %vm509
        %v512 = vsel %vm510, 1, 0
        %v513 = vsel %vm511, 1, 0
        %514 = vset.pattern.permute.xlu0 0
        %515 = vperm.xlu0 %514, %v512
        %v516 = vpop.permute.xlu0 %515
        %517 = vset.pattern.permute.xlu0 0
        %518 = vperm.xlu0 %517, %v513
        %v519 = vpop.permute.xlu0 %518
        %vm520 = vcmp.eq.s32.totalorder %v516, 1
        %vm521 = vcmp.eq.s32.totalorder %v519, 1
        %v522 = vsel %vm520, %v502, 0.0
        %v523 = vsel %vm521, %v503, 0.0
        %v524 = vld [vmem:[%s4 + $0x5] sm:$0x1]
        %v525 = vlaneseq
        %v526 = vshrl.u32 %v525, 7
        %v527 = vsub.s32 0, %v526
        %v528 = vrot.slane %v524, %v527
        %v529 = vmul.f32 %v522, %v528
        %v530 = vmul.f32 %v523, %v528
        %v531 = vadd.f32 %v500, %v529
        %v532 = vadd.f32 %v501, %v530
        %v533 = vld [vmem:[#allocation2 + $0xb] sm:$0xff]
        %v534 = vld [vmem:[#allocation2 + $0x13] sm:$0xff]
        %v535 = vadd.s32 %v369, 3
        %v536 = vadd.s32 %v370, 3
        %vm537 = vcmp.ge.s32.totalorder %v535, 0
        %vm538 = vcmp.ge.s32.totalorder %v536, 0
        %vm539 = vcmp.lt.s32.totalorder %v535, 16
        %vm540 = vcmp.lt.s32.totalorder %v536, 16
        %vm541 = vmand %vm537, %vm539
        %vm542 = vmand %vm538, %vm540
        %v543 = vsel %vm541, 1, 0
        %v544 = vsel %vm542, 1, 0
        %545 = vset.pattern.permute.xlu0 0
        %546 = vperm.xlu0 %545, %v543
        %v547 = vpop.permute.xlu0 %546
        %548 = vset.pattern.permute.xlu0 0
        %549 = vperm.xlu0 %548, %v544
        %v550 = vpop.permute.xlu0 %549
        %vm551 = vcmp.eq.s32.totalorder %v547, 1
        %vm552 = vcmp.eq.s32.totalorder %v550, 1
        %v553 = vsel %vm551, %v533, 0.0
        %v554 = vsel %vm552, %v534, 0.0
        %v555 = vld [vmem:[%s4 + $0x6] sm:$0x1]
        %v556 = vlaneseq
        %v557 = vshrl.u32 %v556, 7
        %v558 = vsub.s32 0, %v557
        %v559 = vrot.slane %v555, %v558
        %v560 = vmul.f32 %v553, %v559
        %v561 = vmul.f32 %v554, %v559
        %v562 = vadd.f32 %v531, %v560
        %v563 = vadd.f32 %v532, %v561
        %v564 = vld [vmem:[%s5 + $0x1] sm:$0x1]
        %v565 = vlaneseq
        %v566 = vshrl.u32 %v565, 7
        %v567 = vsub.s32 0, %v566
        %v568 = vrot.slane %v564, %v567
        %v569 = vadd.f32 %v562, %v568
        %v570 = vadd.f32 %v563, %v568
        %v571 = vmax.f32 %v569, 0.0
        %v572 = vmax.f32 %v570, 0.0
        %v573 = vld [vmem:[%s3 + $0x20] sm:$0xf]
        %v574 = vld [vmem:[%s3 + $0x24] sm:$0xf]
        %v575 = vpack.c.bf16 %v572, %v571
        %v576 = vld [vmem:[%s5 + $0x7] sm:$0x1]
        %v577 = vlaneseq
        %v578 = vshrl.u32 %v577, 7
        %v579 = vsub.s32 0, %v578
        %v580 = vrot.slane %v576, %v579
        %v583 = vunpack.c.l.b16 %v573
        %v584 = vunpack.c.l.b16 %v574
        %v585 = vpack.c.b16 %v584, %v583
        %v588 = vsel %vm353, %v575, 0
        %590 = vmatprep.subr.bf16.mxu0 0
        %591 = vmatpush1.bf16.msra.mxu0 %v585
        %592 = vmatprep.subr.bf16.mxu0 0
        %593 = vmatpush1.bf16.msra.mxu0 0
        %594 = vmatprep.subr.bf16.mxu0 0
        %595 = vmatpush1.bf16.msra.mxu0 0
        %596 = vmatprep.subr.bf16.mxu0 0
        %597 = vmatpush1.bf16.msra.mxu0 0
        %598 = vmatprep.subr.bf16.mxu0 0
        %599 = vmatpush1.bf16.msra.mxu0 0
        %600 = vmatprep.subr.bf16.mxu0 0
        %601 = vmatpush1.bf16.msra.mxu0 0
        %602 = vmatprep.subr.bf16.mxu0 0
        %603 = vmatpush1.bf16.msra.mxu0 0
        %604 = vmatprep.subr.bf16.mxu0 0
        %605 = vmatpush1.bf16.msra.mxu0 0
        %606 = vmatprep.subr.bf16.mxu0 0
        %607 = vmatpush1.bf16.msra.mxu0 0
        %608 = vmatprep.subr.bf16.mxu0 0
        %609 = vmatpush1.bf16.msra.mxu0 0
        %610 = vmatprep.subr.bf16.mxu0 0
        %611 = vmatpush1.bf16.msra.mxu0 0
        %612 = vmatprep.subr.bf16.mxu0 0
        %613 = vmatpush1.bf16.msra.mxu0 0
        %614 = vmatprep.subr.bf16.mxu0 0
        %615 = vmatpush1.bf16.msra.mxu0 0
        %616 = vmatprep.subr.bf16.mxu0 0
        %617 = vmatpush1.bf16.msra.mxu0 0
        %618 = vmatprep.subr.bf16.mxu0 0
        %619 = vmatpush1.bf16.msra.mxu0 0
        %620 = vmatprep.subr.bf16.mxu0 0
        %621 = vmatpush1.bf16.msra.mxu0 0
        %622 = vmatprep.mubr.bf16.mxu0 0
        %623 = vmatmul.mubr.bf16.gmra.mrb[0].mxu0 %v588
        %v624 = vpop.f32.mrb[0].mxu0
        %v625 = vadd.f32 %v580, %v624
        %v626 = vpop.f32.mrb[0].mxu0
        %v627 = vpop.f32.mrb[0].mxu0
        %v628 = vadd.f32 %v580, %v627
        %v629 = vpop.f32.mrb[0].mxu0
        %630 = vdwg.mxu0
        %v631 = vmax.f32 %v625, 0.0
        %v632 = vmax.f32 %v628, 0.0
        %vm633 = vcmask 261120
        %634 = vst.msk [vmem:[#allocation2 + $0x8] sm:$0xff] %vm633, %v631
        %635 = vst.msk [vmem:[#allocation2 + $0x10] sm:$0xff] %vm633, %v632
        %v636 = vld [vmem:[%s1] sm:$0xff]
        %v637 = vld [vmem:[%s1 + $0x8] sm:$0xff]
        %v638 = vld [vmem:[%s4 + $0xb] sm:$0x1]
        %v639 = vlaneseq
        %v640 = vshrl.u32 %v639, 7
        %v641 = vsub.s32 0, %v640
        %v642 = vrot.slane %v638, %v641
        %v643 = vmul.f32 %v631, %v642
        %v644 = vmul.f32 %v632, %v642
        %v645 = vld [vmem:[#allocation2 + $0x5] sm:$0xff]
        %v646 = vld [vmem:[#allocation2 + $0xd] sm:$0xff]
        %v647 = vadd.s32 %v636, 4294967293
        %v648 = vadd.s32 %v637, 4294967293
        %vm649 = vcmp.ge.s32.totalorder %v647, 0
        %vm650 = vcmp.ge.s32.totalorder %v648, 0
        %vm651 = vcmp.lt.s32.totalorder %v647, 16
        %vm652 = vcmp.lt.s32.totalorder %v648, 16
        %vm653 = vmand %vm649, %vm651
        %vm654 = vmand %vm650, %vm652
        %v655 = vsel %vm653, 1, 0
        %v656 = vsel %vm654, 1, 0
        %657 = vset.pattern.permute.xlu0 0
        %658 = vperm.xlu0 %657, %v655
        %v659 = vpop.permute.xlu0 %658
        %660 = vset.pattern.permute.xlu0 0
        %661 = vperm.xlu0 %660, %v656
        %v662 = vpop.permute.xlu0 %661
        %vm663 = vcmp.eq.s32.totalorder %v659, 1
        %vm664 = vcmp.eq.s32.totalorder %v662, 1
        %v665 = vsel %vm663, %v645, 0.0
        %v666 = vsel %vm664, %v646, 0.0
        %v667 = vld [vmem:[%s4 + $0x8] sm:$0x1]
        %v668 = vlaneseq
        %v669 = vshrl.u32 %v668, 7
        %v670 = vsub.s32 0, %v669
        %v671 = vrot.slane %v667, %v670
        %v672 = vmul.f32 %v665, %v671
        %v673 = vmul.f32 %v666, %v671
        %v674 = vadd.f32 %v643, %v672
        %v675 = vadd.f32 %v644, %v673
        %v676 = vld [vmem:[#allocation2 + $0x6] sm:$0xff]
        %v677 = vld [vmem:[#allocation2 + $0xe] sm:$0xff]
        %v678 = vadd.s32 %v636, 4294967294
        %v679 = vadd.s32 %v637, 4294967294
        %vm680 = vcmp.ge.s32.totalorder %v678, 0
        %vm681 = vcmp.ge.s32.totalorder %v679, 0
        %vm682 = vcmp.lt.s32.totalorder %v678, 16
        %vm683 = vcmp.lt.s32.totalorder %v679, 16
        %vm684 = vmand %vm680, %vm682
        %vm685 = vmand %vm681, %vm683
        %v686 = vsel %vm684, 1, 0
        %v687 = vsel %vm685, 1, 0
        %688 = vset.pattern.permute.xlu0 0
        %689 = vperm.xlu0 %688, %v686
        %v690 = vpop.permute.xlu0 %689
        %691 = vset.pattern.permute.xlu0 0
        %692 = vperm.xlu0 %691, %v687
        %v693 = vpop.permute.xlu0 %692
        %vm694 = vcmp.eq.s32.totalorder %v690, 1
        %vm695 = vcmp.eq.s32.totalorder %v693, 1
        %v696 = vsel %vm694, %v676, 0.0
        %v697 = vsel %vm695, %v677, 0.0
        %v698 = vld [vmem:[%s4 + $0x9] sm:$0x1]
        %v699 = vlaneseq
        %v700 = vshrl.u32 %v699, 7
        %v701 = vsub.s32 0, %v700
        %v702 = vrot.slane %v698, %v701
        %v703 = vmul.f32 %v696, %v702
        %v704 = vmul.f32 %v697, %v702
        %v705 = vadd.f32 %v674, %v703
        %v706 = vadd.f32 %v675, %v704
        %v707 = vld [vmem:[#allocation2 + $0x7] sm:$0xff]
        %v708 = vld [vmem:[#allocation2 + $0xf] sm:$0xff]
        %v709 = vadd.s32 %v636, 4294967295
        %v710 = vadd.s32 %v637, 4294967295
        %vm711 = vcmp.ge.s32.totalorder %v709, 0
        %vm712 = vcmp.ge.s32.totalorder %v710, 0
        %vm713 = vcmp.lt.s32.totalorder %v709, 16
        %vm714 = vcmp.lt.s32.totalorder %v710, 16
        %vm715 = vmand %vm711, %vm713
        %vm716 = vmand %vm712, %vm714
        %v717 = vsel %vm715, 1, 0
        %v718 = vsel %vm716, 1, 0
        %719 = vset.pattern.permute.xlu0 0
        %720 = vperm.xlu0 %719, %v717
        %v721 = vpop.permute.xlu0 %720
        %722 = vset.pattern.permute.xlu0 0
        %723 = vperm.xlu0 %722, %v718
        %v724 = vpop.permute.xlu0 %723
        %vm725 = vcmp.eq.s32.totalorder %v721, 1
        %vm726 = vcmp.eq.s32.totalorder %v724, 1
        %v727 = vsel %vm725, %v707, 0.0
        %v728 = vsel %vm726, %v708, 0.0
        %v729 = vld [vmem:[%s4 + $0xa] sm:$0x1]
        %v730 = vlaneseq
        %v731 = vshrl.u32 %v730, 7
        %v732 = vsub.s32 0, %v731
        %v733 = vrot.slane %v729, %v732
        %v734 = vmul.f32 %v727, %v733
        %v735 = vmul.f32 %v728, %v733
        %v736 = vadd.f32 %v705, %v734
        %v737 = vadd.f32 %v706, %v735
        %v738 = vld [vmem:[#allocation2 + $0x9] sm:$0xff]
        %v739 = vld [vmem:[#allocation2 + $0x11] sm:$0xff]
        %v740 = vadd.s32 %v636, 1
        %v741 = vadd.s32 %v637, 1
        %vm742 = vcmp.ge.s32.totalorder %v740, 0
        %vm743 = vcmp.ge.s32.totalorder %v741, 0
        %vm744 = vcmp.lt.s32.totalorder %v740, 16
        %vm745 = vcmp.lt.s32.totalorder %v741, 16
        %vm746 = vmand %vm742, %vm744
        %vm747 = vmand %vm743, %vm745
        %v748 = vsel %vm746, 1, 0
        %v749 = vsel %vm747, 1, 0
        %750 = vset.pattern.permute.xlu0 0
        %751 = vperm.xlu0 %750, %v748
        %v752 = vpop.permute.xlu0 %751
        %753 = vset.pattern.permute.xlu0 0
        %754 = vperm.xlu0 %753, %v749
        %v755 = vpop.permute.xlu0 %754
        %vm756 = vcmp.eq.s32.totalorder %v752, 1
        %vm757 = vcmp.eq.s32.totalorder %v755, 1
        %v758 = vsel %vm756, %v738, 0.0
        %v759 = vsel %vm757, %v739, 0.0
        %v760 = vld [vmem:[%s4 + $0xc] sm:$0x1]
        %v761 = vlaneseq
        %v762 = vshrl.u32 %v761, 7
        %v763 = vsub.s32 0, %v762
        %v764 = vrot.slane %v760, %v763
        %v765 = vmul.f32 %v758, %v764
        %v766 = vmul.f32 %v759, %v764
        %v767 = vadd.f32 %v736, %v765
        %v768 = vadd.f32 %v737, %v766
        %v769 = vld [vmem:[#allocation2 + $0xa] sm:$0xff]
        %v770 = vld [vmem:[#allocation2 + $0x12] sm:$0xff]
        %v771 = vadd.s32 %v636, 2
        %v772 = vadd.s32 %v637, 2
        %vm773 = vcmp.ge.s32.totalorder %v771, 0
        %vm774 = vcmp.ge.s32.totalorder %v772, 0
        %vm775 = vcmp.lt.s32.totalorder %v771, 16
        %vm776 = vcmp.lt.s32.totalorder %v772, 16
        %vm777 = vmand %vm773, %vm775
        %vm778 = vmand %vm774, %vm776
        %v779 = vsel %vm777, 1, 0
        %v780 = vsel %vm778, 1, 0
        %781 = vset.pattern.permute.xlu0 0
        %782 = vperm.xlu0 %781, %v779
        %v783 = vpop.permute.xlu0 %782
        %784 = vset.pattern.permute.xlu0 0
        %785 = vperm.xlu0 %784, %v780
        %v786 = vpop.permute.xlu0 %785
        %vm787 = vcmp.eq.s32.totalorder %v783, 1
        %vm788 = vcmp.eq.s32.totalorder %v786, 1
        %v789 = vsel %vm787, %v769, 0.0
        %v790 = vsel %vm788, %v770, 0.0
        %v791 = vld [vmem:[%s4 + $0xd] sm:$0x1]
        %v792 = vlaneseq
        %v793 = vshrl.u32 %v792, 7
        %v794 = vsub.s32 0, %v793
        %v795 = vrot.slane %v791, %v794
        %v796 = vmul.f32 %v789, %v795
        %v797 = vmul.f32 %v790, %v795
        %v798 = vadd.f32 %v767, %v796
        %v799 = vadd.f32 %v768, %v797
        %v800 = vld [vmem:[#allocation2 + $0xb] sm:$0xff]
        %v801 = vld [vmem:[#allocation2 + $0x13] sm:$0xff]
        %v802 = vadd.s32 %v636, 3
        %v803 = vadd.s32 %v637, 3
        %vm804 = vcmp.ge.s32.totalorder %v802, 0
        %vm805 = vcmp.ge.s32.totalorder %v803, 0
        %vm806 = vcmp.lt.s32.totalorder %v802, 16
        %vm807 = vcmp.lt.s32.totalorder %v803, 16
        %vm808 = vmand %vm804, %vm806
        %vm809 = vmand %vm805, %vm807
        %v810 = vsel %vm808, 1, 0
        %v811 = vsel %vm809, 1, 0
        %812 = vset.pattern.permute.xlu0 0
        %813 = vperm.xlu0 %812, %v810
        %v814 = vpop.permute.xlu0 %813
        %815 = vset.pattern.permute.xlu0 0
        %816 = vperm.xlu0 %815, %v811
        %v817 = vpop.permute.xlu0 %816
        %vm818 = vcmp.eq.s32.totalorder %v814, 1
        %vm819 = vcmp.eq.s32.totalorder %v817, 1
        %v820 = vsel %vm818, %v800, 0.0
        %v821 = vsel %vm819, %v801, 0.0
        %v822 = vld [vmem:[%s4 + $0xe] sm:$0x1]
        %v823 = vlaneseq
        %v824 = vshrl.u32 %v823, 7
        %v825 = vsub.s32 0, %v824
        %v826 = vrot.slane %v822, %v825
        %v827 = vmul.f32 %v820, %v826
        %v828 = vmul.f32 %v821, %v826
        %v829 = vadd.f32 %v798, %v827
        %v830 = vadd.f32 %v799, %v828
        %v831 = vld [vmem:[%s5 + $0x2] sm:$0x1]
        %v832 = vlaneseq
        %v833 = vshrl.u32 %v832, 7
        %v834 = vsub.s32 0, %v833
        %v835 = vrot.slane %v831, %v834
        %v836 = vadd.f32 %v829, %v835
        %v837 = vadd.f32 %v830, %v835
        %v838 = vmax.f32 %v836, 0.0
        %v839 = vmax.f32 %v837, 0.0
        %v840 = vld [vmem:[%s3 + $0x28] sm:$0xf]
        %v841 = vld [vmem:[%s3 + $0x2c] sm:$0xf]
        %v842 = vld [vmem:[%s3 + $0x30] sm:$0xf]
        %v843 = vld [vmem:[%s3 + $0x34] sm:$0xf]
        %v844 = vpack.c.bf16 %v839, %v838
        %v845 = vld [vmem:[%s5 + $0x8] sm:$0x1]
        %v846 = vlaneseq
        %v847 = vshrl.u32 %v846, 7
        %v848 = vsub.s32 0, %v847
        %v849 = vrot.slane %v845, %v848
        %v854 = vunpack.c.l.b16 %v840
        %v855 = vunpack.c.l.b16 %v841
        %v856 = vunpack.c.l.b16 %v842
        %v857 = vunpack.c.l.b16 %v843
        %v858 = vpack.c.b16 %v855, %v854
        %v859 = vpack.c.b16 %v857, %v856
        %v863 = vsel %vm633, %v844, 0
        %865 = vmatprep.subr.bf16.mxu0 0
        %866 = vmatpush1.bf16.msra.mxu0 %v858
        %867 = vmatprep.subr.bf16.mxu0 0
        %868 = vmatpush1.bf16.msra.mxu0 %v859
        %869 = vmatprep.subr.bf16.mxu0 0
        %870 = vmatpush1.bf16.msra.mxu0 0
        %871 = vmatprep.subr.bf16.mxu0 0
        %872 = vmatpush1.bf16.msra.mxu0 0
        %873 = vmatprep.subr.bf16.mxu0 0
        %874 = vmatpush1.bf16.msra.mxu0 0
        %875 = vmatprep.subr.bf16.mxu0 0
        %876 = vmatpush1.bf16.msra.mxu0 0
        %877 = vmatprep.subr.bf16.mxu0 0
        %878 = vmatpush1.bf16.msra.mxu0 0
        %879 = vmatprep.subr.bf16.mxu0 0
        %880 = vmatpush1.bf16.msra.mxu0 0
        %881 = vmatprep.subr.bf16.mxu0 0
        %882 = vmatpush1.bf16.msra.mxu0 0
        %883 = vmatprep.subr.bf16.mxu0 0
        %884 = vmatpush1.bf16.msra.mxu0 0
        %885 = vmatprep.subr.bf16.mxu0 0
        %886 = vmatpush1.bf16.msra.mxu0 0
        %887 = vmatprep.subr.bf16.mxu0 0
        %888 = vmatpush1.bf16.msra.mxu0 0
        %889 = vmatprep.subr.bf16.mxu0 0
        %890 = vmatpush1.bf16.msra.mxu0 0
        %891 = vmatprep.subr.bf16.mxu0 0
        %892 = vmatpush1.bf16.msra.mxu0 0
        %893 = vmatprep.subr.bf16.mxu0 0
        %894 = vmatpush1.bf16.msra.mxu0 0
        %895 = vmatprep.subr.bf16.mxu0 0
        %896 = vmatpush1.bf16.msra.mxu0 0
        %897 = vmatprep.mubr.bf16.mxu0 0
        %898 = vmatmul.mubr.bf16.gmra.mrb[0].mxu0 %v863
        %v899 = vpop.f32.mrb[0].mxu0
        %v900 = vadd.f32 %v849, %v899
        %v901 = vpop.f32.mrb[0].mxu0
        %v902 = vpop.f32.mrb[0].mxu0
        %v903 = vadd.f32 %v849, %v902
        %v904 = vpop.f32.mrb[0].mxu0
        %905 = vdwg.mxu0
        %v906 = vmax.f32 %v900, 0.0
        %v907 = vmax.f32 %v903, 0.0
        %908 = vst.msk [vmem:[#allocation2] sm:$0xff] %vm293, %v906
        %909 = vst.msk [vmem:[#allocation2 + $0x8] sm:$0xff] %vm293, %v907
        %v910 = vld [vmem:[#allocation2] ss:$2 sm:$0xff]
        %v911 = vld [vmem:[%s361] ss:$2 sm:$0xff]
        %v912 = vmax.f32 %v910, %v911
        %913 = vst.msk [vmem:[#allocation2 + $0x8] sm:$0xff] %vm293, %v912
        %v914 = vld [vmem:[%s1] sm:$0xff]
        %v915 = vld [vmem:[%s4 + $0x13] sm:$0x1]
        %v916 = vlaneseq
        %v917 = vshrl.u32 %v916, 7
        %v918 = vsub.s32 0, %v917
        %v919 = vrot.slane %v915, %v918
        %v920 = vmul.f32 %v912, %v919
        %v921 = vld [vmem:[#allocation2 + $0x5] sm:$0xff]
        %v922 = vadd.s32 %v914, 4294967293
        %vm923 = vcmp.ge.s32.totalorder %v922, 0
        %vm924 = vcmp.lt.s32.totalorder %v922, 8
        %vm925 = vmand %vm923, %vm924
        %v926 = vsel %vm925, 1, 0
        %927 = vset.pattern.permute.xlu0 1
        %928 = vperm.xlu0 %927, %v926
        %v929 = vpop.permute.xlu0 %928
        %vm930 = vcmp.eq.s32.totalorder %v929, 1
        %v931 = vsel %vm930, %v921, 0.0
        %v932 = vld [vmem:[%s4 + $0x10] sm:$0x1]
        %v933 = vlaneseq
        %v934 = vshrl.u32 %v933, 7
        %v935 = vsub.s32 0, %v934
        %v936 = vrot.slane %v932, %v935
        %v937 = vmul.f32 %v931, %v936
        %v938 = vadd.f32 %v920, %v937
        %v939 = vld [vmem:[#allocation2 + $0x6] sm:$0xff]
        %v940 = vadd.s32 %v914, 4294967294
        %vm941 = vcmp.ge.s32.totalorder %v940, 0
        %vm942 = vcmp.lt.s32.totalorder %v940, 8
        %vm943 = vmand %vm941, %vm942
        %v944 = vsel %vm943, 1, 0
        %945 = vset.pattern.permute.xlu0 1
        %946 = vperm.xlu0 %945, %v944
        %v947 = vpop.permute.xlu0 %946
        %vm948 = vcmp.eq.s32.totalorder %v947, 1
        %v949 = vsel %vm948, %v939, 0.0
        %v950 = vld [vmem:[%s4 + $0x11] sm:$0x1]
        %v951 = vlaneseq
        %v952 = vshrl.u32 %v951, 7
        %v953 = vsub.s32 0, %v952
        %v954 = vrot.slane %v950, %v953
        %v955 = vmul.f32 %v949, %v954
        %v956 = vadd.f32 %v938, %v955
        %v957 = vld [vmem:[#allocation2 + $0x7] sm:$0xff]
        %v958 = vadd.s32 %v914, 4294967295
        %vm959 = vcmp.ge.s32.totalorder %v958, 0
        %vm960 = vcmp.lt.s32.totalorder %v958, 8
        %vm961 = vmand %vm959, %vm960
        %v962 = vsel %vm961, 1, 0
        %963 = vset.pattern.permute.xlu0 1
        %964 = vperm.xlu0 %963, %v962
        %v965 = vpop.permute.xlu0 %964
        %vm966 = vcmp.eq.s32.totalorder %v965, 1
        %v967 = vsel %vm966, %v957, 0.0
        %v968 = vld [vmem:[%s4 + $0x12] sm:$0x1]
        %v969 = vlaneseq
        %v970 = vshrl.u32 %v969, 7
        %v971 = vsub.s32 0, %v970
        %v972 = vrot.slane %v968, %v971
        %v973 = vmul.f32 %v967, %v972
        %v974 = vadd.f32 %v956, %v973
        %v975 = vld [vmem:[#allocation2 + $0x9] sm:$0xff]
        %v976 = vadd.s32 %v914, 1
        %vm977 = vcmp.ge.s32.totalorder %v976, 0
        %vm978 = vcmp.lt.s32.totalorder %v976, 8
        %vm979 = vmand %vm977, %vm978
        %v980 = vsel %vm979, 1, 0
        %981 = vset.pattern.permute.xlu0 1
        %982 = vperm.xlu0 %981, %v980
        %v983 = vpop.permute.xlu0 %982
        %vm984 = vcmp.eq.s32.totalorder %v983, 1
        %v985 = vsel %vm984, %v975, 0.0
        %v986 = vld [vmem:[%s4 + $0x14] sm:$0x1]
        %v987 = vlaneseq
        %v988 = vshrl.u32 %v987, 7
        %v989 = vsub.s32 0, %v988
        %v990 = vrot.slane %v986, %v989
        %v991 = vmul.f32 %v985, %v990
        %v992 = vadd.f32 %v974, %v991
        %v993 = vld [vmem:[#allocation2 + $0xa] sm:$0xff]
        %v994 = vadd.s32 %v914, 2
        %vm995 = vcmp.ge.s32.totalorder %v994, 0
        %vm996 = vcmp.lt.s32.totalorder %v994, 8
        %vm997 = vmand %vm995, %vm996
        %v998 = vsel %vm997, 1, 0
        %999 = vset.pattern.permute.xlu0 1
        %1000 = vperm.xlu0 %999, %v998
        %v1001 = vpop.permute.xlu0 %1000
        %vm1002 = vcmp.eq.s32.totalorder %v1001, 1
        %v1003 = vsel %vm1002, %v993, 0.0
        %v1004 = vld [vmem:[%s4 + $0x15] sm:$0x1]
        %v1005 = vlaneseq
        %v1006 = vshrl.u32 %v1005, 7
        %v1007 = vsub.s32 0, %v1006
        %v1008 = vrot.slane %v1004, %v1007
        %v1009 = vmul.f32 %v1003, %v1008
        %v1010 = vadd.f32 %v992, %v1009
        %v1011 = vld [vmem:[#allocation2 + $0xb] sm:$0xff]
        %v1012 = vadd.s32 %v914, 3
        %vm1013 = vcmp.ge.s32.totalorder %v1012, 0
        %vm1014 = vcmp.lt.s32.totalorder %v1012, 8
        %vm1015 = vmand %vm1013, %vm1014
        %v1016 = vsel %vm1015, 1, 0
        %1017 = vset.pattern.permute.xlu0 1
        %1018 = vperm.xlu0 %1017, %v1016
        %v1019 = vpop.permute.xlu0 %1018
        %vm1020 = vcmp.eq.s32.totalorder %v1019, 1
        %v1021 = vsel %vm1020, %v1011, 0.0
        %v1022 = vld [vmem:[%s4 + $0x16] sm:$0x1]
        %v1023 = vlaneseq
        %v1024 = vshrl.u32 %v1023, 7
        %v1025 = vsub.s32 0, %v1024
        %v1026 = vrot.slane %v1022, %v1025
        %v1027 = vmul.f32 %v1021, %v1026
        %v1028 = vadd.f32 %v1010, %v1027
        %v1029 = vld [vmem:[%s5 + $0x3] sm:$0x1]
        %v1030 = vlaneseq
        %v1031 = vshrl.u32 %v1030, 7
        %v1032 = vsub.s32 0, %v1031
        %v1033 = vrot.slane %v1029, %v1032
        %v1034 = vadd.f32 %v1028, %v1033
        %v1035 = vmax.f32 %v1034, 0.0
        %v1036 = vld [vmem:[%s3 + $0x38] sm:$0xf]
        %v1037 = vld [vmem:[%s3 + $0x3c] sm:$0xf]
        %v1038 = vld [vmem:[%s3 + $0x40] sm:$0xf]
        %v1039 = vld [vmem:[%s3 + $0x44] sm:$0xf]
        %v1040 = vld [vmem:[%s3 + $0x48] sm:$0xf]
        %v1041 = vld [vmem:[%s3 + $0x4c] sm:$0xf]
        %v1042 = vld [vmem:[%s3 + $0x50] sm:$0xf]
        %v1043 = vld [vmem:[%s3 + $0x54] sm:$0xf]
        %v1044 = vpack.c.bf16 %v1035, %v1035
        %v1045 = vld [vmem:[%s5 + $0x9] sm:$0x1]
        %v1046 = vlaneseq
        %v1047 = vshrl.u32 %v1046, 7
        %v1048 = vsub.s32 0, %v1047
        %v1049 = vrot.slane %v1045, %v1048
        %v1058 = vunpack.c.l.b16 %v1036
        %v1059 = vunpack.c.l.b16 %v1037
        %v1060 = vunpack.c.l.b16 %v1038
        %v1061 = vunpack.c.l.b16 %v1039
        %v1062 = vunpack.c.l.b16 %v1040
        %v1063 = vunpack.c.l.b16 %v1041
        %v1064 = vunpack.c.l.b16 %v1042
        %v1065 = vunpack.c.l.b16 %v1043
        %v1066 = vpack.c.b16 %v1059, %v1058
        %v1067 = vpack.c.b16 %v1061, %v1060
        %v1068 = vpack.c.b16 %v1063, %v1062
        %v1069 = vpack.c.b16 %v1065, %v1064
        %v1075 = vsel %vm293, %v1044, 0
        %1077 = vmatprep.subr.bf16.mxu0 0
        %1078 = vmatpush1.bf16.msra.mxu0 %v1066
        %1079 = vmatprep.subr.bf16.mxu0 0
        %1080 = vmatpush1.bf16.msra.mxu0 %v1067
        %1081 = vmatprep.subr.bf16.mxu0 0
        %1082 = vmatpush1.bf16.msra.mxu0 %v1068
        %1083 = vmatprep.subr.bf16.mxu0 0
        %1084 = vmatpush1.bf16.msra.mxu0 %v1069
        %1085 = vmatprep.subr.bf16.mxu0 0
        %1086 = vmatpush1.bf16.msra.mxu0 0
        %1087 = vmatprep.subr.bf16.mxu0 0
        %1088 = vmatpush1.bf16.msra.mxu0 0
        %1089 = vmatprep.subr.bf16.mxu0 0
        %1090 = vmatpush1.bf16.msra.mxu0 0
        %1091 = vmatprep.subr.bf16.mxu0 0
        %1092 = vmatpush1.bf16.msra.mxu0 0
        %1093 = vmatprep.subr.bf16.mxu0 0
        %1094 = vmatpush1.bf16.msra.mxu0 0
        %1095 = vmatprep.subr.bf16.mxu0 0
        %1096 = vmatpush1.bf16.msra.mxu0 0
        %1097 = vmatprep.subr.bf16.mxu0 0
        %1098 = vmatpush1.bf16.msra.mxu0 0
        %1099 = vmatprep.subr.bf16.mxu0 0
        %1100 = vmatpush1.bf16.msra.mxu0 0
        %1101 = vmatprep.subr.bf16.mxu0 0
        %1102 = vmatpush1.bf16.msra.mxu0 0
        %1103 = vmatprep.subr.bf16.mxu0 0
        %1104 = vmatpush1.bf16.msra.mxu0 0
        %1105 = vmatprep.subr.bf16.mxu0 0
        %1106 = vmatpush1.bf16.msra.mxu0 0
        %1107 = vmatprep.subr.bf16.mxu0 0
        %1108 = vmatpush1.bf16.msra.mxu0 0
        %1109 = vmatprep.mubr.bf16.mxu0 0
        %1110 = vmatmul.mubr.bf16.gmra.mrb[0].mxu0 %v1075
        %v1111 = vpop.f32.mrb[0].mxu0
        %v1112 = vadd.f32 %v1049, %v1111
        %v1113 = vpop.f32.mrb[0].mxu0
        %v1114 = vpop.f32.mrb[0].mxu0
        %v1115 = vpop.f32.mrb[0].mxu0
        %1116 = vdwg.mxu0
        %v1117 = vmax.f32 %v1112, 0.0
        %1118 = vst.msk [vmem:[#allocation2 + $0x8] sm:$0xff] %vm293, %v1117
        %v1119 = vld [vmem:[%s1] sm:$0xff]
        %v1120 = vld [vmem:[%s4 + $0x1b] sm:$0x1]
        %v1121 = vlaneseq
        %v1122 = vshrl.u32 %v1121, 7
        %v1123 = vsub.s32 0, %v1122
        %v1124 = vrot.slane %v1120, %v1123
        %v1125 = vmul.f32 %v1117, %v1124
        %v1126 = vld [vmem:[#allocation2 + $0x5] sm:$0xff]
        %v1127 = vadd.s32 %v1119, 4294967293
        %vm1128 = vcmp.ge.s32.totalorder %v1127, 0
        %vm1129 = vcmp.lt.s32.totalorder %v1127, 8
        %vm1130 = vmand %vm1128, %vm1129
        %v1131 = vsel %vm1130, 1, 0
        %1132 = vset.pattern.permute.xlu0 1
        %1133 = vperm.xlu0 %1132, %v1131
        %v1134 = vpop.permute.xlu0 %1133
        %vm1135 = vcmp.eq.s32.totalorder %v1134, 1
        %v1136 = vsel %vm1135, %v1126, 0.0
        %v1137 = vld [vmem:[%s4 + $0x18] sm:$0x1]
        %v1138 = vlaneseq
        %v1139 = vshrl.u32 %v1138, 7
        %v1140 = vsub.s32 0, %v1139
        %v1141 = vrot.slane %v1137, %v1140
        %v1142 = vmul.f32 %v1136, %v1141
        %v1143 = vadd.f32 %v1125, %v1142
        %v1144 = vld [vmem:[#allocation2 + $0x6] sm:$0xff]
        %v1145 = vadd.s32 %v1119, 4294967294
        %vm1146 = vcmp.ge.s32.totalorder %v1145, 0
        %vm1147 = vcmp.lt.s32.totalorder %v1145, 8
        %vm1148 = vmand %vm1146, %vm1147
        %v1149 = vsel %vm1148, 1, 0
        %1150 = vset.pattern.permute.xlu0 1
        %1151 = vperm.xlu0 %1150, %v1149
        %v1152 = vpop.permute.xlu0 %1151
        %vm1153 = vcmp.eq.s32.totalorder %v1152, 1
        %v1154 = vsel %vm1153, %v1144, 0.0
        %v1155 = vld [vmem:[%s4 + $0x19] sm:$0x1]
        %v1156 = vlaneseq
        %v1157 = vshrl.u32 %v1156, 7
        %v1158 = vsub.s32 0, %v1157
        %v1159 = vrot.slane %v1155, %v1158
        %v1160 = vmul.f32 %v1154, %v1159
        %v1161 = vadd.f32 %v1143, %v1160
        %v1162 = vld [vmem:[#allocation2 + $0x7] sm:$0xff]
        %v1163 = vadd.s32 %v1119, 4294967295
        %vm1164 = vcmp.ge.s32.totalorder %v1163, 0
        %vm1165 = vcmp.lt.s32.totalorder %v1163, 8
        %vm1166 = vmand %vm1164, %vm1165
        %v1167 = vsel %vm1166, 1, 0
        %1168 = vset.pattern.permute.xlu0 1
        %1169 = vperm.xlu0 %1168, %v1167
        %v1170 = vpop.permute.xlu0 %1169
        %vm1171 = vcmp.eq.s32.totalorder %v1170, 1
        %v1172 = vsel %vm1171, %v1162, 0.0
        %v1173 = vld [vmem:[%s4 + $0x1a] sm:$0x1]
        %v1174 = vlaneseq
        %v1175 = vshrl.u32 %v1174, 7
        %v1176 = vsub.s32 0, %v1175
        %v1177 = vrot.slane %v1173, %v1176
        %v1178 = vmul.f32 %v1172, %v1177
        %v1179 = vadd.f32 %v1161, %v1178
        %v1180 = vld [vmem:[#allocation2 + $0x9] sm:$0xff]
        %v1181 = vadd.s32 %v1119, 1
        %vm1182 = vcmp.ge.s32.totalorder %v1181, 0
        %vm1183 = vcmp.lt.s32.totalorder %v1181, 8
        %vm1184 = vmand %vm1182, %vm1183
        %v1185 = vsel %vm1184, 1, 0
        %1186 = vset.pattern.permute.xlu0 1
        %1187 = vperm.xlu0 %1186, %v1185
        %v1188 = vpop.permute.xlu0 %1187
        %vm1189 = vcmp.eq.s32.totalorder %v1188, 1
        %v1190 = vsel %vm1189, %v1180, 0.0
        %v1191 = vld [vmem:[%s4 + $0x1c] sm:$0x1]
        %v1192 = vlaneseq
        %v1193 = vshrl.u32 %v1192, 7
        %v1194 = vsub.s32 0, %v1193
        %v1195 = vrot.slane %v1191, %v1194
        %v1196 = vmul.f32 %v1190, %v1195
        %v1197 = vadd.f32 %v1179, %v1196
        %v1198 = vld [vmem:[#allocation2 + $0xa] sm:$0xff]
        %v1199 = vadd.s32 %v1119, 2
        %vm1200 = vcmp.ge.s32.totalorder %v1199, 0
        %vm1201 = vcmp.lt.s32.totalorder %v1199, 8
        %vm1202 = vmand %vm1200, %vm1201
        %v1203 = vsel %vm1202, 1, 0
        %1204 = vset.pattern.permute.xlu0 1
        %1205 = vperm.xlu0 %1204, %v1203
        %v1206 = vpop.permute.xlu0 %1205
        %vm1207 = vcmp.eq.s32.totalorder %v1206, 1
        %v1208 = vsel %vm1207, %v1198, 0.0
        %v1209 = vld [vmem:[%s4 + $0x1d] sm:$0x1]
        %v1210 = vlaneseq
        %v1211 = vshrl.u32 %v1210, 7
        %v1212 = vsub.s32 0, %v1211
        %v1213 = vrot.slane %v1209, %v1212
        %v1214 = vmul.f32 %v1208, %v1213
        %v1215 = vadd.f32 %v1197, %v1214
        %v1216 = vld [vmem:[#allocation2 + $0xb] sm:$0xff]
        %v1217 = vadd.s32 %v1119, 3
        %vm1218 = vcmp.ge.s32.totalorder %v1217, 0
        %vm1219 = vcmp.lt.s32.totalorder %v1217, 8
        %vm1220 = vmand %vm1218, %vm1219
        %v1221 = vsel %vm1220, 1, 0
        %1222 = vset.pattern.permute.xlu0 1
        %1223 = vperm.xlu0 %1222, %v1221
        %v1224 = vpop.permute.xlu0 %1223
        %vm1225 = vcmp.eq.s32.totalorder %v1224, 1
        %v1226 = vsel %vm1225, %v1216, 0.0
        %v1227 = vld [vmem:[%s4 + $0x1e] sm:$0x1]
        %v1228 = vlaneseq
        %v1229 = vshrl.u32 %v1228, 7
        %v1230 = vsub.s32 0, %v1229
        %v1231 = vrot.slane %v1227, %v1230
        %v1232 = vmul.f32 %v1226, %v1231
        %v1233 = vadd.f32 %v1215, %v1232
        %v1234 = vld [vmem:[%s5 + $0x4] sm:$0x1]
        %v1235 = vlaneseq
        %v1236 = vshrl.u32 %v1235, 7
        %v1237 = vsub.s32 0, %v1236
        %v1238 = vrot.slane %v1234, %v1237
        %v1239 = vadd.f32 %v1233, %v1238
        %v1240 = vmax.f32 %v1239, 0.0
        %v1241 = vld [vmem:[%s3 + $0x58] sm:$0xf]
        %v1242 = vld [vmem:[%s3 + $0x5c] sm:$0xf]
        %v1243 = vld [vmem:[%s3 + $0x60] sm:$0xf]
        %v1244 = vld [vmem:[%s3 + $0x64] sm:$0xf]
        %v1245 = vld [vmem:[%s3 + $0x68] sm:$0xf]
        %v1246 = vld [vmem:[%s3 + $0x6c] sm:$0xf]
        %v1247 = vld [vmem:[%s3 + $0x70] sm:$0xf]
        %v1248 = vld [vmem:[%s3 + $0x74] sm:$0xf]
        %v1249 = vpack.c.bf16 %v1240, %v1240
        %v1250 = vld [vmem:[%s5 + $0xa] sm:$0x1]
        %v1251 = vlaneseq
        %v1252 = vshrl.u32 %v1251, 7
        %v1253 = vsub.s32 0, %v1252
        %v1254 = vrot.slane %v1250, %v1253
        %v1263 = vunpack.c.l.b16 %v1241
        %v1264 = vunpack.c.l.b16 %v1242
        %v1265 = vunpack.c.l.b16 %v1243
        %v1266 = vunpack.c.l.b16 %v1244
        %v1267 = vunpack.c.l.b16 %v1245
        %v1268 = vunpack.c.l.b16 %v1246
        %v1269 = vunpack.c.l.b16 %v1247
        %v1270 = vunpack.c.l.b16 %v1248
        %v1271 = vpack.c.b16 %v1264, %v1263
        %v1272 = vpack.c.b16 %v1266, %v1265
        %v1273 = vpack.c.b16 %v1268, %v1267
        %v1274 = vpack.c.b16 %v1270, %v1269
        %v1280 = vsel %vm293, %v1249, 0
        %1282 = vmatprep.subr.bf16.mxu0 0
        %1283 = vmatpush1.bf16.msra.mxu0 %v1271
        %1284 = vmatprep.subr.bf16.mxu0 0
        %1285 = vmatpush1.bf16.msra.mxu0 %v1272
        %1286 = vmatprep.subr.bf16.mxu0 0
        %1287 = vmatpush1.bf16.msra.mxu0 %v1273
        %1288 = vmatprep.subr.bf16.mxu0 0
        %1289 = vmatpush1.bf16.msra.mxu0 %v1274
        %1290 = vmatprep.subr.bf16.mxu0 0
        %1291 = vmatpush1.bf16.msra.mxu0 0
        %1292 = vmatprep.subr.bf16.mxu0 0
        %1293 = vmatpush1.bf16.msra.mxu0 0
        %1294 = vmatprep.subr.bf16.mxu0 0
        %1295 = vmatpush1.bf16.msra.mxu0 0
        %1296 = vmatprep.subr.bf16.mxu0 0
        %1297 = vmatpush1.bf16.msra.mxu0 0
        %1298 = vmatprep.subr.bf16.mxu0 0
        %1299 = vmatpush1.bf16.msra.mxu0 0
        %1300 = vmatprep.subr.bf16.mxu0 0
        %1301 = vmatpush1.bf16.msra.mxu0 0
        %1302 = vmatprep.subr.bf16.mxu0 0
        %1303 = vmatpush1.bf16.msra.mxu0 0
        %1304 = vmatprep.subr.bf16.mxu0 0
        %1305 = vmatpush1.bf16.msra.mxu0 0
        %1306 = vmatprep.subr.bf16.mxu0 0
        %1307 = vmatpush1.bf16.msra.mxu0 0
        %1308 = vmatprep.subr.bf16.mxu0 0
        %1309 = vmatpush1.bf16.msra.mxu0 0
        %1310 = vmatprep.subr.bf16.mxu0 0
        %1311 = vmatpush1.bf16.msra.mxu0 0
        %1312 = vmatprep.subr.bf16.mxu0 0
        %1313 = vmatpush1.bf16.msra.mxu0 0
        %1314 = vmatprep.mubr.bf16.mxu0 0
        %1315 = vmatmul.mubr.bf16.gmra.mrb[0].mxu0 %v1280
        %v1316 = vpop.f32.mrb[0].mxu0
        %v1317 = vadd.f32 %v1254, %v1316
        %v1318 = vpop.f32.mrb[0].mxu0
        %v1319 = vpop.f32.mrb[0].mxu0
        %v1320 = vpop.f32.mrb[0].mxu0
        %1321 = vdwg.mxu0
        %v1322 = vmax.f32 %v1317, 0.0
        %1323 = vst.msk [vmem:[#allocation2 + $0x8] sm:$0xff] %vm293, %v1322
        %v1324 = vld [vmem:[%s1] sm:$0xff]
        %v1325 = vld [vmem:[%s4 + $0x23] sm:$0x1]
        %v1326 = vlaneseq
        %v1327 = vshrl.u32 %v1326, 7
        %v1328 = vsub.s32 0, %v1327
        %v1329 = vrot.slane %v1325, %v1328
        %v1330 = vmul.f32 %v1322, %v1329
        %v1331 = vld [vmem:[#allocation2 + $0x5] sm:$0xff]
        %v1332 = vadd.s32 %v1324, 4294967293
        %vm1333 = vcmp.ge.s32.totalorder %v1332, 0
        %vm1334 = vcmp.lt.s32.totalorder %v1332, 8
        %vm1335 = vmand %vm1333, %vm1334
        %v1336 = vsel %vm1335, 1, 0
        %1337 = vset.pattern.permute.xlu0 1
        %1338 = vperm.xlu0 %1337, %v1336
        %v1339 = vpop.permute.xlu0 %1338
        %vm1340 = vcmp.eq.s32.totalorder %v1339, 1
        %v1341 = vsel %vm1340, %v1331, 0.0
        %v1342 = vld [vmem:[%s4 + $0x20] sm:$0x1]
        %v1343 = vlaneseq
        %v1344 = vshrl.u32 %v1343, 7
        %v1345 = vsub.s32 0, %v1344
        %v1346 = vrot.slane %v1342, %v1345
        %v1347 = vmul.f32 %v1341, %v1346
        %v1348 = vadd.f32 %v1330, %v1347
        %v1349 = vld [vmem:[#allocation2 + $0x6] sm:$0xff]
        %v1350 = vadd.s32 %v1324, 4294967294
        %vm1351 = vcmp.ge.s32.totalorder %v1350, 0
        %vm1352 = vcmp.lt.s32.totalorder %v1350, 8
        %vm1353 = vmand %vm1351, %vm1352
        %v1354 = vsel %vm1353, 1, 0
        %1355 = vset.pattern.permute.xlu0 1
        %1356 = vperm.xlu0 %1355, %v1354
        %v1357 = vpop.permute.xlu0 %1356
        %vm1358 = vcmp.eq.s32.totalorder %v1357, 1
        %v1359 = vsel %vm1358, %v1349, 0.0
        %v1360 = vld [vmem:[%s4 + $0x21] sm:$0x1]
        %v1361 = vlaneseq
        %v1362 = vshrl.u32 %v1361, 7
        %v1363 = vsub.s32 0, %v1362
        %v1364 = vrot.slane %v1360, %v1363
        %v1365 = vmul.f32 %v1359, %v1364
        %v1366 = vadd.f32 %v1348, %v1365
        %v1367 = vld [vmem:[#allocation2 + $0x7] sm:$0xff]
        %v1368 = vadd.s32 %v1324, 4294967295
        %vm1369 = vcmp.ge.s32.totalorder %v1368, 0
        %vm1370 = vcmp.lt.s32.totalorder %v1368, 8
        %vm1371 = vmand %vm1369, %vm1370
        %v1372 = vsel %vm1371, 1, 0
        %1373 = vset.pattern.permute.xlu0 1
        %1374 = vperm.xlu0 %1373, %v1372
        %v1375 = vpop.permute.xlu0 %1374
        %vm1376 = vcmp.eq.s32.totalorder %v1375, 1
        %v1377 = vsel %vm1376, %v1367, 0.0
        %v1378 = vld [vmem:[%s4 + $0x22] sm:$0x1]
        %v1379 = vlaneseq
        %v1380 = vshrl.u32 %v1379, 7
        %v1381 = vsub.s32 0, %v1380
        %v1382 = vrot.slane %v1378, %v1381
        %v1383 = vmul.f32 %v1377, %v1382
        %v1384 = vadd.f32 %v1366, %v1383
        %v1385 = vld [vmem:[#allocation2 + $0x9] sm:$0xff]
        %v1386 = vadd.s32 %v1324, 1
        %vm1387 = vcmp.ge.s32.totalorder %v1386, 0
        %vm1388 = vcmp.lt.s32.totalorder %v1386, 8
        %vm1389 = vmand %vm1387, %vm1388
        %v1390 = vsel %vm1389, 1, 0
        %1391 = vset.pattern.permute.xlu0 1
        %1392 = vperm.xlu0 %1391, %v1390
        %v1393 = vpop.permute.xlu0 %1392
        %vm1394 = vcmp.eq.s32.totalorder %v1393, 1
        %v1395 = vsel %vm1394, %v1385, 0.0
        %v1396 = vld [vmem:[%s4 + $0x24] sm:$0x1]
        %v1397 = vlaneseq
        %v1398 = vshrl.u32 %v1397, 7
        %v1399 = vsub.s32 0, %v1398
        %v1400 = vrot.slane %v1396, %v1399
        %v1401 = vmul.f32 %v1395, %v1400
        %v1402 = vadd.f32 %v1384, %v1401
        %v1403 = vld [vmem:[#allocation2 + $0xa] sm:$0xff]
        %v1404 = vadd.s32 %v1324, 2
        %vm1405 = vcmp.ge.s32.totalorder %v1404, 0
        %vm1406 = vcmp.lt.s32.totalorder %v1404, 8
        %vm1407 = vmand %vm1405, %vm1406
        %v1408 = vsel %vm1407, 1, 0
        %1409 = vset.pattern.permute.xlu0 1
        %1410 = vperm.xlu0 %1409, %v1408
        %v1411 = vpop.permute.xlu0 %1410
        %vm1412 = vcmp.eq.s32.totalorder %v1411, 1
        %v1413 = vsel %vm1412, %v1403, 0.0
        %v1414 = vld [vmem:[%s4 + $0x25] sm:$0x1]
        %v1415 = vlaneseq
        %v1416 = vshrl.u32 %v1415, 7
        %v1417 = vsub.s32 0, %v1416
        %v1418 = vrot.slane %v1414, %v1417
        %v1419 = vmul.f32 %v1413, %v1418
        %v1420 = vadd.f32 %v1402, %v1419
        %v1421 = vld [vmem:[#allocation2 + $0xb] sm:$0xff]
        %v1422 = vadd.s32 %v1324, 3
        %vm1423 = vcmp.ge.s32.totalorder %v1422, 0
        %vm1424 = vcmp.lt.s32.totalorder %v1422, 8
        %vm1425 = vmand %vm1423, %vm1424
        %v1426 = vsel %vm1425, 1, 0
        %1427 = vset.pattern.permute.xlu0 1
        %1428 = vperm.xlu0 %1427, %v1426
        %v1429 = vpop.permute.xlu0 %1428
        %vm1430 = vcmp.eq.s32.totalorder %v1429, 1
        %v1431 = vsel %vm1430, %v1421, 0.0
        %v1432 = vld [vmem:[%s4 + $0x26] sm:$0x1]
        %v1433 = vlaneseq
        %v1434 = vshrl.u32 %v1433, 7
        %v1435 = vsub.s32 0, %v1434
        %v1436 = vrot.slane %v1432, %v1435
        %v1437 = vmul.f32 %v1431, %v1436
        %v1438 = vadd.f32 %v1420, %v1437
        %v1439 = vld [vmem:[%s5 + $0x5] sm:$0x1]
        %v1440 = vlaneseq
        %v1441 = vshrl.u32 %v1440, 7
        %v1442 = vsub.s32 0, %v1441
        %v1443 = vrot.slane %v1439, %v1442
        %v1444 = vadd.f32 %v1438, %v1443
        %v1445 = vmax.f32 %v1444, 0.0
        %v1446 = vld [vmem:[%s3 + $0x78] sm:$0xf]
        %v1447 = vld [vmem:[%s3 + $0x7c] sm:$0xf]
        %v1448 = vld [vmem:[%s3 + $0x80] sm:$0xf]
        %v1449 = vld [vmem:[%s3 + $0x84] sm:$0xf]
        %v1450 = vld [vmem:[%s3 + $0x88] sm:$0xf]
        %v1451 = vld [vmem:[%s3 + $0x8c] sm:$0xf]
        %v1452 = vld [vmem:[%s3 + $0x90] sm:$0xf]
        %v1453 = vld [vmem:[%s3 + $0x94] sm:$0xf]
        %v1454 = vpack.c.bf16 %v1445, %v1445
        %v1455 = vld [vmem:[%s5 + $0xb] sm:$0x1]
        %v1456 = vlaneseq
        %v1457 = vshrl.u32 %v1456, 7
        %v1458 = vsub.s32 0, %v1457
        %v1459 = vrot.slane %v1455, %v1458
        %v1468 = vunpack.c.l.b16 %v1446
        %v1469 = vunpack.c.l.b16 %v1447
        %v1470 = vunpack.c.l.b16 %v1448
        %v1471 = vunpack.c.l.b16 %v1449
        %v1472 = vunpack.c.l.b16 %v1450
        %v1473 = vunpack.c.l.b16 %v1451
        %v1474 = vunpack.c.l.b16 %v1452
        %v1475 = vunpack.c.l.b16 %v1453
        %v1476 = vpack.c.b16 %v1469, %v1468
        %v1477 = vpack.c.b16 %v1471, %v1470
        %v1478 = vpack.c.b16 %v1473, %v1472
        %v1479 = vpack.c.b16 %v1475, %v1474
        %v1485 = vsel %vm293, %v1454, 0
        %1487 = vmatprep.subr.bf16.mxu0 0
        %1488 = vmatpush1.bf16.msra.mxu0 %v1476
        %1489 = vmatprep.subr.bf16.mxu0 0
        %1490 = vmatpush1.bf16.msra.mxu0 %v1477
        %1491 = vmatprep.subr.bf16.mxu0 0
        %1492 = vmatpush1.bf16.msra.mxu0 %v1478
        %1493 = vmatprep.subr.bf16.mxu0 0
        %1494 = vmatpush1.bf16.msra.mxu0 %v1479
        %1495 = vmatprep.subr.bf16.mxu0 0
        %1496 = vmatpush1.bf16.msra.mxu0 0
        %1497 = vmatprep.subr.bf16.mxu0 0
        %1498 = vmatpush1.bf16.msra.mxu0 0
        %1499 = vmatprep.subr.bf16.mxu0 0
        %1500 = vmatpush1.bf16.msra.mxu0 0
        %1501 = vmatprep.subr.bf16.mxu0 0
        %1502 = vmatpush1.bf16.msra.mxu0 0
        %1503 = vmatprep.subr.bf16.mxu0 0
        %1504 = vmatpush1.bf16.msra.mxu0 0
        %1505 = vmatprep.subr.bf16.mxu0 0
        %1506 = vmatpush1.bf16.msra.mxu0 0
        %1507 = vmatprep.subr.bf16.mxu0 0
        %1508 = vmatpush1.bf16.msra.mxu0 0
        %1509 = vmatprep.subr.bf16.mxu0 0
        %1510 = vmatpush1.bf16.msra.mxu0 0
        %1511 = vmatprep.subr.bf16.mxu0 0
        %1512 = vmatpush1.bf16.msra.mxu0 0
        %1513 = vmatprep.subr.bf16.mxu0 0
        %1514 = vmatpush1.bf16.msra.mxu0 0
        %1515 = vmatprep.subr.bf16.mxu0 0
        %1516 = vmatpush1.bf16.msra.mxu0 0
        %1517 = vmatprep.subr.bf16.mxu0 0
        %1518 = vmatpush1.bf16.msra.mxu0 0
        %1519 = vmatprep.mubr.bf16.mxu0 0
        %1520 = vmatmul.mubr.bf16.gmra.mrb[0].mxu0 %v1485
        %v1521 = vpop.f32.mrb[0].mxu0
        %v1522 = vadd.f32 %v1459, %v1521
        %v1523 = vpop.f32.mrb[0].mxu0
        %v1524 = vpop.f32.mrb[0].mxu0
        %v1525 = vpop.f32.mrb[0].mxu0
        %1526 = vdwg.mxu0
        %v1527 = vmax.f32 %v1522, 0.0
        %1528 = vst.msk [vmem:[#allocation2 + $0x8] sm:$0xff] %vm293, %v1527
        %v1529 = vld [vmem:[%s1] sm:$0xff]
        %v1530 = vld [vmem:[%s4 + $0x2b] sm:$0x1]
        %v1531 = vlaneseq
        %v1532 = vshrl.u32 %v1531, 7
        %v1533 = vsub.s32 0, %v1532
        %v1534 = vrot.slane %v1530, %v1533
        %v1535 = vmul.f32 %v1527, %v1534
        %v1536 = vld [vmem:[#allocation2 + $0x5] sm:$0xff]
        %v1537 = vadd.s32 %v1529, 4294967293
        %vm1538 = vcmp.ge.s32.totalorder %v1537, 0
        %vm1539 = vcmp.lt.s32.totalorder %v1537, 8
        %vm1540 = vmand %vm1538, %vm1539
        %v1541 = vsel %vm1540, 1, 0
        %1542 = vset.pattern.permute.xlu0 1
        %1543 = vperm.xlu0 %1542, %v1541
        %v1544 = vpop.permute.xlu0 %1543
        %vm1545 = vcmp.eq.s32.totalorder %v1544, 1
        %v1546 = vsel %vm1545, %v1536, 0.0
        %v1547 = vld [vmem:[%s4 + $0x28] sm:$0x1]
        %v1548 = vlaneseq
        %v1549 = vshrl.u32 %v1548, 7
        %v1550 = vsub.s32 0, %v1549
        %v1551 = vrot.slane %v1547, %v1550
        %v1552 = vmul.f32 %v1546, %v1551
        %v1553 = vadd.f32 %v1535, %v1552
        %v1554 = vld [vmem:[#allocation2 + $0x6] sm:$0xff]
        %v1555 = vadd.s32 %v1529, 4294967294
        %vm1556 = vcmp.ge.s32.totalorder %v1555, 0
        %vm1557 = vcmp.lt.s32.totalorder %v1555, 8
        %vm1558 = vmand %vm1556, %vm1557
        %v1559 = vsel %vm1558, 1, 0
        %1560 = vset.pattern.permute.xlu0 1
        %1561 = vperm.xlu0 %1560, %v1559
        %v1562 = vpop.permute.xlu0 %1561
        %vm1563 = vcmp.eq.s32.totalorder %v1562, 1
        %v1564 = vsel %vm1563, %v1554, 0.0
        %v1565 = vld [vmem:[%s4 + $0x29] sm:$0x1]
        %v1566 = vlaneseq
        %v1567 = vshrl.u32 %v1566, 7
        %v1568 = vsub.s32 0, %v1567
        %v1569 = vrot.slane %v1565, %v1568
        %v1570 = vmul.f32 %v1564, %v1569
        %v1571 = vadd.f32 %v1553, %v1570
        %v1572 = vld [vmem:[#allocation2 + $0x7] sm:$0xff]
        %v1573 = vadd.s32 %v1529, 4294967295
        %vm1574 = vcmp.ge.s32.totalorder %v1573, 0
        %vm1575 = vcmp.lt.s32.totalorder %v1573, 8
        %vm1576 = vmand %vm1574, %vm1575
        %v1577 = vsel %vm1576, 1, 0
        %1578 = vset.pattern.permute.xlu0 1
        %1579 = vperm.xlu0 %1578, %v1577
        %v1580 = vpop.permute.xlu0 %1579
        %vm1581 = vcmp.eq.s32.totalorder %v1580, 1
        %v1582 = vsel %vm1581, %v1572, 0.0
        %v1583 = vld [vmem:[%s4 + $0x2a] sm:$0x1]
        %v1584 = vlaneseq
        %v1585 = vshrl.u32 %v1584, 7
        %v1586 = vsub.s32 0, %v1585
        %v1587 = vrot.slane %v1583, %v1586
        %v1588 = vmul.f32 %v1582, %v1587
        %v1589 = vadd.f32 %v1571, %v1588
        %v1590 = vld [vmem:[#allocation2 + $0x9] sm:$0xff]
        %v1591 = vadd.s32 %v1529, 1
        %vm1592 = vcmp.ge.s32.totalorder %v1591, 0
        %vm1593 = vcmp.lt.s32.totalorder %v1591, 8
        %vm1594 = vmand %vm1592, %vm1593
        %v1595 = vsel %vm1594, 1, 0
        %1596 = vset.pattern.permute.xlu0 1
        %1597 = vperm.xlu0 %1596, %v1595
        %v1598 = vpop.permute.xlu0 %1597
        %vm1599 = vcmp.eq.s32.totalorder %v1598, 1
        %v1600 = vsel %vm1599, %v1590, 0.0
        %v1601 = vld [vmem:[%s4 + $0x2c] sm:$0x1]
        %v1602 = vlaneseq
        %v1603 = vshrl.u32 %v1602, 7
        %v1604 = vsub.s32 0, %v1603
        %v1605 = vrot.slane %v1601, %v1604
        %v1606 = vmul.f32 %v1600, %v1605
        %v1607 = vadd.f32 %v1589, %v1606
        %v1608 = vld [vmem:[#allocation2 + $0xa] sm:$0xff]
        %v1609 = vadd.s32 %v1529, 2
        %vm1610 = vcmp.ge.s32.totalorder %v1609, 0
        %vm1611 = vcmp.lt.s32.totalorder %v1609, 8
        %vm1612 = vmand %vm1610, %vm1611
        %v1613 = vsel %vm1612, 1, 0
        %1614 = vset.pattern.permute.xlu0 1
        %1615 = vperm.xlu0 %1614, %v1613
        %v1616 = vpop.permute.xlu0 %1615
        %vm1617 = vcmp.eq.s32.totalorder %v1616, 1
        %v1618 = vsel %vm1617, %v1608, 0.0
        %v1619 = vld [vmem:[%s4 + $0x2d] sm:$0x1]
        %v1620 = vlaneseq
        %v1621 = vshrl.u32 %v1620, 7
        %v1622 = vsub.s32 0, %v1621
        %v1623 = vrot.slane %v1619, %v1622
        %v1624 = vmul.f32 %v1618, %v1623
        %v1625 = vadd.f32 %v1607, %v1624
        %v1626 = vld [vmem:[#allocation2 + $0xb] sm:$0xff]
        %v1627 = vadd.s32 %v1529, 3
        %vm1628 = vcmp.ge.s32.totalorder %v1627, 0
        %vm1629 = vcmp.lt.s32.totalorder %v1627, 8
        %vm1630 = vmand %vm1628, %vm1629
        %v1631 = vsel %vm1630, 1, 0
        %1632 = vset.pattern.permute.xlu0 1
        %1633 = vperm.xlu0 %1632, %v1631
        %v1634 = vpop.permute.xlu0 %1633
        %vm1635 = vcmp.eq.s32.totalorder %v1634, 1
        %v1636 = vsel %vm1635, %v1626, 0.0
        %v1637 = vld [vmem:[%s4 + $0x2e] sm:$0x1]
        %v1638 = vlaneseq
        %v1639 = vshrl.u32 %v1638, 7
        %v1640 = vsub.s32 0, %v1639
        %v1641 = vrot.slane %v1637, %v1640
        %v1642 = vmul.f32 %v1636, %v1641
        %v1643 = vadd.f32 %v1625, %v1642
        %v1644 = vld [vmem:[%s5 + $0x6] sm:$0x1]
        %v1645 = vlaneseq
        %v1646 = vshrl.u32 %v1645, 7
        %v1647 = vsub.s32 0, %v1646
        %v1648 = vrot.slane %v1644, %v1647
        %v1649 = vadd.f32 %v1643, %v1648
        %v1650 = vmax.f32 %v1649, 0.0
        %v1651 = vld [vmem:[%s3 + $0x98] sm:$0xf]
        %v1652 = vld [vmem:[%s3 + $0x9c] sm:$0xf]
        %v1653 = vld [vmem:[%s3 + $0xa0] sm:$0xf]
        %v1654 = vld [vmem:[%s3 + $0xa4] sm:$0xf]
        %v1655 = vld [vmem:[%s3 + $0xa8] sm:$0xf]
        %v1656 = vld [vmem:[%s3 + $0xac] sm:$0xf]
        %v1657 = vld [vmem:[%s3 + $0xb0] sm:$0xf]
        %v1658 = vld [vmem:[%s3 + $0xb4] sm:$0xf]
        %v1659 = vpack.c.bf16 %v1650, %v1650
        %v1660 = vld [vmem:[%s5 + $0xc] sm:$0x1]
        %v1661 = vlaneseq
        %v1662 = vshrl.u32 %v1661, 7
        %v1663 = vsub.s32 0, %v1662
        %v1664 = vrot.slane %v1660, %v1663
        %v1673 = vunpack.c.l.b16 %v1651
        %v1674 = vunpack.c.l.b16 %v1652
        %v1675 = vunpack.c.l.b16 %v1653
        %v1676 = vunpack.c.l.b16 %v1654
        %v1677 = vunpack.c.l.b16 %v1655
        %v1678 = vunpack.c.l.b16 %v1656
        %v1679 = vunpack.c.l.b16 %v1657
        %v1680 = vunpack.c.l.b16 %v1658
        %v1681 = vpack.c.b16 %v1674, %v1673
        %v1682 = vpack.c.b16 %v1676, %v1675
        %v1683 = vpack.c.b16 %v1678, %v1677
        %v1684 = vpack.c.b16 %v1680, %v1679
        %v1690 = vsel %vm293, %v1659, 0
        %1692 = vmatprep.subr.bf16.mxu0 0
        %1693 = vmatpush1.bf16.msra.mxu0 %v1681
        %1694 = vmatprep.subr.bf16.mxu0 0
        %1695 = vmatpush1.bf16.msra.mxu0 %v1682
        %1696 = vmatprep.subr.bf16.mxu0 0
        %1697 = vmatpush1.bf16.msra.mxu0 %v1683
        %1698 = vmatprep.subr.bf16.mxu0 0
        %1699 = vmatpush1.bf16.msra.mxu0 %v1684
        %1700 = vmatprep.subr.bf16.mxu0 0
        %1701 = vmatpush1.bf16.msra.mxu0 0
        %1702 = vmatprep.subr.bf16.mxu0 0
        %1703 = vmatpush1.bf16.msra.mxu0 0
        %1704 = vmatprep.subr.bf16.mxu0 0
        %1705 = vmatpush1.bf16.msra.mxu0 0
        %1706 = vmatprep.subr.bf16.mxu0 0
        %1707 = vmatpush1.bf16.msra.mxu0 0
        %1708 = vmatprep.subr.bf16.mxu0 0
        %1709 = vmatpush1.bf16.msra.mxu0 0
        %1710 = vmatprep.subr.bf16.mxu0 0
        %1711 = vmatpush1.bf16.msra.mxu0 0
        %1712 = vmatprep.subr.bf16.mxu0 0
        %1713 = vmatpush1.bf16.msra.mxu0 0
        %1714 = vmatprep.subr.bf16.mxu0 0
        %1715 = vmatpush1.bf16.msra.mxu0 0
        %1716 = vmatprep.subr.bf16.mxu0 0
        %1717 = vmatpush1.bf16.msra.mxu0 0
        %1718 = vmatprep.subr.bf16.mxu0 0
        %1719 = vmatpush1.bf16.msra.mxu0 0
        %1720 = vmatprep.subr.bf16.mxu0 0
        %1721 = vmatpush1.bf16.msra.mxu0 0
        %1722 = vmatprep.subr.bf16.mxu0 0
        %1723 = vmatpush1.bf16.msra.mxu0 0
        %1724 = vmatprep.mubr.bf16.mxu0 0
        %1725 = vmatmul.mubr.bf16.gmra.mrb[0].mxu0 %v1690
        %v1726 = vpop.f32.mrb[0].mxu0
        %v1727 = vadd.f32 %v1664, %v1726
        %v1728 = vpop.f32.mrb[0].mxu0
        %v1729 = vpop.f32.mrb[0].mxu0
        %v1730 = vpop.f32.mrb[0].mxu0
        %1731 = vdwg.mxu0
        %v1732 = vmax.f32 %v1727, 0.0
        %1733 = vst.msk [vmem:[#allocation2] sm:$0xff] %vm293, %v1732
        %v1734 = vld [vmem:[#allocation2] ss:$2 sm:$0xf]
        %v1735 = vld [vmem:[%s361] ss:$2 sm:$0xf]
        %v1736 = vmax.f32 %v1734, %v1735
        %vm1737 = vcmask 519168
        %1738 = vst.msk [vmem:[#allocation2 + $0x8] sm:$0xf] %vm1737, %v1736
        %v1739 = vld [vmem:[%s3 + $0xb8] sm:$0xf]
        %v1740 = vld [vmem:[%s3 + $0xbc] sm:$0xf]
        %v1741 = vld [vmem:[%s3 + $0xc0] sm:$0xf]
        %v1742 = vld [vmem:[%s3 + $0xc4] sm:$0xf]
        %v1743 = vld [vmem:[%s3 + $0xc8] sm:$0xf]
        %v1744 = vld [vmem:[%s3 + $0xcc] sm:$0xf]
        %v1745 = vld [vmem:[%s3 + $0xd0] sm:$0xf]
        %v1746 = vld [vmem:[%s3 + $0xd4] sm:$0xf]
        %v1747 = vld [vmem:[%s3 + $0xd8] sm:$0xf]
        %v1748 = vld [vmem:[%s3 + $0xdc] sm:$0xf]
        %v1749 = vld [vmem:[%s3 + $0xe0] sm:$0xf]
        %v1750 = vld [vmem:[%s3 + $0xe4] sm:$0xf]
        %v1751 = vld [vmem:[%s3 + $0xe8] sm:$0xf]
        %v1752 = vld [vmem:[%s3 + $0xec] sm:$0xf]
        %v1753 = vld [vmem:[%s3 + $0xf0] sm:$0xf]
        %v1754 = vld [vmem:[%s3 + $0xf4] sm:$0xf]
        %v1755 = vld [vmem:[%s3 + $0xf8] sm:$0xf]
        %v1756 = vld [vmem:[%s3 + $0xfc] sm:$0xf]
        %v1757 = vld [vmem:[%s3 + $0x100] sm:$0xf]
        %v1758 = vld [vmem:[%s3 + $0x104] sm:$0xf]
        %v1759 = vld [vmem:[%s3 + $0x108] sm:$0xf]
        %v1760 = vld [vmem:[%s3 + $0x10c] sm:$0xf]
        %v1761 = vld [vmem:[%s3 + $0x110] sm:$0xf]
        %v1762 = vld [vmem:[%s3 + $0x114] sm:$0xf]
        %v1763 = vpack.c.bf16 %v1736, %v1736
        %v1764 = vld [vmem:[#allocation2 + $0x9] sm:$0xf]
        %v1765 = vpack.c.bf16 %v1764, %v1764
        %v1774 = vunpack.c.l.b16 %v1747
        %v1775 = vunpack.c.l.b16 %v1748
        %v1776 = vunpack.c.l.b16 %v1749
        %v1777 = vunpack.c.l.b16 %v1750
        %v1778 = vunpack.c.l.b16 %v1751
        %v1779 = vunpack.c.l.b16 %v1752
        %v1780 = vunpack.c.l.b16 %v1753
        %v1781 = vunpack.c.l.b16 %v1754
        %v1782 = vpack.c.b16 %v1775, %v1774
        %v1783 = vpack.c.b16 %v1777, %v1776
        %v1784 = vpack.c.b16 %v1779, %v1778
        %v1785 = vpack.c.b16 %v1781, %v1780
        %v1791 = vsel %vm293, %v1765, 0
        %1793 = vmatprep.subr.bf16.mxu0 0
        %1794 = vmatpush1.bf16.msra.mxu0 %v1782
        %1795 = vmatprep.subr.bf16.mxu0 0
        %1796 = vmatpush1.bf16.msra.mxu0 %v1783
        %1797 = vmatprep.subr.bf16.mxu0 0
        %1798 = vmatpush1.bf16.msra.mxu0 %v1784
        %1799 = vmatprep.subr.bf16.mxu0 0
        %1800 = vmatpush1.bf16.msra.mxu0 %v1785
        %1801 = vmatprep.subr.bf16.mxu0 0
        %1802 = vmatpush1.bf16.msra.mxu0 0
        %1803 = vmatprep.subr.bf16.mxu0 0
        %1804 = vmatpush1.bf16.msra.mxu0 0
        %1805 = vmatprep.subr.bf16.mxu0 0
        %1806 = vmatpush1.bf16.msra.mxu0 0
        %1807 = vmatprep.subr.bf16.mxu0 0
        %1808 = vmatpush1.bf16.msra.mxu0 0
        %1809 = vmatprep.subr.bf16.mxu0 0
        %1810 = vmatpush1.bf16.msra.mxu0 0
        %1811 = vmatprep.subr.bf16.mxu0 0
        %1812 = vmatpush1.bf16.msra.mxu0 0
        %1813 = vmatprep.subr.bf16.mxu0 0
        %1814 = vmatpush1.bf16.msra.mxu0 0
        %1815 = vmatprep.subr.bf16.mxu0 0
        %1816 = vmatpush1.bf16.msra.mxu0 0
        %1817 = vmatprep.subr.bf16.mxu0 0
        %1818 = vmatpush1.bf16.msra.mxu0 0
        %1819 = vmatprep.subr.bf16.mxu0 0
        %1820 = vmatpush1.bf16.msra.mxu0 0
        %1821 = vmatprep.subr.bf16.mxu0 0
        %1822 = vmatpush1.bf16.msra.mxu0 0
        %1823 = vmatprep.subr.bf16.mxu0 0
        %1824 = vmatpush1.bf16.msra.mxu0 0
        %1825 = vmatprep.mubr.bf16.mxu0 0
        %1826 = vmatmul.mubr.bf16.gmra.mrb[0].mxu0 %v1791
        %v1827 = vpop.f32.mrb[0].mxu0
        %v1828 = vadd.f32 0.0, %v1827
        %v1829 = vpop.f32.mrb[0].mxu0
        %v1830 = vpop.f32.mrb[0].mxu0
        %v1831 = vpop.f32.mrb[0].mxu0
        %1832 = vdwg.mxu0
        %v1841 = vunpack.c.l.b16 %v1739
        %v1842 = vunpack.c.l.b16 %v1740
        %v1843 = vunpack.c.l.b16 %v1741
        %v1844 = vunpack.c.l.b16 %v1742
        %v1845 = vunpack.c.l.b16 %v1743
        %v1846 = vunpack.c.l.b16 %v1744
        %v1847 = vunpack.c.l.b16 %v1745
        %v1848 = vunpack.c.l.b16 %v1746
        %v1849 = vpack.c.b16 %v1842, %v1841
        %v1850 = vpack.c.b16 %v1844, %v1843
        %v1851 = vpack.c.b16 %v1846, %v1845
        %v1852 = vpack.c.b16 %v1848, %v1847
        %v1858 = vsel %vm293, %v1763, 0
        %1860 = vmatprep.subr.bf16.mxu0 0
        %1861 = vmatpush1.bf16.msra.mxu0 %v1849
        %1862 = vmatprep.subr.bf16.mxu0 0
        %1863 = vmatpush1.bf16.msra.mxu0 %v1850
        %1864 = vmatprep.subr.bf16.mxu0 0
        %1865 = vmatpush1.bf16.msra.mxu0 %v1851
        %1866 = vmatprep.subr.bf16.mxu0 0
        %1867 = vmatpush1.bf16.msra.mxu0 %v1852
        %1868 = vmatprep.subr.bf16.mxu0 0
        %1869 = vmatpush1.bf16.msra.mxu0 0
        %1870 = vmatprep.subr.bf16.mxu0 0
        %1871 = vmatpush1.bf16.msra.mxu0 0
        %1872 = vmatprep.subr.bf16.mxu0 0
        %1873 = vmatpush1.bf16.msra.mxu0 0
        %1874 = vmatprep.subr.bf16.mxu0 0
        %1875 = vmatpush1.bf16.msra.mxu0 0
        %1876 = vmatprep.subr.bf16.mxu0 0
        %1877 = vmatpush1.bf16.msra.mxu0 0
        %1878 = vmatprep.subr.bf16.mxu0 0
        %1879 = vmatpush1.bf16.msra.mxu0 0
        %1880 = vmatprep.subr.bf16.mxu0 0
        %1881 = vmatpush1.bf16.msra.mxu0 0
        %1882 = vmatprep.subr.bf16.mxu0 0
        %1883 = vmatpush1.bf16.msra.mxu0 0
        %1884 = vmatprep.subr.bf16.mxu0 0
        %1885 = vmatpush1.bf16.msra.mxu0 0
        %1886 = vmatprep.subr.bf16.mxu0 0
        %1887 = vmatpush1.bf16.msra.mxu0 0
        %1888 = vmatprep.subr.bf16.mxu0 0
        %1889 = vmatpush1.bf16.msra.mxu0 0
        %1890 = vmatprep.subr.bf16.mxu0 0
        %1891 = vmatpush1.bf16.msra.mxu0 0
        %1892 = vmatprep.mubr.bf16.mxu0 0
        %1893 = vmatmul.mubr.bf16.gmra.mrb[0].mxu0 %v1858
        %v1894 = vpop.f32.mrb[0].mxu0
        %v1895 = vadd.f32 %v1828, %v1894
        %v1896 = vpop.f32.mrb[0].mxu0
        %v1897 = vpop.f32.mrb[0].mxu0
        %v1898 = vpop.f32.mrb[0].mxu0
        %1899 = vdwg.mxu0
        %v1900 = vld [vmem:[#allocation2 + $0xa] sm:$0xf]
        %v1901 = vpack.c.bf16 %v1900, %v1900
        %v1910 = vunpack.c.l.b16 %v1755
        %v1911 = vunpack.c.l.b16 %v1756
        %v1912 = vunpack.c.l.b16 %v1757
        %v1913 = vunpack.c.l.b16 %v1758
        %v1914 = vunpack.c.l.b16 %v1759
        %v1915 = vunpack.c.l.b16 %v1760
        %v1916 = vunpack.c.l.b16 %v1761
        %v1917 = vunpack.c.l.b16 %v1762
        %v1918 = vpack.c.b16 %v1911, %v1910
        %v1919 = vpack.c.b16 %v1913, %v1912
        %v1920 = vpack.c.b16 %v1915, %v1914
        %v1921 = vpack.c.b16 %v1917, %v1916
        %v1927 = vsel %vm293, %v1901, 0
        %1929 = vmatprep.subr.bf16.mxu0 0
        %1930 = vmatpush1.bf16.msra.mxu0 %v1918
        %1931 = vmatprep.subr.bf16.mxu0 0
        %1932 = vmatpush1.bf16.msra.mxu0 %v1919
        %1933 = vmatprep.subr.bf16.mxu0 0
        %1934 = vmatpush1.bf16.msra.mxu0 %v1920
        %1935 = vmatprep.subr.bf16.mxu0 0
        %1936 = vmatpush1.bf16.msra.mxu0 %v1921
        %1937 = vmatprep.subr.bf16.mxu0 0
        %1938 = vmatpush1.bf16.msra.mxu0 0
        %1939 = vmatprep.subr.bf16.mxu0 0
        %1940 = vmatpush1.bf16.msra.mxu0 0
        %1941 = vmatprep.subr.bf16.mxu0 0
        %1942 = vmatpush1.bf16.msra.mxu0 0
        %1943 = vmatprep.subr.bf16.mxu0 0
        %1944 = vmatpush1.bf16.msra.mxu0 0
        %1945 = vmatprep.subr.bf16.mxu0 0
        %1946 = vmatpush1.bf16.msra.mxu0 0
        %1947 = vmatprep.subr.bf16.mxu0 0
        %1948 = vmatpush1.bf16.msra.mxu0 0
        %1949 = vmatprep.subr.bf16.mxu0 0
        %1950 = vmatpush1.bf16.msra.mxu0 0
        %1951 = vmatprep.subr.bf16.mxu0 0
        %1952 = vmatpush1.bf16.msra.mxu0 0
        %1953 = vmatprep.subr.bf16.mxu0 0
        %1954 = vmatpush1.bf16.msra.mxu0 0
        %1955 = vmatprep.subr.bf16.mxu0 0
        %1956 = vmatpush1.bf16.msra.mxu0 0
        %1957 = vmatprep.subr.bf16.mxu0 0
        %1958 = vmatpush1.bf16.msra.mxu0 0
        %1959 = vmatprep.subr.bf16.mxu0 0
        %1960 = vmatpush1.bf16.msra.mxu0 0
        %1961 = vmatprep.mubr.bf16.mxu0 0
        %1962 = vmatmul.mubr.bf16.gmra.mrb[0].mxu0 %v1927
        %v1963 = vpop.f32.mrb[0].mxu0
        %v1964 = vadd.f32 0.0, %v1963
        %v1965 = vpop.f32.mrb[0].mxu0
        %v1966 = vpop.f32.mrb[0].mxu0
        %v1967 = vpop.f32.mrb[0].mxu0
        %1968 = vdwg.mxu0
        %v1969 = vadd.f32 %v1895, %v1964
        %v1970 = vld [vmem:[%s5 + $0xd] sm:$0x1]
        %v1971 = vlaneseq
        %v1972 = vshrl.u32 %v1971, 7
        %v1973 = vsub.s32 0, %v1972
        %v1974 = vrot.slane %v1970, %v1973
        %v1975 = vadd.f32 %v1969, %v1974
        %v1976 = vmax.f32 %v1975, 0.0
        %v1977 = vld [vmem:[%s2] sm:$0x1]
        %v1978 = vpack.c.bf16 %v1977, %v1977
        %v1979 = vpack.c.bf16 %v1976, %v1976
        %vm1980 = vcmask 31744
        %v1982 = vsel %vm1980, %v1978, 0
        %vm1984 = vcmask 1041408
        %v1986 = vsel %vm1984, %v1979, 0
        %1988 = vmatprep.subr.bf16.mxu0 0
        %1989 = vmatpush1.bf16.msra.mxu0 %v1986
        %1990 = vmatprep.subr.bf16.mxu0 0
        %1991 = vmatpush1.bf16.msra.mxu0 0
        %1992 = vmatprep.subr.bf16.mxu0 0
        %1993 = vmatpush1.bf16.msra.mxu0 0
        %1994 = vmatprep.subr.bf16.mxu0 0
        %1995 = vmatpush1.bf16.msra.mxu0 0
        %1996 = vmatprep.subr.bf16.mxu0 0
        %1997 = vmatpush1.bf16.msra.mxu0 0
        %1998 = vmatprep.subr.bf16.mxu0 0
        %1999 = vmatpush1.bf16.msra.mxu0 0
        %2000 = vmatprep.subr.bf16.mxu0 0
        %2001 = vmatpush1.bf16.msra.mxu0 0
        %2002 = vmatprep.subr.bf16.mxu0 0
        %2003 = vmatpush1.bf16.msra.mxu0 0
        %2004 = vmatprep.subr.bf16.mxu0 0
        %2005 = vmatpush1.bf16.msra.mxu0 0
        %2006 = vmatprep.subr.bf16.mxu0 0
        %2007 = vmatpush1.bf16.msra.mxu0 0
        %2008 = vmatprep.subr.bf16.mxu0 0
        %2009 = vmatpush1.bf16.msra.mxu0 0
        %2010 = vmatprep.subr.bf16.mxu0 0
        %2011 = vmatpush1.bf16.msra.mxu0 0
        %2012 = vmatprep.subr.bf16.mxu0 0
        %2013 = vmatpush1.bf16.msra.mxu0 0
        %2014 = vmatprep.subr.bf16.mxu0 0
        %2015 = vmatpush1.bf16.msra.mxu0 0
        %2016 = vmatprep.subr.bf16.mxu0 0
        %2017 = vmatpush1.bf16.msra.mxu0 0
        %2018 = vmatprep.subr.bf16.mxu0 0
        %2019 = vmatpush1.bf16.msra.mxu0 0
        %2020 = vmatprep.mubr.bf16.mxu0 0
        %2021 = vmatmul.mubr.bf16.gmra.mrb[0].mxu0 %v1982
        %v2022 = vpop.f32.mrb[0].mxu0
        %v2023 = vadd.f32 0.0, %v2022
        %v2024 = vpop.f32.mrb[0].mxu0
        %v2025 = vpop.f32.mrb[0].mxu0
        %v2026 = vpop.f32.mrb[0].mxu0
        %2027 = vdwg.mxu0
        %v2028 = vmul.f32 %v2023, 0.5
        %v2029 = vld [vmem:[%s3 + $0x118] sm:$0xf]
        %v2030 = vld [vmem:[%s3 + $0x11c] sm:$0xf]
        %v2031 = vld [vmem:[%s3 + $0x120] sm:$0xf]
        %v2032 = vld [vmem:[%s3 + $0x124] sm:$0xf]
        %v2033 = vld [vmem:[%s3 + $0x128] sm:$0xf]
        %v2034 = vld [vmem:[%s3 + $0x12c] sm:$0xf]
        %v2035 = vld [vmem:[%s3 + $0x130] sm:$0xf]
        %v2036 = vld [vmem:[%s3 + $0x134] sm:$0xf]
        %v2037 = vpack.c.bf16 %v2028, %v2028
        %v2038 = vld [vmem:[%s5 + $0xe] sm:$0x1]
        %v2047 = vunpack.c.l.b16 %v2029
        %v2048 = vunpack.c.l.b16 %v2030
        %v2049 = vunpack.c.l.b16 %v2031
        %v2050 = vunpack.c.l.b16 %v2032
        %v2051 = vunpack.c.l.b16 %v2033
        %v2052 = vunpack.c.l.b16 %v2034
        %v2053 = vunpack.c.l.b16 %v2035
        %v2054 = vunpack.c.l.b16 %v2036
        %v2055 = vpack.c.b16 %v2048, %v2047
        %v2056 = vpack.c.b16 %v2050, %v2049
        %v2057 = vpack.c.b16 %v2052, %v2051
        %v2058 = vpack.c.b16 %v2054, %v2053
        %v2064 = vsel %vm293, %v2037, 0
        %2066 = vmatprep.subr.bf16.mxu0 0
        %2067 = vmatpush1.bf16.msra.mxu0 %v2055
        %2068 = vmatprep.subr.bf16.mxu0 0
        %2069 = vmatpush1.bf16.msra.mxu0 %v2056
        %2070 = vmatprep.subr.bf16.mxu0 0
        %2071 = vmatpush1.bf16.msra.mxu0 %v2057
        %2072 = vmatprep.subr.bf16.mxu0 0
        %2073 = vmatpush1.bf16.msra.mxu0 %v2058
        %2074 = vmatprep.subr.bf16.mxu0 0
        %2075 = vmatpush1.bf16.msra.mxu0 0
        %2076 = vmatprep.subr.bf16.mxu0 0
        %2077 = vmatpush1.bf16.msra.mxu0 0
        %2078 = vmatprep.subr.bf16.mxu0 0
        %2079 = vmatpush1.bf16.msra.mxu0 0
        %2080 = vmatprep.subr.bf16.mxu0 0
        %2081 = vmatpush1.bf16.msra.mxu0 0
        %2082 = vmatprep.subr.bf16.mxu0 0
        %2083 = vmatpush1.bf16.msra.mxu0 0
        %2084 = vmatprep.subr.bf16.mxu0 0
        %2085 = vmatpush1.bf16.msra.mxu0 0
        %2086 = vmatprep.subr.bf16.mxu0 0
        %2087 = vmatpush1.bf16.msra.mxu0 0
        %2088 = vmatprep.subr.bf16.mxu0 0
        %2089 = vmatpush1.bf16.msra.mxu0 0
        %2090 = vmatprep.subr.bf16.mxu0 0
        %2091 = vmatpush1.bf16.msra.mxu0 0
        %2092 = vmatprep.subr.bf16.mxu0 0
        %2093 = vmatpush1.bf16.msra.mxu0 0
        %2094 = vmatprep.subr.bf16.mxu0 0
        %2095 = vmatpush1.bf16.msra.mxu0 0
        %2096 = vmatprep.subr.bf16.mxu0 0
        %2097 = vmatpush1.bf16.msra.mxu0 0
        %2098 = vmatprep.mubr.bf16.mxu0 0
        %2099 = vmatmul.mubr.bf16.gmra.mrb[0].mxu0 %v2064
        %v2100 = vpop.f32.mrb[0].mxu0
        %v2101 = vadd.f32 %v2038, %v2100
        %v2102 = vpop.f32.mrb[0].mxu0
        %v2103 = vpop.f32.mrb[0].mxu0
        %v2104 = vpop.f32.mrb[0].mxu0
        %2105 = vdwg.mxu0
        %v2106 = vmax.f32 %v2101, 0.0
        %v2107 = vld [vmem:[%s3 + $0x138] sm:$0xf]
        %v2108 = vld [vmem:[%s3 + $0x13c] sm:$0xf]
        %v2109 = vld [vmem:[%s3 + $0x140] sm:$0xf]
        %v2110 = vld [vmem:[%s3 + $0x144] sm:$0xf]
        %v2111 = vld [vmem:[%s3 + $0x148] sm:$0xf]
        %v2112 = vld [vmem:[%s3 + $0x14c] sm:$0xf]
        %v2113 = vld [vmem:[%s3 + $0x150] sm:$0xf]
        %v2114 = vld [vmem:[%s3 + $0x154] sm:$0xf]
        %v2115 = vld [vmem:[%s3 + $0x158] sm:$0xf]
        %v2116 = vld [vmem:[%s3 + $0x15c] sm:$0xf]
        %v2117 = vld [vmem:[%s3 + $0x160] sm:$0xf]
        %v2118 = vld [vmem:[%s3 + $0x164] sm:$0xf]
        %v2119 = vld [vmem:[%s3 + $0x168] sm:$0x3]
        %v2120 = vpack.c.bf16 %v2106, %v2106
        %v2121 = vld [vmem:[%s5 + $0xf] sm:$0x1]
        %v2135 = vunpack.c.l.b16 %v2107
        %v2136 = vunpack.c.l.b16 %v2108
        %v2137 = vunpack.c.l.b16 %v2109
        %v2138 = vunpack.c.l.b16 %v2110
        %v2139 = vunpack.c.l.b16 %v2111
        %v2140 = vunpack.c.l.b16 %v2112
        %v2141 = vunpack.c.l.b16 %v2113
        %v2142 = vunpack.c.l.b16 %v2114
        %v2143 = vunpack.c.l.b16 %v2115
        %v2144 = vunpack.c.l.b16 %v2116
        %v2145 = vunpack.c.l.b16 %v2117
        %v2146 = vunpack.c.l.b16 %v2118
        %v2147 = vunpack.c.l.b16 %v2119
        %v2148 = vpack.c.b16 %v2136, %v2135
        %v2149 = vpack.c.b16 %v2138, %v2137
        %v2150 = vpack.c.b16 %v2140, %v2139
        %v2151 = vpack.c.b16 %v2142, %v2141
        %v2152 = vpack.c.b16 %v2144, %v2143
        %v2153 = vpack.c.b16 %v2146, %v2145
        %v2154 = vpack.c.b16 %v2147, %v2147
        %vm2161 = vcmask 818176
        %v2163 = vsel %vm2161, %v2120, 0
        %v2166 = vsel %vm1984, %v2154, 0
        %2168 = vmatprep.subr.bf16.mxu0 0
        %2169 = vmatpush1.bf16.msra.mxu0 %v2148
        %2170 = vmatprep.subr.bf16.mxu0 0
        %2171 = vmatpush1.bf16.msra.mxu0 %v2149
        %2172 = vmatprep.subr.bf16.mxu0 0
        %2173 = vmatpush1.bf16.msra.mxu0 %v2150
        %2174 = vmatprep.subr.bf16.mxu0 0
        %2175 = vmatpush1.bf16.msra.mxu0 %v2151
        %2176 = vmatprep.subr.bf16.mxu0 0
        %2177 = vmatpush1.bf16.msra.mxu0 %v2152
        %2178 = vmatprep.subr.bf16.mxu0 0
        %2179 = vmatpush1.bf16.msra.mxu0 %v2153
        %2180 = vmatprep.subr.bf16.mxu0 0
        %2181 = vmatpush1.bf16.msra.mxu0 %v2166
        %2182 = vmatprep.subr.bf16.mxu0 0
        %2183 = vmatpush1.bf16.msra.mxu0 0
        %2184 = vmatprep.subr.bf16.mxu0 0
        %2185 = vmatpush1.bf16.msra.mxu0 0
        %2186 = vmatprep.subr.bf16.mxu0 0
        %2187 = vmatpush1.bf16.msra.mxu0 0
        %2188 = vmatprep.subr.bf16.mxu0 0
        %2189 = vmatpush1.bf16.msra.mxu0 0
        %2190 = vmatprep.subr.bf16.mxu0 0
        %2191 = vmatpush1.bf16.msra.mxu0 0
        %2192 = vmatprep.subr.bf16.mxu0 0
        %2193 = vmatpush1.bf16.msra.mxu0 0
        %2194 = vmatprep.subr.bf16.mxu0 0
        %2195 = vmatpush1.bf16.msra.mxu0 0
        %2196 = vmatprep.subr.bf16.mxu0 0
        %2197 = vmatpush1.bf16.msra.mxu0 0
        %2198 = vmatprep.subr.bf16.mxu0 0
        %2199 = vmatpush1.bf16.msra.mxu0 0
        %2200 = vmatprep.mubr.bf16.mxu0 0
        %2201 = vmatmul.mubr.bf16.gmra.mrb[0].mxu0 %v2163
        %v2202 = vpop.f32.mrb[0].mxu0
        %v2203 = vadd.f32 %v2121, %v2202
        %v2204 = vpop.f32.mrb[0].mxu0
        %v2205 = vpop.f32.mrb[0].mxu0
        %v2206 = vpop.f32.mrb[0].mxu0
        %2207 = vdwg.mxu0
        %2208 = vst [vmem:[%s243] sm:$0x1] %v2203
        %s2209 = sand.u32 %s159, 1
        %s2210 = scalar_lea.sflag [#allocation4], %s2209
        %s2211 = sand.u32 %s159, 1
        %s2212 = scalar_lea.vmem [#allocation3], %s2211
        // Predicated region
        $region45: #{_lambda_.1} parent=43 // pred_check
          %p2213 = pneg %p169
        $region46: #{_lambda_.1} parent=43 // pred_check_branch
          %2215 = sbr.rel (%p2213) target = $region48
        $region47: #{_lambda_.1} parent=43 // pred_region
          %s2217 = ssub.s32 16, 16
          %2218 = vsyncadd %s2210, %s2217
          %s2219 = smul.addr %s20, 16
          %s2220 = scalar_lea.hbm %s6, %s2219
          %s2222 = sshll.u32 %s2212, 4
          %s2223 = int_to_ptr.vmem [resolvable:$true] %s2222
          %2225 = dma.vmem_to_hbm [thread:$0]  %s2223, 16, %s2220, %s2210
        $region48: #{_lambda_.1} parent=43 // pred_fallthru
          _
      $region44: #{_lambda_.1} parent=5 // pred_fallthru
        _
      %p2226 = scmp.le.s32.totalorder 2, %s15
      // Predicated region
      $region49: #{_lambda_.1} parent=5 // pred_check
        %p2227 = pneg %p2226
      $region50: #{_lambda_.1} parent=5 // pred_check_branch
        %2229 = sbr.rel (%p2227) target = $region52
      $region51: #{_lambda_.1} parent=5 // pred_region
        %s2230 = ssub.s32 %s15, 2
        // Predicated region
        $region53: #{_lambda_.1} parent=51 // pred_check
          %p2231 = pneg %p175
        $region54: #{_lambda_.1} parent=51 // pred_check_branch
          %2233 = sbr.rel (%p2231) target = $region56
        $region55: #{_lambda_.1} parent=51 // pred_region
          %s2234 = sand.u32 %s160, 1
          %s2235 = scalar_lea.sflag [#allocation4], %s2234
          %s2236 = sand.u32 %s160, 1
          %s2237 = scalar_lea.vmem [#allocation3], %s2236
          %2238 = dma.done %s2235, 16
        $region56: #{_lambda_.1} parent=51 // pred_fallthru
          _
      $region52: #{_lambda_.1} parent=5 // pred_fallthru
        _
    $region6: #{_lambda_.1} parent=1 // loop_footer
      %s19 = sadd.s32 1, %s15
    $region7: #{_lambda_.1} parent=1 // loop_footer_branch
      %14 = sbr.rel target = $region3
    $region8: #{_lambda_.1} parent=1 // loop_exit
      _
    %2239 = vsyncpa [#allocation4], 1
    %s2240 = scalar_lea.sflag [#allocation4], 1
    %2241 = vsyncpa %s2240, 1

</llo_original>
